<compile_context>
chip_gen: v5e
topology: v5e:2x2
jax: 0.10.0
libtpu: 0.0.40
codegen_flags: <defaults>
</compile_context>

<pallas_src>
import math
import numpy as np
import jax
import jax.numpy as jnp
from jax.experimental import pallas as pl
from jax.experimental.pallas import tpu as pltpu

# ---- hyper-parameters (undefined globals in the torch file; chosen small) ----
D_MODEL = 32
H = 4
D_K = D_Q = D_V = D_MODEL // H          # 8
D_FF = 4 * D_MODEL                      # 128
P_DROPOUT = 0.1                         # nn.Dropout == identity in eval mode
LN_EPS = 1e-5
N_LAYERS = 2                            # `N` in the torch file
N_WORDS = 64                            # `N_WORDS_DECODER`; padding_idx == N_WORDS
VOCAB_PAD = 72                          # embedding table rows padded to a multiple of 8
OUT_PAD = 128                           # lane-dense output head width (>= N_WORDS)

B = 2
S = 8
BS = B * S                              # 16  token rows, (b, s) order
BHS = B * H * S                         # 64  head-major rows, (b, h, s) order
INV_SQRT_DK = 1.0 / math.sqrt(D_K)
NEG_BIG = -1e30

STATIC_ORDER = ["rrep", "hm96", "g96", "hm32", "g32", "hm64", "g64",
                "abias", "gt", "m2", "r2"]
BLOCK_ORDER = ["s_wqkv", "s_bqkv", "s_wo", "s_bo",
               "c_wq", "c_bq", "c_wkv", "c_bkv", "c_wo", "c_bo",
               "ln_g", "ln_b", "w1", "b1", "w2", "b2"]


# --------------------------- static 0/1 rearrangement matrices ---------------------------
def _static_mats():
    r = np.arange(BHS)
    b_r = r // (H * S)
    h_r = (r // S) % H
    s_r = r % S

    # replicate token rows (b, s) into head-major row order (b, h, s)
    rrep = np.zeros((BHS, BS), np.float32)
    rrep[r, b_r * S + s_r] = 1.0

    def head_mask(c_width):                       # keep lanes of head h(r) in each 32-block
        c = np.arange(c_width)
        return (((c[None, :] // D_K) % H) == h_r[:, None]).astype(np.float32)

    def gather(c_width):                          # gather the kept lanes into D_K-wide blocks
        nblk = c_width // D_MODEL
        g = np.zeros((c_width, nblk * D_K), np.float32)
        c = np.arange(c_width)
        g[c, (c // D_MODEL) * D_K + c % D_K] = 1.0
        return g

    blk = r // S                                  # (b, h) block id
    abias = np.where(blk[:, None] == blk[None, :], 0.0, NEG_BIG).astype(np.float32)

    # bug-faithful torch `.view(B, S, H*D_V)` of contiguous (B,H,S,D_V):
    #   nv[t, j*D_V + d] = stacked[t*H + j, d]   (expressed as 0/1 matmuls, no relayout)
    c = np.arange(H * D_V)
    gt = np.zeros((D_V, H * D_V), np.float32)
    gt[c % D_V, c] = 1.0
    m2 = ((c[None, :] // D_V) == (r % H)[:, None]).astype(np.float32)
    r2 = np.zeros((BS, BHS), np.float32)
    r2[r // H, r] = 1.0

    mats = dict(rrep=rrep,
                hm96=head_mask(3 * D_MODEL), g96=gather(3 * D_MODEL),
                hm32=head_mask(D_MODEL), g32=gather(D_MODEL),
                hm64=head_mask(2 * D_MODEL), g64=gather(2 * D_MODEL),
                abias=abias, gt=gt, m2=m2, r2=r2)
    return {k: jnp.asarray(v) for k, v in mats.items()}


# ------------------------------------ fused kernel ---------------------------------------
def _decoder_fused_kernel(ids_ref, y_ref, table_ref, pe_ref,
                          rrep_ref, hm96_ref, g96_ref, hm32_ref, g32_ref,
                          hm64_ref, g64_ref, abias_ref, gt_ref, m2_ref, r2_ref,
                          s_wqkv, s_bqkv, s_wo, s_bo,
                          c_wq, c_bq, c_wkv, c_bkv, c_wo, c_bo,
                          ln_g, ln_b, w1, b1, w2, b2,
                          w_out, b_out,
                          o_ref):
    # --- embedding lookup as a one-hot matmul (MXU) + positional encoding add ---
    ids = ids_ref[...]                                               # (BS, 1) int32
    cols = jax.lax.broadcasted_iota(jnp.int32, (BS, VOCAB_PAD), 1)
    onehot = (cols == ids).astype(jnp.float32)                       # (BS, VOCAB_PAD)
    x = jnp.dot(onehot, table_ref[...], preferred_element_type=jnp.float32) + pe_ref[...]

    y = y_ref[...]                                                   # (BS, D_MODEL)
    rrep, abias = rrep_ref[...], abias_ref[...]
    gt, m2, r2 = gt_ref[...], m2_ref[...], r2_ref[...]
    hm96, g96 = hm96_ref[...], g96_ref[...]
    hm32, g32 = hm32_ref[...], g32_ref[...]
    hm64, g64 = hm64_ref[...], g64_ref[...]

    def heads_major(std, hmask, gmat):
        # std: (BS, C) lane-major projections -> (BHS, C // D_MODEL * D_K) head-major rows.
        rep = jnp.dot(rrep, std, preferred_element_type=jnp.float32)
        return jnp.dot(rep * hmask, gmat, preferred_element_type=jnp.float32)

    def attention(q_hm, k_hm, v_hm, wo, bo):
        # single score matmul for all (batch, head) blocks; abias masks cross-block entries.
        # dot_general contracts the last dims so no k transpose is materialized.
        s = jax.lax.dot_general(q_hm, k_hm, (((1,), (1,)), ((), ())),
                                preferred_element_type=jnp.float32)
        s = s * INV_SQRT_DK + abias
        s = s - jnp.max(s, axis=-1, keepdims=True)
        p = jnp.exp(s)
        p = p * pl.reciprocal(jnp.sum(p, axis=-1, keepdims=True), approx=False)
        stacked = jnp.dot(p, v_hm, preferred_element_type=jnp.float32)      # (BHS, D_V)
        # bug-faithful torch .view(B, S, H*D_V) + output projection (0/1 matmuls only)
        t = jnp.dot(stacked, gt, preferred_element_type=jnp.float32) * m2
        proj = jnp.dot(t, wo, preferred_element_type=jnp.float32)
        return jnp.dot(r2, proj, preferred_element_type=jnp.float32) + bo

    def layer_norm(v, gamma, beta):
        mu = jnp.mean(v, axis=-1, keepdims=True)
        var = jnp.mean(jnp.square(v - mu), axis=-1, keepdims=True)
        return (v - mu) * jax.lax.rsqrt(var + LN_EPS) * gamma + beta

    # --- N_LAYERS decoder blocks, unrolled; per-layer weights indexed on the stacked axis ---
    for l in range(N_LAYERS):
        gamma, beta = ln_g[l], ln_b[l]

        # masked self-attention sub-block (torch never applies the causal mask)
        qkv = jnp.dot(x, s_wqkv[l], preferred_element_type=jnp.float32) + s_bqkv[l]
        hm = heads_major(qkv, hm96, g96)                             # (BHS, 3*D_K) [q|k|v]
        a1 = attention(hm[:, :D_K], hm[:, D_K:2 * D_K], hm[:, 2 * D_K:],
                       s_wo[l], s_bo[l])
        x1 = layer_norm(x + a1, gamma, beta)                         # dropout1 == id (eval)

        # cross-attention: keys/values from encoder output, queries from x1
        q_std = jnp.dot(x1, c_wq[l], preferred_element_type=jnp.float32) + c_bq[l]
        kv_std = jnp.dot(y, c_wkv[l], preferred_element_type=jnp.float32) + c_bkv[l]
        q_hm = heads_major(q_std, hm32, g32)                         # (BHS, D_K)
        kv_hm = heads_major(kv_std, hm64, g64)                       # (BHS, 2*D_K) [k|v]
        a2 = attention(q_hm, kv_hm[:, :D_K], kv_hm[:, D_K:], c_wo[l], c_bo[l])
        x2 = layer_norm(x1 + a2, gamma, beta)                        # dropout2 == id

        # feed-forward
        z = jnp.maximum(jnp.dot(x2, w1[l], preferred_element_type=jnp.float32) + b1[l], 0.0)
        z = jnp.dot(z, w2[l], preferred_element_type=jnp.float32) + b2[l]
        x = layer_norm(x2 + z, gamma, beta)                          # dropout3 == id

    # --- output head (lane-dense: 128 lanes, padding columns biased to -1e30) ---
    logits = jnp.dot(x, w_out[...], preferred_element_type=jnp.float32) + b_out[...]
    logits = logits - jnp.max(logits, axis=-1, keepdims=True)
    p = jnp.exp(logits)
    o_ref[...] = p * pl.reciprocal(jnp.sum(p, axis=-1, keepdims=True), approx=False)


# ------------------------------- host-side (one-time) prep -------------------------------
def _prepare_block(p):
    return {
        "s_wqkv": jnp.concatenate([p["mm_wq"], p["mm_wk"], p["mm_wv"]], axis=1),
        "s_bqkv": jnp.concatenate([p["mm_bq"], p["mm_bk"], p["mm_bv"]], axis=1),
        "s_wo": p["mm_wo"], "s_bo": p["mm_bo"],
        "c_wq": p["mh_wq"], "c_bq": p["mh_bq"],
        "c_wkv": jnp.concatenate([p["mh_wk"], p["mh_wv"]], axis=1),
        "c_bkv": jnp.concatenate([p["mh_bk"], p["mh_bv"]], axis=1),
        "c_wo": p["mh_wo"], "c_bo": p["mh_bo"],
        "ln_g": p["ln_g"], "ln_b": p["ln_b"],
        "w1": p["w1"], "b1": p["b1"], "w2": p["w2"], "b2": p["b2"],
    }


def prepare_params(raw, pe, statics):
    """One-time host-side packing (hoisted out of the per-forward hot path)."""
    preps = [_prepare_block(b) for b in raw["blocks"]]
    stacked = {k: jnp.stack([p[k] for p in preps], axis=0) for k in BLOCK_ORDER}

    table = jnp.zeros((VOCAB_PAD, D_MODEL), jnp.float32).at[:N_WORDS + 1].set(raw["emb"])
    pe_slab = jnp.tile(pe, (B, 1))                                   # (BS, D_MODEL)
    # lane-dense padded output head; padding columns get -1e30 bias so exp() -> 0
    w_out_pad = jnp.zeros((D_MODEL, OUT_PAD), jnp.float32).at[:, :N_WORDS].set(raw["w_out"])
    b_out_pad = jnp.full((1, OUT_PAD), NEG_BIG, jnp.float32).at[:, :N_WORDS].set(raw["b_out"])

    return tuple([table, pe_slab]
                 + [statics[k] for k in STATIC_ORDER]
                 + [stacked[k] for k in BLOCK_ORDER]
                 + [w_out_pad, b_out_pad])


# ------------------------------------ forward (jitted) -----------------------------------
def _forward_impl(inp, encoder_output, packed):
    ids = inp.reshape(BS, 1).astype(jnp.int32)
    y_slab = encoder_output.reshape(BS, D_MODEL).astype(jnp.float32)
    inputs = (ids, y_slab) + tuple(packed)

    vmem_spec = pl.BlockSpec(memory_space=pltpu.MemorySpace.VMEM)
    probs_pad = pl.pallas_call(
        _decoder_fused_kernel,
        out_shape=jax.ShapeDtypeStruct((BS, OUT_PAD), jnp.float32),
        in_specs=[vmem_spec] * len(inputs),
        out_specs=vmem_spec,
    )(*inputs)
    return probs_pad[:, :N_WORDS].reshape(B, S, N_WORDS)


decoder_forward = jax.jit(_forward_impl)


# ------------------------------- pure-JAX reference (check) ------------------------------
def _ref_mha(xv, xk, xq, wv, bv, wk, bk, wq, bq, wo, bo):
    v = xv @ wv + bv
    k = xk @ wk + bk
    q = xq @ wq + bq
    bsz, s_q = q.shape[0], q.shape[1]
    s_kv = xv.shape[1]
    vh = v.reshape(bsz, s_kv, H, D_V).transpose(0, 2, 1, 3)
    kh = k.reshape(bsz, s_kv, H, D_K).transpose(0, 2, 1, 3)
    qh = q.reshape(bsz, s_q, H, D_Q).transpose(0, 2, 1, 3)
    att = jnp.einsum("bhqd,bhkd->bhqk", qh, kh) / math.sqrt(D_K)
    att = jax.nn.softmax(att, axis=-1)
    nv = jnp.einsum("bhqk,bhkd->bhqd", att, vh)          # (B, H, S_q, D_V)
    nv = nv.reshape(bsz, s_q, H * D_V)                   # torch's bug-faithful .view
    return nv @ wo + bo


def _ref_ln(x, g, b):
    mu = x.mean(-1, keepdims=True)
    var = ((x - mu) ** 2).mean(-1, keepdims=True)
    return (x - mu) / jnp.sqrt(var + LN_EPS) * g + b


def _ref_block(x, y, p):
    a1 = _ref_mha(x, x, x, p["mm_wv"], p["mm_bv"], p["mm_wk"], p["mm_bk"],
                  p["mm_wq"], p["mm_bq"], p["mm_wo"], p["mm_bo"])
    x1 = _ref_ln(x + a1, p["ln_g"], p["ln_b"])
    a2 = _ref_mha(y, y, x1, p["mh_wv"], p["mh_bv"], p["mh_wk"], p["mh_bk"],
                  p["mh_wq"], p["mh_bq"], p["mh_wo"], p["mh_bo"])
    x2 = _ref_ln(x1 + a2, p["ln_g"], p["ln_b"])
    z = jnp.maximum(x2 @ p["w1"] + p["b1"], 0.0) @ p["w2"] + p["b2"]
    return _ref_ln(x2 + z, p["ln_g"], p["ln_b"])


def ref_decoder(inp, encoder_output, raw, pe):
    out = raw["emb"][inp] + pe[None, :, :]
    for blk in raw["blocks"]:
        out = _ref_block(out, encoder_output, blk)
    logits = out @ raw["w_out"] + raw["b_out"]
    return jax.nn.softmax(logits, axis=-1)


# -------------------------------------- params init --------------------------------------
def _positional_encoding(seq_len):
    pe = np.zeros((seq_len, D_MODEL), np.float32)
    position = np.arange(seq_len, dtype=np.float32)[:, None]
    div_term = np.exp(np.arange(0, D_MODEL, 2, dtype=np.float32)
                      * (-math.log(10000.0) / D_MODEL))
    pe[:, 0::2] = np.sin(position * div_term)
    pe[:, 1::2] = np.cos(position * div_term)
    return jnp.asarray(pe)


def init_raw_params(key):
    def linear(k, din, dout, scale=0.05):
        k1, k2 = jax.random.split(k)
        return (scale * jax.random.normal(k1, (din, dout), jnp.float32),
                scale * jax.random.normal(k2, (1, dout), jnp.float32))

    keys = jax.random.split(key, N_LAYERS + 2)
    blocks = []
    for i in range(N_LAYERS):
        bk = jax.random.split(keys[i], 10)
        p = {}
        p["mm_wq"], p["mm_bq"] = linear(bk[0], D_MODEL, D_Q * H)
        p["mm_wk"], p["mm_bk"] = linear(bk[1], D_MODEL, D_K * H)
        p["mm_wv"], p["mm_bv"] = linear(bk[2], D_MODEL, D_V * H)
        p["mm_wo"], p["mm_bo"] = linear(bk[3], D_V * H, D_MODEL)
        p["mh_wq"], p["mh_bq"] = linear(bk[4], D_MODEL, D_Q * H)
        p["mh_wk"], p["mh_bk"] = linear(bk[5], D_MODEL, D_K * H)
        p["mh_wv"], p["mh_bv"] = linear(bk[6], D_MODEL, D_V * H)
        p["mh_wo"], p["mh_bo"] = linear(bk[7], D_V * H, D_MODEL)
        p["ln_g"] = jnp.ones((1, D_MODEL), jnp.float32)
        p["ln_b"] = jnp.zeros((1, D_MODEL), jnp.float32)
        p["w1"], p["b1"] = linear(bk[8], D_MODEL, D_FF)
        p["w2"], p["b2"] = linear(bk[9], D_FF, D_MODEL)
        blocks.append(p)

    k_emb, k_out = jax.random.split(keys[N_LAYERS], 2)
    emb = 0.1 * jax.random.normal(k_emb, (N_WORDS + 1, D_MODEL), jnp.float32)
    emb = emb.at[N_WORDS].set(0.0)                       # padding_idx row is zero
    w_out, b_out = linear(k_out, D_MODEL, N_WORDS)
    return {"blocks": blocks, "emb": emb, "w_out": w_out, "b_out": b_out}


if __name__ == "__main__":
    key = jax.random.PRNGKey(0)
    k_inp, k_enc, k_par = jax.random.split(key, 3)
    inp = jax.random.randint(k_inp, (B, S), 0, N_WORDS + 1, dtype=jnp.int32)
    encoder_output = jax.random.normal(k_enc, (B, S, D_MODEL), jnp.float32)
    raw = init_raw_params(k_par)
    pe = _positional_encoding(S)
    statics = _static_mats()

    packed = prepare_params(raw, pe, statics)            # one-time, outside the hot path

    out = jax.block_until_ready(decoder_forward(inp, encoder_output, packed))
    ref = jax.block_until_ready(ref_decoder(inp, encoder_output, raw, pe))

    assert out.shape == (B, S, N_WORDS)
    err = float(jnp.max(jnp.abs(out - ref)))
    assert jnp.allclose(out, ref, atol=5e-4, rtol=5e-4), f"max abs err {err}"
    print("KERNEL_OK")
</pallas_src>

<mosaic_0001>
module attributes {stable_mosaic.version = 11 : i64} {
  func.func @_decoder_fused_kernel(%arg0: memref<16x1xi32, #tpu.memory_space<vmem>>, %arg1: memref<16x32xf32, #tpu.memory_space<vmem>>, %arg2: memref<72x32xf32, #tpu.memory_space<vmem>>, %arg3: memref<16x32xf32, #tpu.memory_space<vmem>>, %arg4: memref<64x16xf32, #tpu.memory_space<vmem>>, %arg5: memref<64x96xf32, #tpu.memory_space<vmem>>, %arg6: memref<96x24xf32, #tpu.memory_space<vmem>>, %arg7: memref<64x32xf32, #tpu.memory_space<vmem>>, %arg8: memref<32x8xf32, #tpu.memory_space<vmem>>, %arg9: memref<64x64xf32, #tpu.memory_space<vmem>>, %arg10: memref<64x16xf32, #tpu.memory_space<vmem>>, %arg11: memref<64x64xf32, #tpu.memory_space<vmem>>, %arg12: memref<8x32xf32, #tpu.memory_space<vmem>>, %arg13: memref<64x32xf32, #tpu.memory_space<vmem>>, %arg14: memref<16x64xf32, #tpu.memory_space<vmem>>, %arg15: memref<2x32x96xf32, #tpu.memory_space<vmem>>, %arg16: memref<2x1x96xf32, #tpu.memory_space<vmem>>, %arg17: memref<2x32x32xf32, #tpu.memory_space<vmem>>, %arg18: memref<2x1x32xf32, #tpu.memory_space<vmem>>, %arg19: memref<2x32x32xf32, #tpu.memory_space<vmem>>, %arg20: memref<2x1x32xf32, #tpu.memory_space<vmem>>, %arg21: memref<2x32x64xf32, #tpu.memory_space<vmem>>, %arg22: memref<2x1x64xf32, #tpu.memory_space<vmem>>, %arg23: memref<2x32x32xf32, #tpu.memory_space<vmem>>, %arg24: memref<2x1x32xf32, #tpu.memory_space<vmem>>, %arg25: memref<2x1x32xf32, #tpu.memory_space<vmem>>, %arg26: memref<2x1x32xf32, #tpu.memory_space<vmem>>, %arg27: memref<2x32x128xf32, #tpu.memory_space<vmem>>, %arg28: memref<2x1x128xf32, #tpu.memory_space<vmem>>, %arg29: memref<2x128x32xf32, #tpu.memory_space<vmem>>, %arg30: memref<2x1x32xf32, #tpu.memory_space<vmem>>, %arg31: memref<32x128xf32, #tpu.memory_space<vmem>>, %arg32: memref<1x128xf32, #tpu.memory_space<vmem>>, %arg33: memref<16x128xf32, #tpu.memory_space<vmem>>) attributes {dimension_semantics = [], scalar_prefetch = 0 : i64, scratch_operands = 0 : i64, tpu.core_type = #tpu.core_type<tc>} {
    %c0 = arith.constant 0 : index
    %c0_0 = arith.constant 0 : index
    %0 = vector.load %arg0[%c0, %c0_0] : memref<16x1xi32, #tpu.memory_space<vmem>>, vector<16x1xi32>
    %1 = tpu.iota {dimensions = array<i32: 1>} : vector<16x72xi32>
    %2 = vector.broadcast %0 : vector<16x1xi32> to vector<16x72xi32>
    %3 = arith.cmpi eq, %1, %2 : vector<16x72xi32>
    %4 = arith.extui %3 : vector<16x72xi1> to vector<16x72xi32>
    %5 = arith.sitofp %4 : vector<16x72xi32> to vector<16x72xf32>
    %c0_1 = arith.constant 0 : index
    %c0_2 = arith.constant 0 : index
    %6 = vector.load %arg2[%c0_1, %c0_2] : memref<72x32xf32, #tpu.memory_space<vmem>>, vector<72x32xf32>
    %cst = arith.constant dense<0.000000e+00> : vector<16x32xf32>
    %7 = tpu.matmul %5, %6, %cst {dimension_numbers = #tpu.dot_dimension_numbers<[1], [0], [0], [1], [0, 0, 1, 1], [], []>} : vector<16x72xf32>, vector<72x32xf32>, vector<16x32xf32> -> vector<16x32xf32>
    %c0_3 = arith.constant 0 : index
    %c0_4 = arith.constant 0 : index
    %8 = vector.load %arg3[%c0_3, %c0_4] : memref<16x32xf32, #tpu.memory_space<vmem>>, vector<16x32xf32>
    %9 = arith.addf %7, %8 : vector<16x32xf32>
    %c0_5 = arith.constant 0 : index
    %c0_6 = arith.constant 0 : index
    %10 = vector.load %arg1[%c0_5, %c0_6] : memref<16x32xf32, #tpu.memory_space<vmem>>, vector<16x32xf32>
    %c0_7 = arith.constant 0 : index
    %c0_8 = arith.constant 0 : index
    %11 = vector.load %arg4[%c0_7, %c0_8] : memref<64x16xf32, #tpu.memory_space<vmem>>, vector<64x16xf32>
    %c0_9 = arith.constant 0 : index
    %c0_10 = arith.constant 0 : index
    %12 = vector.load %arg11[%c0_9, %c0_10] : memref<64x64xf32, #tpu.memory_space<vmem>>, vector<64x64xf32>
    %c0_11 = arith.constant 0 : index
    %c0_12 = arith.constant 0 : index
    %13 = vector.load %arg12[%c0_11, %c0_12] : memref<8x32xf32, #tpu.memory_space<vmem>>, vector<8x32xf32>
    %c0_13 = arith.constant 0 : index
    %c0_14 = arith.constant 0 : index
    %14 = vector.load %arg13[%c0_13, %c0_14] : memref<64x32xf32, #tpu.memory_space<vmem>>, vector<64x32xf32>
    %c0_15 = arith.constant 0 : index
    %c0_16 = arith.constant 0 : index
    %15 = vector.load %arg14[%c0_15, %c0_16] : memref<16x64xf32, #tpu.memory_space<vmem>>, vector<16x64xf32>
    %c0_17 = arith.constant 0 : index
    %c0_18 = arith.constant 0 : index
    %16 = vector.load %arg5[%c0_17, %c0_18] : memref<64x96xf32, #tpu.memory_space<vmem>>, vector<64x96xf32>
    %c0_19 = arith.constant 0 : index
    %c0_20 = arith.constant 0 : index
    %17 = vector.load %arg6[%c0_19, %c0_20] : memref<96x24xf32, #tpu.memory_space<vmem>>, vector<96x24xf32>
    %c0_21 = arith.constant 0 : index
    %c0_22 = arith.constant 0 : index
    %18 = vector.load %arg7[%c0_21, %c0_22] : memref<64x32xf32, #tpu.memory_space<vmem>>, vector<64x32xf32>
    %c0_23 = arith.constant 0 : index
    %c0_24 = arith.constant 0 : index
    %19 = vector.load %arg8[%c0_23, %c0_24] : memref<32x8xf32, #tpu.memory_space<vmem>>, vector<32x8xf32>
    %c0_25 = arith.constant 0 : index
    %c0_26 = arith.constant 0 : index
    %20 = vector.load %arg9[%c0_25, %c0_26] : memref<64x64xf32, #tpu.memory_space<vmem>>, vector<64x64xf32>
    %c0_27 = arith.constant 0 : index
    %c0_28 = arith.constant 0 : index
    %21 = vector.load %arg10[%c0_27, %c0_28] : memref<64x16xf32, #tpu.memory_space<vmem>>, vector<64x16xf32>
    %c0_29 = arith.constant 0 : index
    %c0_30 = arith.constant 0 : index
    %c0_31 = arith.constant 0 : index
    %22 = vector.load %arg25[%c0_29, %c0_30, %c0_31] : memref<2x1x32xf32, #tpu.memory_space<vmem>>, vector<1x1x32xf32>
    %23 = vector.shape_cast %22 : vector<1x1x32xf32> to vector<1x32xf32>
    %c0_32 = arith.constant 0 : index
    %c0_33 = arith.constant 0 : index
    %c0_34 = arith.constant 0 : index
    %24 = vector.load %arg26[%c0_32, %c0_33, %c0_34] : memref<2x1x32xf32, #tpu.memory_space<vmem>>, vector<1x1x32xf32>
    %25 = vector.shape_cast %24 : vector<1x1x32xf32> to vector<1x32xf32>
    %c0_35 = arith.constant 0 : index
    %c0_36 = arith.constant 0 : index
    %c0_37 = arith.constant 0 : index
    %26 = vector.load %arg15[%c0_35, %c0_36, %c0_37] : memref<2x32x96xf32, #tpu.memory_space<vmem>>, vector<1x32x96xf32>
    %27 = vector.shape_cast %26 : vector<1x32x96xf32> to vector<32x96xf32>
    %cst_38 = arith.constant dense<0.000000e+00> : vector<16x96xf32>
    %28 = tpu.matmul %9, %27, %cst_38 {dimension_numbers = #tpu.dot_dimension_numbers<[1], [0], [0], [1], [0, 0, 1, 1], [], []>} : vector<16x32xf32>, vector<32x96xf32>, vector<16x96xf32> -> vector<16x96xf32>
    %c0_39 = arith.constant 0 : index
    %c0_40 = arith.constant 0 : index
    %c0_41 = arith.constant 0 : index
    %29 = vector.load %arg16[%c0_39, %c0_40, %c0_41] : memref<2x1x96xf32, #tpu.memory_space<vmem>>, vector<1x1x96xf32>
    %30 = vector.shape_cast %29 : vector<1x1x96xf32> to vector<1x96xf32>
    %31 = vector.broadcast %30 : vector<1x96xf32> to vector<16x96xf32>
    %32 = arith.addf %28, %31 : vector<16x96xf32>
    %cst_42 = arith.constant dense<0.000000e+00> : vector<64x96xf32>
    %33 = tpu.matmul %11, %32, %cst_42 {dimension_numbers = #tpu.dot_dimension_numbers<[1], [0], [0], [1], [0, 0, 1, 1], [], []>} : vector<64x16xf32>, vector<16x96xf32>, vector<64x96xf32> -> vector<64x96xf32>
    %34 = arith.mulf %33, %16 : vector<64x96xf32>
    %cst_43 = arith.constant dense<0.000000e+00> : vector<64x24xf32>
    %35 = tpu.matmul %34, %17, %cst_43 {dimension_numbers = #tpu.dot_dimension_numbers<[1], [0], [0], [1], [0, 0, 1, 1], [], []>} : vector<64x96xf32>, vector<96x24xf32>, vector<64x24xf32> -> vector<64x24xf32>
    %36 = vector.extract_strided_slice %35 {offsets = [0, 0], sizes = [64, 8], strides = [1, 1]} : vector<64x24xf32> to vector<64x8xf32>
    %37 = vector.extract_strided_slice %35 {offsets = [0, 8], sizes = [64, 8], strides = [1, 1]} : vector<64x24xf32> to vector<64x8xf32>
    %38 = vector.extract_strided_slice %35 {offsets = [0, 16], sizes = [64, 8], strides = [1, 1]} : vector<64x24xf32> to vector<64x8xf32>
    %c0_44 = arith.constant 0 : index
    %c0_45 = arith.constant 0 : index
    %c0_46 = arith.constant 0 : index
    %39 = vector.load %arg17[%c0_44, %c0_45, %c0_46] : memref<2x32x32xf32, #tpu.memory_space<vmem>>, vector<1x32x32xf32>
    %40 = vector.shape_cast %39 : vector<1x32x32xf32> to vector<32x32xf32>
    %c0_47 = arith.constant 0 : index
    %c0_48 = arith.constant 0 : index
    %c0_49 = arith.constant 0 : index
    %41 = vector.load %arg18[%c0_47, %c0_48, %c0_49] : memref<2x1x32xf32, #tpu.memory_space<vmem>>, vector<1x1x32xf32>
    %42 = vector.shape_cast %41 : vector<1x1x32xf32> to vector<1x32xf32>
    %cst_50 = arith.constant dense<0.000000e+00> : vector<64x64xf32>
    %43 = tpu.matmul %36, %37, %cst_50 {dimension_numbers = #tpu.dot_dimension_numbers<[1], [1], [0], [0], [0, 0, 1, 0], [], []>} : vector<64x8xf32>, vector<64x8xf32>, vector<64x64xf32> -> vector<64x64xf32>
    %cst_51 = arith.constant 0.353553385 : f32
    %44 = vector.broadcast %cst_51 : f32 to vector<64x64xf32>
    %45 = arith.mulf %43, %44 : vector<64x64xf32>
    %46 = arith.addf %45, %12 : vector<64x64xf32>
    %cst_52 = arith.constant dense<0xFF800000> : vector<64xf32>
    %47 = vector.multi_reduction <maximumf>, %46, %cst_52 [1] : vector<64x64xf32> to vector<64xf32>
    %48 = vector.shape_cast %47 : vector<64xf32> to vector<64x1xf32>
    %49 = vector.broadcast %48 : vector<64x1xf32> to vector<64x64xf32>
    %50 = arith.subf %46, %49 : vector<64x64xf32>
    %51 = math.exp %50 : vector<64x64xf32>
    %cst_53 = arith.constant dense<0.000000e+00> : vector<64xf32>
    %52 = vector.multi_reduction <add>, %51, %cst_53 [1] : vector<64x64xf32> to vector<64xf32>
    %53 = vector.shape_cast %52 : vector<64xf32> to vector<64x1xf32>
    %54 = tpu.reciprocal %53 : vector<64x1xf32> -> vector<64x1xf32>
    %55 = vector.broadcast %54 : vector<64x1xf32> to vector<64x64xf32>
    %56 = arith.mulf %51, %55 : vector<64x64xf32>
    %cst_54 = arith.constant dense<0.000000e+00> : vector<64x8xf32>
    %57 = tpu.matmul %56, %38, %cst_54 {dimension_numbers = #tpu.dot_dimension_numbers<[1], [0], [0], [1], [0, 0, 1, 1], [], []>} : vector<64x64xf32>, vector<64x8xf32>, vector<64x8xf32> -> vector<64x8xf32>
    %cst_55 = arith.constant dense<0.000000e+00> : vector<64x32xf32>
    %58 = tpu.matmul %57, %13, %cst_55 {dimension_numbers = #tpu.dot_dimension_numbers<[1], [0], [0], [1], [0, 0, 1, 1], [], []>} : vector<64x8xf32>, vector<8x32xf32>, vector<64x32xf32> -> vector<64x32xf32>
    %59 = arith.mulf %58, %14 : vector<64x32xf32>
    %cst_56 = arith.constant dense<0.000000e+00> : vector<64x32xf32>
    %60 = tpu.matmul %59, %40, %cst_56 {dimension_numbers = #tpu.dot_dimension_numbers<[1], [0], [0], [1], [0, 0, 1, 1], [], []>} : vector<64x32xf32>, vector<32x32xf32>, vector<64x32xf32> -> vector<64x32xf32>
    %cst_57 = arith.constant dense<0.000000e+00> : vector<16x32xf32>
    %61 = tpu.matmul %15, %60, %cst_57 {dimension_numbers = #tpu.dot_dimension_numbers<[1], [0], [0], [1], [0, 0, 1, 1], [], []>} : vector<16x64xf32>, vector<64x32xf32>, vector<16x32xf32> -> vector<16x32xf32>
    %62 = vector.broadcast %42 : vector<1x32xf32> to vector<16x32xf32>
    %63 = arith.addf %61, %62 : vector<16x32xf32>
    %64 = arith.addf %9, %63 : vector<16x32xf32>
    %cst_58 = arith.constant dense<0.000000e+00> : vector<16xf32>
    %65 = vector.multi_reduction <add>, %64, %cst_58 [1] : vector<16x32xf32> to vector<16xf32>
    %66 = vector.shape_cast %65 : vector<16xf32> to vector<16x1xf32>
    %cst_59 = arith.constant 3.200000e+01 : f32
    %67 = vector.broadcast %cst_59 : f32 to vector<16x1xf32>
    %68 = arith.divf %66, %67 : vector<16x1xf32>
    %69 = vector.broadcast %68 : vector<16x1xf32> to vector<16x32xf32>
    %70 = arith.subf %64, %69 : vector<16x32xf32>
    %71 = arith.mulf %70, %70 : vector<16x32xf32>
    %cst_60 = arith.constant dense<0.000000e+00> : vector<16xf32>
    %72 = vector.multi_reduction <add>, %71, %cst_60 [1] : vector<16x32xf32> to vector<16xf32>
    %73 = vector.shape_cast %72 : vector<16xf32> to vector<16x1xf32>
    %cst_61 = arith.constant 3.200000e+01 : f32
    %74 = vector.broadcast %cst_61 : f32 to vector<16x1xf32>
    %75 = arith.divf %73, %74 : vector<16x1xf32>
    %76 = vector.broadcast %68 : vector<16x1xf32> to vector<16x32xf32>
    %77 = arith.subf %64, %76 : vector<16x32xf32>
    %cst_62 = arith.constant 9.99999974E-6 : f32
    %78 = vector.broadcast %cst_62 : f32 to vector<16x1xf32>
    %79 = arith.addf %75, %78 : vector<16x1xf32>
    %80 = math.rsqrt %79 : vector<16x1xf32>
    %81 = vector.broadcast %80 : vector<16x1xf32> to vector<16x32xf32>
    %82 = arith.mulf %77, %81 : vector<16x32xf32>
    %83 = vector.broadcast %23 : vector<1x32xf32> to vector<16x32xf32>
    %84 = arith.mulf %82, %83 : vector<16x32xf32>
    %85 = vector.broadcast %25 : vector<1x32xf32> to vector<16x32xf32>
    %86 = arith.addf %84, %85 : vector<16x32xf32>
    %c0_63 = arith.constant 0 : index
    %c0_64 = arith.constant 0 : index
    %c0_65 = arith.constant 0 : index
    %87 = vector.load %arg19[%c0_63, %c0_64, %c0_65] : memref<2x32x32xf32, #tpu.memory_space<vmem>>, vector<1x32x32xf32>
    %88 = vector.shape_cast %87 : vector<1x32x32xf32> to vector<32x32xf32>
    %cst_66 = arith.constant dense<0.000000e+00> : vector<16x32xf32>
    %89 = tpu.matmul %86, %88, %cst_66 {dimension_numbers = #tpu.dot_dimension_numbers<[1], [0], [0], [1], [0, 0, 1, 1], [], []>} : vector<16x32xf32>, vector<32x32xf32>, vector<16x32xf32> -> vector<16x32xf32>
    %c0_67 = arith.constant 0 : index
    %c0_68 = arith.constant 0 : index
    %c0_69 = arith.constant 0 : index
    %90 = vector.load %arg20[%c0_67, %c0_68, %c0_69] : memref<2x1x32xf32, #tpu.memory_space<vmem>>, vector<1x1x32xf32>
    %91 = vector.shape_cast %90 : vector<1x1x32xf32> to vector<1x32xf32>
    %92 = vector.broadcast %91 : vector<1x32xf32> to vector<16x32xf32>
    %93 = arith.addf %89, %92 : vector<16x32xf32>
    %c0_70 = arith.constant 0 : index
    %c0_71 = arith.constant 0 : index
    %c0_72 = arith.constant 0 : index
    %94 = vector.load %arg21[%c0_70, %c0_71, %c0_72] : memref<2x32x64xf32, #tpu.memory_space<vmem>>, vector<1x32x64xf32>
    %95 = vector.shape_cast %94 : vector<1x32x64xf32> to vector<32x64xf32>
    %cst_73 = arith.constant dense<0.000000e+00> : vector<16x64xf32>
    %96 = tpu.matmul %10, %95, %cst_73 {dimension_numbers = #tpu.dot_dimension_numbers<[1], [0], [0], [1], [0, 0, 1, 1], [], []>} : vector<16x32xf32>, vector<32x64xf32>, vector<16x64xf32> -> vector<16x64xf32>
    %c0_74 = arith.constant 0 : index
    %c0_75 = arith.constant 0 : index
    %c0_76 = arith.constant 0 : index
    %97 = vector.load %arg22[%c0_74, %c0_75, %c0_76] : memref<2x1x64xf32, #tpu.memory_space<vmem>>, vector<1x1x64xf32>
    %98 = vector.shape_cast %97 : vector<1x1x64xf32> to vector<1x64xf32>
    %99 = vector.broadcast %98 : vector<1x64xf32> to vector<16x64xf32>
    %100 = arith.addf %96, %99 : vector<16x64xf32>
    %cst_77 = arith.constant dense<0.000000e+00> : vector<64x32xf32>
    %101 = tpu.matmul %11, %93, %cst_77 {dimension_numbers = #tpu.dot_dimension_numbers<[1], [0], [0], [1], [0, 0, 1, 1], [], []>} : vector<64x16xf32>, vector<16x32xf32>, vector<64x32xf32> -> vector<64x32xf32>
    %102 = arith.mulf %101, %18 : vector<64x32xf32>
    %cst_78 = arith.constant dense<0.000000e+00> : vector<64x8xf32>
    %103 = tpu.matmul %102, %19, %cst_78 {dimension_numbers = #tpu.dot_dimension_numbers<[1], [0], [0], [1], [0, 0, 1, 1], [], []>} : vector<64x32xf32>, vector<32x8xf32>, vector<64x8xf32> -> vector<64x8xf32>
    %cst_79 = arith.constant dense<0.000000e+00> : vector<64x64xf32>
    %104 = tpu.matmul %11, %100, %cst_79 {dimension_numbers = #tpu.dot_dimension_numbers<[1], [0], [0], [1], [0, 0, 1, 1], [], []>} : vector<64x16xf32>, vector<16x64xf32>, vector<64x64xf32> -> vector<64x64xf32>
    %105 = arith.mulf %104, %20 : vector<64x64xf32>
    %cst_80 = arith.constant dense<0.000000e+00> : vector<64x16xf32>
    %106 = tpu.matmul %105, %21, %cst_80 {dimension_numbers = #tpu.dot_dimension_numbers<[1], [0], [0], [1], [0, 0, 1, 1], [], []>} : vector<64x64xf32>, vector<64x16xf32>, vector<64x16xf32> -> vector<64x16xf32>
    %107 = vector.extract_strided_slice %106 {offsets = [0, 0], sizes = [64, 8], strides = [1, 1]} : vector<64x16xf32> to vector<64x8xf32>
    %108 = vector.extract_strided_slice %106 {offsets = [0, 8], sizes = [64, 8], strides = [1, 1]} : vector<64x16xf32> to vector<64x8xf32>
    %c0_81 = arith.constant 0 : index
    %c0_82 = arith.constant 0 : index
    %c0_83 = arith.constant 0 : index
    %109 = vector.load %arg23[%c0_81, %c0_82, %c0_83] : memref<2x32x32xf32, #tpu.memory_space<vmem>>, vector<1x32x32xf32>
    %110 = vector.shape_cast %109 : vector<1x32x32xf32> to vector<32x32xf32>
    %c0_84 = arith.constant 0 : index
    %c0_85 = arith.constant 0 : index
    %c0_86 = arith.constant 0 : index
    %111 = vector.load %arg24[%c0_84, %c0_85, %c0_86] : memref<2x1x32xf32, #tpu.memory_space<vmem>>, vector<1x1x32xf32>
    %112 = vector.shape_cast %111 : vector<1x1x32xf32> to vector<1x32xf32>
    %cst_87 = arith.constant dense<0.000000e+00> : vector<64x64xf32>
    %113 = tpu.matmul %103, %107, %cst_87 {dimension_numbers = #tpu.dot_dimension_numbers<[1], [1], [0], [0], [0, 0, 1, 0], [], []>} : vector<64x8xf32>, vector<64x8xf32>, vector<64x64xf32> -> vector<64x64xf32>
    %cst_88 = arith.constant 0.353553385 : f32
    %114 = vector.broadcast %cst_88 : f32 to vector<64x64xf32>
    %115 = arith.mulf %113, %114 : vector<64x64xf32>
    %116 = arith.addf %115, %12 : vector<64x64xf32>
    %cst_89 = arith.constant dense<0xFF800000> : vector<64xf32>
    %117 = vector.multi_reduction <maximumf>, %116, %cst_89 [1] : vector<64x64xf32> to vector<64xf32>
    %118 = vector.shape_cast %117 : vector<64xf32> to vector<64x1xf32>
    %119 = vector.broadcast %118 : vector<64x1xf32> to vector<64x64xf32>
    %120 = arith.subf %116, %119 : vector<64x64xf32>
    %121 = math.exp %120 : vector<64x64xf32>
    %cst_90 = arith.constant dense<0.000000e+00> : vector<64xf32>
    %122 = vector.multi_reduction <add>, %121, %cst_90 [1] : vector<64x64xf32> to vector<64xf32>
    %123 = vector.shape_cast %122 : vector<64xf32> to vector<64x1xf32>
    %124 = tpu.reciprocal %123 : vector<64x1xf32> -> vector<64x1xf32>
    %125 = vector.broadcast %124 : vector<64x1xf32> to vector<64x64xf32>
    %126 = arith.mulf %121, %125 : vector<64x64xf32>
    %cst_91 = arith.constant dense<0.000000e+00> : vector<64x8xf32>
    %127 = tpu.matmul %126, %108, %cst_91 {dimension_numbers = #tpu.dot_dimension_numbers<[1], [0], [0], [1], [0, 0, 1, 1], [], []>} : vector<64x64xf32>, vector<64x8xf32>, vector<64x8xf32> -> vector<64x8xf32>
    %cst_92 = arith.constant dense<0.000000e+00> : vector<64x32xf32>
    %128 = tpu.matmul %127, %13, %cst_92 {dimension_numbers = #tpu.dot_dimension_numbers<[1], [0], [0], [1], [0, 0, 1, 1], [], []>} : vector<64x8xf32>, vector<8x32xf32>, vector<64x32xf32> -> vector<64x32xf32>
    %129 = arith.mulf %128, %14 : vector<64x32xf32>
    %cst_93 = arith.constant dense<0.000000e+00> : vector<64x32xf32>
    %130 = tpu.matmul %129, %110, %cst_93 {dimension_numbers = #tpu.dot_dimension_numbers<[1], [0], [0], [1], [0, 0, 1, 1], [], []>} : vector<64x32xf32>, vector<32x32xf32>, vector<64x32xf32> -> vector<64x32xf32>
    %cst_94 = arith.constant dense<0.000000e+00> : vector<16x32xf32>
    %131 = tpu.matmul %15, %130, %cst_94 {dimension_numbers = #tpu.dot_dimension_numbers<[1], [0], [0], [1], [0, 0, 1, 1], [], []>} : vector<16x64xf32>, vector<64x32xf32>, vector<16x32xf32> -> vector<16x32xf32>
    %132 = vector.broadcast %112 : vector<1x32xf32> to vector<16x32xf32>
    %133 = arith.addf %131, %132 : vector<16x32xf32>
    %134 = arith.addf %86, %133 : vector<16x32xf32>
    %cst_95 = arith.constant dense<0.000000e+00> : vector<16xf32>
    %135 = vector.multi_reduction <add>, %134, %cst_95 [1] : vector<16x32xf32> to vector<16xf32>
    %136 = vector.shape_cast %135 : vector<16xf32> to vector<16x1xf32>
    %cst_96 = arith.constant 3.200000e+01 : f32
    %137 = vector.broadcast %cst_96 : f32 to vector<16x1xf32>
    %138 = arith.divf %136, %137 : vector<16x1xf32>
    %139 = vector.broadcast %138 : vector<16x1xf32> to vector<16x32xf32>
    %140 = arith.subf %134, %139 : vector<16x32xf32>
    %141 = arith.mulf %140, %140 : vector<16x32xf32>
    %cst_97 = arith.constant dense<0.000000e+00> : vector<16xf32>
    %142 = vector.multi_reduction <add>, %141, %cst_97 [1] : vector<16x32xf32> to vector<16xf32>
    %143 = vector.shape_cast %142 : vector<16xf32> to vector<16x1xf32>
    %cst_98 = arith.constant 3.200000e+01 : f32
    %144 = vector.broadcast %cst_98 : f32 to vector<16x1xf32>
    %145 = arith.divf %143, %144 : vector<16x1xf32>
    %146 = vector.broadcast %138 : vector<16x1xf32> to vector<16x32xf32>
    %147 = arith.subf %134, %146 : vector<16x32xf32>
    %cst_99 = arith.constant 9.99999974E-6 : f32
    %148 = vector.broadcast %cst_99 : f32 to vector<16x1xf32>
    %149 = arith.addf %145, %148 : vector<16x1xf32>
    %150 = math.rsqrt %149 : vector<16x1xf32>
    %151 = vector.broadcast %150 : vector<16x1xf32> to vector<16x32xf32>
    %152 = arith.mulf %147, %151 : vector<16x32xf32>
    %153 = vector.broadcast %23 : vector<1x32xf32> to vector<16x32xf32>
    %154 = arith.mulf %152, %153 : vector<16x32xf32>
    %155 = vector.broadcast %25 : vector<1x32xf32> to vector<16x32xf32>
    %156 = arith.addf %154, %155 : vector<16x32xf32>
    %c0_100 = arith.constant 0 : index
    %c0_101 = arith.constant 0 : index
    %c0_102 = arith.constant 0 : index
    %157 = vector.load %arg27[%c0_100, %c0_101, %c0_102] : memref<2x32x128xf32, #tpu.memory_space<vmem>>, vector<1x32x128xf32>
    %158 = vector.shape_cast %157 : vector<1x32x128xf32> to vector<32x128xf32>
    %cst_103 = arith.constant dense<0.000000e+00> : vector<16x128xf32>
    %159 = tpu.matmul %156, %158, %cst_103 {dimension_numbers = #tpu.dot_dimension_numbers<[1], [0], [0], [1], [0, 0, 1, 1], [], []>} : vector<16x32xf32>, vector<32x128xf32>, vector<16x128xf32> -> vector<16x128xf32>
    %c0_104 = arith.constant 0 : index
    %c0_105 = arith.constant 0 : index
    %c0_106 = arith.constant 0 : index
    %160 = vector.load %arg28[%c0_104, %c0_105, %c0_106] : memref<2x1x128xf32, #tpu.memory_space<vmem>>, vector<1x1x128xf32>
    %161 = vector.shape_cast %160 : vector<1x1x128xf32> to vector<1x128xf32>
    %162 = vector.broadcast %161 : vector<1x128xf32> to vector<16x128xf32>
    %163 = arith.addf %159, %162 : vector<16x128xf32>
    %cst_107 = arith.constant 0.000000e+00 : f32
    %164 = vector.broadcast %cst_107 : f32 to vector<16x128xf32>
    %165 = arith.maximumf %163, %164 : vector<16x128xf32>
    %c0_108 = arith.constant 0 : index
    %c0_109 = arith.constant 0 : index
    %c0_110 = arith.constant 0 : index
    %166 = vector.load %arg29[%c0_108, %c0_109, %c0_110] : memref<2x128x32xf32, #tpu.memory_space<vmem>>, vector<1x128x32xf32>
    %167 = vector.shape_cast %166 : vector<1x128x32xf32> to vector<128x32xf32>
    %cst_111 = arith.constant dense<0.000000e+00> : vector<16x32xf32>
    %168 = tpu.matmul %165, %167, %cst_111 {dimension_numbers = #tpu.dot_dimension_numbers<[1], [0], [0], [1], [0, 0, 1, 1], [], []>} : vector<16x128xf32>, vector<128x32xf32>, vector<16x32xf32> -> vector<16x32xf32>
    %c0_112 = arith.constant 0 : index
    %c0_113 = arith.constant 0 : index
    %c0_114 = arith.constant 0 : index
    %169 = vector.load %arg30[%c0_112, %c0_113, %c0_114] : memref<2x1x32xf32, #tpu.memory_space<vmem>>, vector<1x1x32xf32>
    %170 = vector.shape_cast %169 : vector<1x1x32xf32> to vector<1x32xf32>
    %171 = vector.broadcast %170 : vector<1x32xf32> to vector<16x32xf32>
    %172 = arith.addf %168, %171 : vector<16x32xf32>
    %173 = arith.addf %156, %172 : vector<16x32xf32>
    %cst_115 = arith.constant dense<0.000000e+00> : vector<16xf32>
    %174 = vector.multi_reduction <add>, %173, %cst_115 [1] : vector<16x32xf32> to vector<16xf32>
    %175 = vector.shape_cast %174 : vector<16xf32> to vector<16x1xf32>
    %cst_116 = arith.constant 3.200000e+01 : f32
    %176 = vector.broadcast %cst_116 : f32 to vector<16x1xf32>
    %177 = arith.divf %175, %176 : vector<16x1xf32>
    %178 = vector.broadcast %177 : vector<16x1xf32> to vector<16x32xf32>
    %179 = arith.subf %173, %178 : vector<16x32xf32>
    %180 = arith.mulf %179, %179 : vector<16x32xf32>
    %cst_117 = arith.constant dense<0.000000e+00> : vector<16xf32>
    %181 = vector.multi_reduction <add>, %180, %cst_117 [1] : vector<16x32xf32> to vector<16xf32>
    %182 = vector.shape_cast %181 : vector<16xf32> to vector<16x1xf32>
    %cst_118 = arith.constant 3.200000e+01 : f32
    %183 = vector.broadcast %cst_118 : f32 to vector<16x1xf32>
    %184 = arith.divf %182, %183 : vector<16x1xf32>
    %185 = vector.broadcast %177 : vector<16x1xf32> to vector<16x32xf32>
    %186 = arith.subf %173, %185 : vector<16x32xf32>
    %cst_119 = arith.constant 9.99999974E-6 : f32
    %187 = vector.broadcast %cst_119 : f32 to vector<16x1xf32>
    %188 = arith.addf %184, %187 : vector<16x1xf32>
    %189 = math.rsqrt %188 : vector<16x1xf32>
    %190 = vector.broadcast %189 : vector<16x1xf32> to vector<16x32xf32>
    %191 = arith.mulf %186, %190 : vector<16x32xf32>
    %192 = vector.broadcast %23 : vector<1x32xf32> to vector<16x32xf32>
    %193 = arith.mulf %191, %192 : vector<16x32xf32>
    %194 = vector.broadcast %25 : vector<1x32xf32> to vector<16x32xf32>
    %195 = arith.addf %193, %194 : vector<16x32xf32>
    %c1 = arith.constant 1 : index
    %c0_120 = arith.constant 0 : index
    %c0_121 = arith.constant 0 : index
    %196 = vector.load %arg25[%c1, %c0_120, %c0_121] : memref<2x1x32xf32, #tpu.memory_space<vmem>>, vector<1x1x32xf32>
    %197 = vector.shape_cast %196 : vector<1x1x32xf32> to vector<1x32xf32>
    %c1_122 = arith.constant 1 : index
    %c0_123 = arith.constant 0 : index
    %c0_124 = arith.constant 0 : index
    %198 = vector.load %arg26[%c1_122, %c0_123, %c0_124] : memref<2x1x32xf32, #tpu.memory_space<vmem>>, vector<1x1x32xf32>
    %199 = vector.shape_cast %198 : vector<1x1x32xf32> to vector<1x32xf32>
    %c1_125 = arith.constant 1 : index
    %c0_126 = arith.constant 0 : index
    %c0_127 = arith.constant 0 : index
    %200 = vector.load %arg15[%c1_125, %c0_126, %c0_127] : memref<2x32x96xf32, #tpu.memory_space<vmem>>, vector<1x32x96xf32>
    %201 = vector.shape_cast %200 : vector<1x32x96xf32> to vector<32x96xf32>
    %cst_128 = arith.constant dense<0.000000e+00> : vector<16x96xf32>
    %202 = tpu.matmul %195, %201, %cst_128 {dimension_numbers = #tpu.dot_dimension_numbers<[1], [0], [0], [1], [0, 0, 1, 1], [], []>} : vector<16x32xf32>, vector<32x96xf32>, vector<16x96xf32> -> vector<16x96xf32>
    %c1_129 = arith.constant 1 : index
    %c0_130 = arith.constant 0 : index
    %c0_131 = arith.constant 0 : index
    %203 = vector.load %arg16[%c1_129, %c0_130, %c0_131] : memref<2x1x96xf32, #tpu.memory_space<vmem>>, vector<1x1x96xf32>
    %204 = vector.shape_cast %203 : vector<1x1x96xf32> to vector<1x96xf32>
    %205 = vector.broadcast %204 : vector<1x96xf32> to vector<16x96xf32>
    %206 = arith.addf %202, %205 : vector<16x96xf32>
    %cst_132 = arith.constant dense<0.000000e+00> : vector<64x96xf32>
    %207 = tpu.matmul %11, %206, %cst_132 {dimension_numbers = #tpu.dot_dimension_numbers<[1], [0], [0], [1], [0, 0, 1, 1], [], []>} : vector<64x16xf32>, vector<16x96xf32>, vector<64x96xf32> -> vector<64x96xf32>
    %208 = arith.mulf %207, %16 : vector<64x96xf32>
    %cst_133 = arith.constant dense<0.000000e+00> : vector<64x24xf32>
    %209 = tpu.matmul %208, %17, %cst_133 {dimension_numbers = #tpu.dot_dimension_numbers<[1], [0], [0], [1], [0, 0, 1, 1], [], []>} : vector<64x96xf32>, vector<96x24xf32>, vector<64x24xf32> -> vector<64x24xf32>
    %210 = vector.extract_strided_slice %209 {offsets = [0, 0], sizes = [64, 8], strides = [1, 1]} : vector<64x24xf32> to vector<64x8xf32>
    %211 = vector.extract_strided_slice %209 {offsets = [0, 8], sizes = [64, 8], strides = [1, 1]} : vector<64x24xf32> to vector<64x8xf32>
    %212 = vector.extract_strided_slice %209 {offsets = [0, 16], sizes = [64, 8], strides = [1, 1]} : vector<64x24xf32> to vector<64x8xf32>
    %c1_134 = arith.constant 1 : index
    %c0_135 = arith.constant 0 : index
    %c0_136 = arith.constant 0 : index
    %213 = vector.load %arg17[%c1_134, %c0_135, %c0_136] : memref<2x32x32xf32, #tpu.memory_space<vmem>>, vector<1x32x32xf32>
    %214 = vector.shape_cast %213 : vector<1x32x32xf32> to vector<32x32xf32>
    %c1_137 = arith.constant 1 : index
    %c0_138 = arith.constant 0 : index
    %c0_139 = arith.constant 0 : index
    %215 = vector.load %arg18[%c1_137, %c0_138, %c0_139] : memref<2x1x32xf32, #tpu.memory_space<vmem>>, vector<1x1x32xf32>
    %216 = vector.shape_cast %215 : vector<1x1x32xf32> to vector<1x32xf32>
    %cst_140 = arith.constant dense<0.000000e+00> : vector<64x64xf32>
    %217 = tpu.matmul %210, %211, %cst_140 {dimension_numbers = #tpu.dot_dimension_numbers<[1], [1], [0], [0], [0, 0, 1, 0], [], []>} : vector<64x8xf32>, vector<64x8xf32>, vector<64x64xf32> -> vector<64x64xf32>
    %cst_141 = arith.constant 0.353553385 : f32
    %218 = vector.broadcast %cst_141 : f32 to vector<64x64xf32>
    %219 = arith.mulf %217, %218 : vector<64x64xf32>
    %220 = arith.addf %219, %12 : vector<64x64xf32>
    %cst_142 = arith.constant dense<0xFF800000> : vector<64xf32>
    %221 = vector.multi_reduction <maximumf>, %220, %cst_142 [1] : vector<64x64xf32> to vector<64xf32>
    %222 = vector.shape_cast %221 : vector<64xf32> to vector<64x1xf32>
    %223 = vector.broadcast %222 : vector<64x1xf32> to vector<64x64xf32>
    %224 = arith.subf %220, %223 : vector<64x64xf32>
    %225 = math.exp %224 : vector<64x64xf32>
    %cst_143 = arith.constant dense<0.000000e+00> : vector<64xf32>
    %226 = vector.multi_reduction <add>, %225, %cst_143 [1] : vector<64x64xf32> to vector<64xf32>
    %227 = vector.shape_cast %226 : vector<64xf32> to vector<64x1xf32>
    %228 = tpu.reciprocal %227 : vector<64x1xf32> -> vector<64x1xf32>
    %229 = vector.broadcast %228 : vector<64x1xf32> to vector<64x64xf32>
    %230 = arith.mulf %225, %229 : vector<64x64xf32>
    %cst_144 = arith.constant dense<0.000000e+00> : vector<64x8xf32>
    %231 = tpu.matmul %230, %212, %cst_144 {dimension_numbers = #tpu.dot_dimension_numbers<[1], [0], [0], [1], [0, 0, 1, 1], [], []>} : vector<64x64xf32>, vector<64x8xf32>, vector<64x8xf32> -> vector<64x8xf32>
    %cst_145 = arith.constant dense<0.000000e+00> : vector<64x32xf32>
    %232 = tpu.matmul %231, %13, %cst_145 {dimension_numbers = #tpu.dot_dimension_numbers<[1], [0], [0], [1], [0, 0, 1, 1], [], []>} : vector<64x8xf32>, vector<8x32xf32>, vector<64x32xf32> -> vector<64x32xf32>
    %233 = arith.mulf %232, %14 : vector<64x32xf32>
    %cst_146 = arith.constant dense<0.000000e+00> : vector<64x32xf32>
    %234 = tpu.matmul %233, %214, %cst_146 {dimension_numbers = #tpu.dot_dimension_numbers<[1], [0], [0], [1], [0, 0, 1, 1], [], []>} : vector<64x32xf32>, vector<32x32xf32>, vector<64x32xf32> -> vector<64x32xf32>
    %cst_147 = arith.constant dense<0.000000e+00> : vector<16x32xf32>
    %235 = tpu.matmul %15, %234, %cst_147 {dimension_numbers = #tpu.dot_dimension_numbers<[1], [0], [0], [1], [0, 0, 1, 1], [], []>} : vector<16x64xf32>, vector<64x32xf32>, vector<16x32xf32> -> vector<16x32xf32>
    %236 = vector.broadcast %216 : vector<1x32xf32> to vector<16x32xf32>
    %237 = arith.addf %235, %236 : vector<16x32xf32>
    %238 = arith.addf %195, %237 : vector<16x32xf32>
    %cst_148 = arith.constant dense<0.000000e+00> : vector<16xf32>
    %239 = vector.multi_reduction <add>, %238, %cst_148 [1] : vector<16x32xf32> to vector<16xf32>
    %240 = vector.shape_cast %239 : vector<16xf32> to vector<16x1xf32>
    %cst_149 = arith.constant 3.200000e+01 : f32
    %241 = vector.broadcast %cst_149 : f32 to vector<16x1xf32>
    %242 = arith.divf %240, %241 : vector<16x1xf32>
    %243 = vector.broadcast %242 : vector<16x1xf32> to vector<16x32xf32>
    %244 = arith.subf %238, %243 : vector<16x32xf32>
    %245 = arith.mulf %244, %244 : vector<16x32xf32>
    %cst_150 = arith.constant dense<0.000000e+00> : vector<16xf32>
    %246 = vector.multi_reduction <add>, %245, %cst_150 [1] : vector<16x32xf32> to vector<16xf32>
    %247 = vector.shape_cast %246 : vector<16xf32> to vector<16x1xf32>
    %cst_151 = arith.constant 3.200000e+01 : f32
    %248 = vector.broadcast %cst_151 : f32 to vector<16x1xf32>
    %249 = arith.divf %247, %248 : vector<16x1xf32>
    %250 = vector.broadcast %242 : vector<16x1xf32> to vector<16x32xf32>
    %251 = arith.subf %238, %250 : vector<16x32xf32>
    %cst_152 = arith.constant 9.99999974E-6 : f32
    %252 = vector.broadcast %cst_152 : f32 to vector<16x1xf32>
    %253 = arith.addf %249, %252 : vector<16x1xf32>
    %254 = math.rsqrt %253 : vector<16x1xf32>
    %255 = vector.broadcast %254 : vector<16x1xf32> to vector<16x32xf32>
    %256 = arith.mulf %251, %255 : vector<16x32xf32>
    %257 = vector.broadcast %197 : vector<1x32xf32> to vector<16x32xf32>
    %258 = arith.mulf %256, %257 : vector<16x32xf32>
    %259 = vector.broadcast %199 : vector<1x32xf32> to vector<16x32xf32>
    %260 = arith.addf %258, %259 : vector<16x32xf32>
    %c1_153 = arith.constant 1 : index
    %c0_154 = arith.constant 0 : index
    %c0_155 = arith.constant 0 : index
    %261 = vector.load %arg19[%c1_153, %c0_154, %c0_155] : memref<2x32x32xf32, #tpu.memory_space<vmem>>, vector<1x32x32xf32>
    %262 = vector.shape_cast %261 : vector<1x32x32xf32> to vector<32x32xf32>
    %cst_156 = arith.constant dense<0.000000e+00> : vector<16x32xf32>
    %263 = tpu.matmul %260, %262, %cst_156 {dimension_numbers = #tpu.dot_dimension_numbers<[1], [0], [0], [1], [0, 0, 1, 1], [], []>} : vector<16x32xf32>, vector<32x32xf32>, vector<16x32xf32> -> vector<16x32xf32>
    %c1_157 = arith.constant 1 : index
    %c0_158 = arith.constant 0 : index
    %c0_159 = arith.constant 0 : index
    %264 = vector.load %arg20[%c1_157, %c0_158, %c0_159] : memref<2x1x32xf32, #tpu.memory_space<vmem>>, vector<1x1x32xf32>
    %265 = vector.shape_cast %264 : vector<1x1x32xf32> to vector<1x32xf32>
    %266 = vector.broadcast %265 : vector<1x32xf32> to vector<16x32xf32>
    %267 = arith.addf %263, %266 : vector<16x32xf32>
    %c1_160 = arith.constant 1 : index
    %c0_161 = arith.constant 0 : index
    %c0_162 = arith.constant 0 : index
    %268 = vector.load %arg21[%c1_160, %c0_161, %c0_162] : memref<2x32x64xf32, #tpu.memory_space<vmem>>, vector<1x32x64xf32>
    %269 = vector.shape_cast %268 : vector<1x32x64xf32> to vector<32x64xf32>
    %cst_163 = arith.constant dense<0.000000e+00> : vector<16x64xf32>
    %270 = tpu.matmul %10, %269, %cst_163 {dimension_numbers = #tpu.dot_dimension_numbers<[1], [0], [0], [1], [0, 0, 1, 1], [], []>} : vector<16x32xf32>, vector<32x64xf32>, vector<16x64xf32> -> vector<16x64xf32>
    %c1_164 = arith.constant 1 : index
    %c0_165 = arith.constant 0 : index
    %c0_166 = arith.constant 0 : index
    %271 = vector.load %arg22[%c1_164, %c0_165, %c0_166] : memref<2x1x64xf32, #tpu.memory_space<vmem>>, vector<1x1x64xf32>
    %272 = vector.shape_cast %271 : vector<1x1x64xf32> to vector<1x64xf32>
    %273 = vector.broadcast %272 : vector<1x64xf32> to vector<16x64xf32>
    %274 = arith.addf %270, %273 : vector<16x64xf32>
    %cst_167 = arith.constant dense<0.000000e+00> : vector<64x32xf32>
    %275 = tpu.matmul %11, %267, %cst_167 {dimension_numbers = #tpu.dot_dimension_numbers<[1], [0], [0], [1], [0, 0, 1, 1], [], []>} : vector<64x16xf32>, vector<16x32xf32>, vector<64x32xf32> -> vector<64x32xf32>
    %276 = arith.mulf %275, %18 : vector<64x32xf32>
    %cst_168 = arith.constant dense<0.000000e+00> : vector<64x8xf32>
    %277 = tpu.matmul %276, %19, %cst_168 {dimension_numbers = #tpu.dot_dimension_numbers<[1], [0], [0], [1], [0, 0, 1, 1], [], []>} : vector<64x32xf32>, vector<32x8xf32>, vector<64x8xf32> -> vector<64x8xf32>
    %cst_169 = arith.constant dense<0.000000e+00> : vector<64x64xf32>
    %278 = tpu.matmul %11, %274, %cst_169 {dimension_numbers = #tpu.dot_dimension_numbers<[1], [0], [0], [1], [0, 0, 1, 1], [], []>} : vector<64x16xf32>, vector<16x64xf32>, vector<64x64xf32> -> vector<64x64xf32>
    %279 = arith.mulf %278, %20 : vector<64x64xf32>
    %cst_170 = arith.constant dense<0.000000e+00> : vector<64x16xf32>
    %280 = tpu.matmul %279, %21, %cst_170 {dimension_numbers = #tpu.dot_dimension_numbers<[1], [0], [0], [1], [0, 0, 1, 1], [], []>} : vector<64x64xf32>, vector<64x16xf32>, vector<64x16xf32> -> vector<64x16xf32>
    %281 = vector.extract_strided_slice %280 {offsets = [0, 0], sizes = [64, 8], strides = [1, 1]} : vector<64x16xf32> to vector<64x8xf32>
    %282 = vector.extract_strided_slice %280 {offsets = [0, 8], sizes = [64, 8], strides = [1, 1]} : vector<64x16xf32> to vector<64x8xf32>
    %c1_171 = arith.constant 1 : index
    %c0_172 = arith.constant 0 : index
    %c0_173 = arith.constant 0 : index
    %283 = vector.load %arg23[%c1_171, %c0_172, %c0_173] : memref<2x32x32xf32, #tpu.memory_space<vmem>>, vector<1x32x32xf32>
    %284 = vector.shape_cast %283 : vector<1x32x32xf32> to vector<32x32xf32>
    %c1_174 = arith.constant 1 : index
    %c0_175 = arith.constant 0 : index
    %c0_176 = arith.constant 0 : index
    %285 = vector.load %arg24[%c1_174, %c0_175, %c0_176] : memref<2x1x32xf32, #tpu.memory_space<vmem>>, vector<1x1x32xf32>
    %286 = vector.shape_cast %285 : vector<1x1x32xf32> to vector<1x32xf32>
    %cst_177 = arith.constant dense<0.000000e+00> : vector<64x64xf32>
    %287 = tpu.matmul %277, %281, %cst_177 {dimension_numbers = #tpu.dot_dimension_numbers<[1], [1], [0], [0], [0, 0, 1, 0], [], []>} : vector<64x8xf32>, vector<64x8xf32>, vector<64x64xf32> -> vector<64x64xf32>
    %cst_178 = arith.constant 0.353553385 : f32
    %288 = vector.broadcast %cst_178 : f32 to vector<64x64xf32>
    %289 = arith.mulf %287, %288 : vector<64x64xf32>
    %290 = arith.addf %289, %12 : vector<64x64xf32>
    %cst_179 = arith.constant dense<0xFF800000> : vector<64xf32>
    %291 = vector.multi_reduction <maximumf>, %290, %cst_179 [1] : vector<64x64xf32> to vector<64xf32>
    %292 = vector.shape_cast %291 : vector<64xf32> to vector<64x1xf32>
    %293 = vector.broadcast %292 : vector<64x1xf32> to vector<64x64xf32>
    %294 = arith.subf %290, %293 : vector<64x64xf32>
    %295 = math.exp %294 : vector<64x64xf32>
    %cst_180 = arith.constant dense<0.000000e+00> : vector<64xf32>
    %296 = vector.multi_reduction <add>, %295, %cst_180 [1] : vector<64x64xf32> to vector<64xf32>
    %297 = vector.shape_cast %296 : vector<64xf32> to vector<64x1xf32>
    %298 = tpu.reciprocal %297 : vector<64x1xf32> -> vector<64x1xf32>
    %299 = vector.broadcast %298 : vector<64x1xf32> to vector<64x64xf32>
    %300 = arith.mulf %295, %299 : vector<64x64xf32>
    %cst_181 = arith.constant dense<0.000000e+00> : vector<64x8xf32>
    %301 = tpu.matmul %300, %282, %cst_181 {dimension_numbers = #tpu.dot_dimension_numbers<[1], [0], [0], [1], [0, 0, 1, 1], [], []>} : vector<64x64xf32>, vector<64x8xf32>, vector<64x8xf32> -> vector<64x8xf32>
    %cst_182 = arith.constant dense<0.000000e+00> : vector<64x32xf32>
    %302 = tpu.matmul %301, %13, %cst_182 {dimension_numbers = #tpu.dot_dimension_numbers<[1], [0], [0], [1], [0, 0, 1, 1], [], []>} : vector<64x8xf32>, vector<8x32xf32>, vector<64x32xf32> -> vector<64x32xf32>
    %303 = arith.mulf %302, %14 : vector<64x32xf32>
    %cst_183 = arith.constant dense<0.000000e+00> : vector<64x32xf32>
    %304 = tpu.matmul %303, %284, %cst_183 {dimension_numbers = #tpu.dot_dimension_numbers<[1], [0], [0], [1], [0, 0, 1, 1], [], []>} : vector<64x32xf32>, vector<32x32xf32>, vector<64x32xf32> -> vector<64x32xf32>
    %cst_184 = arith.constant dense<0.000000e+00> : vector<16x32xf32>
    %305 = tpu.matmul %15, %304, %cst_184 {dimension_numbers = #tpu.dot_dimension_numbers<[1], [0], [0], [1], [0, 0, 1, 1], [], []>} : vector<16x64xf32>, vector<64x32xf32>, vector<16x32xf32> -> vector<16x32xf32>
    %306 = vector.broadcast %286 : vector<1x32xf32> to vector<16x32xf32>
    %307 = arith.addf %305, %306 : vector<16x32xf32>
    %308 = arith.addf %260, %307 : vector<16x32xf32>
    %cst_185 = arith.constant dense<0.000000e+00> : vector<16xf32>
    %309 = vector.multi_reduction <add>, %308, %cst_185 [1] : vector<16x32xf32> to vector<16xf32>
    %310 = vector.shape_cast %309 : vector<16xf32> to vector<16x1xf32>
    %cst_186 = arith.constant 3.200000e+01 : f32
    %311 = vector.broadcast %cst_186 : f32 to vector<16x1xf32>
    %312 = arith.divf %310, %311 : vector<16x1xf32>
    %313 = vector.broadcast %312 : vector<16x1xf32> to vector<16x32xf32>
    %314 = arith.subf %308, %313 : vector<16x32xf32>
    %315 = arith.mulf %314, %314 : vector<16x32xf32>
    %cst_187 = arith.constant dense<0.000000e+00> : vector<16xf32>
    %316 = vector.multi_reduction <add>, %315, %cst_187 [1] : vector<16x32xf32> to vector<16xf32>
    %317 = vector.shape_cast %316 : vector<16xf32> to vector<16x1xf32>
    %cst_188 = arith.constant 3.200000e+01 : f32
    %318 = vector.broadcast %cst_188 : f32 to vector<16x1xf32>
    %319 = arith.divf %317, %318 : vector<16x1xf32>
    %320 = vector.broadcast %312 : vector<16x1xf32> to vector<16x32xf32>
    %321 = arith.subf %308, %320 : vector<16x32xf32>
    %cst_189 = arith.constant 9.99999974E-6 : f32
    %322 = vector.broadcast %cst_189 : f32 to vector<16x1xf32>
    %323 = arith.addf %319, %322 : vector<16x1xf32>
    %324 = math.rsqrt %323 : vector<16x1xf32>
    %325 = vector.broadcast %324 : vector<16x1xf32> to vector<16x32xf32>
    %326 = arith.mulf %321, %325 : vector<16x32xf32>
    %327 = vector.broadcast %197 : vector<1x32xf32> to vector<16x32xf32>
    %328 = arith.mulf %326, %327 : vector<16x32xf32>
    %329 = vector.broadcast %199 : vector<1x32xf32> to vector<16x32xf32>
    %330 = arith.addf %328, %329 : vector<16x32xf32>
    %c1_190 = arith.constant 1 : index
    %c0_191 = arith.constant 0 : index
    %c0_192 = arith.constant 0 : index
    %331 = vector.load %arg27[%c1_190, %c0_191, %c0_192] : memref<2x32x128xf32, #tpu.memory_space<vmem>>, vector<1x32x128xf32>
    %332 = vector.shape_cast %331 : vector<1x32x128xf32> to vector<32x128xf32>
    %cst_193 = arith.constant dense<0.000000e+00> : vector<16x128xf32>
    %333 = tpu.matmul %330, %332, %cst_193 {dimension_numbers = #tpu.dot_dimension_numbers<[1], [0], [0], [1], [0, 0, 1, 1], [], []>} : vector<16x32xf32>, vector<32x128xf32>, vector<16x128xf32> -> vector<16x128xf32>
    %c1_194 = arith.constant 1 : index
    %c0_195 = arith.constant 0 : index
    %c0_196 = arith.constant 0 : index
    %334 = vector.load %arg28[%c1_194, %c0_195, %c0_196] : memref<2x1x128xf32, #tpu.memory_space<vmem>>, vector<1x1x128xf32>
    %335 = vector.shape_cast %334 : vector<1x1x128xf32> to vector<1x128xf32>
    %336 = vector.broadcast %335 : vector<1x128xf32> to vector<16x128xf32>
    %337 = arith.addf %333, %336 : vector<16x128xf32>
    %cst_197 = arith.constant 0.000000e+00 : f32
    %338 = vector.broadcast %cst_197 : f32 to vector<16x128xf32>
    %339 = arith.maximumf %337, %338 : vector<16x128xf32>
    %c1_198 = arith.constant 1 : index
    %c0_199 = arith.constant 0 : index
    %c0_200 = arith.constant 0 : index
    %340 = vector.load %arg29[%c1_198, %c0_199, %c0_200] : memref<2x128x32xf32, #tpu.memory_space<vmem>>, vector<1x128x32xf32>
    %341 = vector.shape_cast %340 : vector<1x128x32xf32> to vector<128x32xf32>
    %cst_201 = arith.constant dense<0.000000e+00> : vector<16x32xf32>
    %342 = tpu.matmul %339, %341, %cst_201 {dimension_numbers = #tpu.dot_dimension_numbers<[1], [0], [0], [1], [0, 0, 1, 1], [], []>} : vector<16x128xf32>, vector<128x32xf32>, vector<16x32xf32> -> vector<16x32xf32>
    %c1_202 = arith.constant 1 : index
    %c0_203 = arith.constant 0 : index
    %c0_204 = arith.constant 0 : index
    %343 = vector.load %arg30[%c1_202, %c0_203, %c0_204] : memref<2x1x32xf32, #tpu.memory_space<vmem>>, vector<1x1x32xf32>
    %344 = vector.shape_cast %343 : vector<1x1x32xf32> to vector<1x32xf32>
    %345 = vector.broadcast %344 : vector<1x32xf32> to vector<16x32xf32>
    %346 = arith.addf %342, %345 : vector<16x32xf32>
    %347 = arith.addf %330, %346 : vector<16x32xf32>
    %cst_205 = arith.constant dense<0.000000e+00> : vector<16xf32>
    %348 = vector.multi_reduction <add>, %347, %cst_205 [1] : vector<16x32xf32> to vector<16xf32>
    %349 = vector.shape_cast %348 : vector<16xf32> to vector<16x1xf32>
    %cst_206 = arith.constant 3.200000e+01 : f32
    %350 = vector.broadcast %cst_206 : f32 to vector<16x1xf32>
    %351 = arith.divf %349, %350 : vector<16x1xf32>
    %352 = vector.broadcast %351 : vector<16x1xf32> to vector<16x32xf32>
    %353 = arith.subf %347, %352 : vector<16x32xf32>
    %354 = arith.mulf %353, %353 : vector<16x32xf32>
    %cst_207 = arith.constant dense<0.000000e+00> : vector<16xf32>
    %355 = vector.multi_reduction <add>, %354, %cst_207 [1] : vector<16x32xf32> to vector<16xf32>
    %356 = vector.shape_cast %355 : vector<16xf32> to vector<16x1xf32>
    %cst_208 = arith.constant 3.200000e+01 : f32
    %357 = vector.broadcast %cst_208 : f32 to vector<16x1xf32>
    %358 = arith.divf %356, %357 : vector<16x1xf32>
    %359 = vector.broadcast %351 : vector<16x1xf32> to vector<16x32xf32>
    %360 = arith.subf %347, %359 : vector<16x32xf32>
    %cst_209 = arith.constant 9.99999974E-6 : f32
    %361 = vector.broadcast %cst_209 : f32 to vector<16x1xf32>
    %362 = arith.addf %358, %361 : vector<16x1xf32>
    %363 = math.rsqrt %362 : vector<16x1xf32>
    %364 = vector.broadcast %363 : vector<16x1xf32> to vector<16x32xf32>
    %365 = arith.mulf %360, %364 : vector<16x32xf32>
    %366 = vector.broadcast %197 : vector<1x32xf32> to vector<16x32xf32>
    %367 = arith.mulf %365, %366 : vector<16x32xf32>
    %368 = vector.broadcast %199 : vector<1x32xf32> to vector<16x32xf32>
    %369 = arith.addf %367, %368 : vector<16x32xf32>
    %c0_210 = arith.constant 0 : index
    %c0_211 = arith.constant 0 : index
    %370 = vector.load %arg31[%c0_210, %c0_211] : memref<32x128xf32, #tpu.memory_space<vmem>>, vector<32x128xf32>
    %cst_212 = arith.constant dense<0.000000e+00> : vector<16x128xf32>
    %371 = tpu.matmul %369, %370, %cst_212 {dimension_numbers = #tpu.dot_dimension_numbers<[1], [0], [0], [1], [0, 0, 1, 1], [], []>} : vector<16x32xf32>, vector<32x128xf32>, vector<16x128xf32> -> vector<16x128xf32>
    %c0_213 = arith.constant 0 : index
    %c0_214 = arith.constant 0 : index
    %372 = vector.load %arg32[%c0_213, %c0_214] : memref<1x128xf32, #tpu.memory_space<vmem>>, vector<1x128xf32>
    %373 = vector.broadcast %372 : vector<1x128xf32> to vector<16x128xf32>
    %374 = arith.addf %371, %373 : vector<16x128xf32>
    %cst_215 = arith.constant dense<0xFF800000> : vector<16xf32>
    %375 = vector.multi_reduction <maximumf>, %374, %cst_215 [1] : vector<16x128xf32> to vector<16xf32>
    %376 = vector.shape_cast %375 : vector<16xf32> to vector<16x1xf32>
    %377 = vector.broadcast %376 : vector<16x1xf32> to vector<16x128xf32>
    %378 = arith.subf %374, %377 : vector<16x128xf32>
    %379 = math.exp %378 : vector<16x128xf32>
    %cst_216 = arith.constant dense<0.000000e+00> : vector<16xf32>
    %380 = vector.multi_reduction <add>, %379, %cst_216 [1] : vector<16x128xf32> to vector<16xf32>
    %381 = vector.shape_cast %380 : vector<16xf32> to vector<16x1xf32>
    %382 = tpu.reciprocal %381 : vector<16x1xf32> -> vector<16x1xf32>
    %383 = vector.broadcast %382 : vector<16x1xf32> to vector<16x128xf32>
    %384 = arith.mulf %379, %383 : vector<16x128xf32>
    %c0_217 = arith.constant 0 : index
    %c0_218 = arith.constant 0 : index
    %385 = vector.load %arg33[%c0_217, %c0_218] : memref<16x128xf32, #tpu.memory_space<vmem>>, vector<16x128xf32>
    tpu.vector_store %arg33[%c0_217, %c0_218], %384 {strides = array<i32>} : memref<16x128xf32, #tpu.memory_space<vmem>>, vector<16x128xf32>,
    return
  }
}

</mosaic_0001>

<llo_original>
// kernel: _forward_impl.1
$region0: #{_forward_impl.1}
  #allocation0 [shape = 'u32[]', space=smem, size = 0x4, offset = 0x4, fixed_abs, tag = 'smem constant byte address 0x4 - core index']
  #allocation1 [shape = 'u32[72,128]{1,0:T(1,128)}', space=vmem, size = 0x9000, scoped, tag = 'internal scratch']
  %s0 = inlined_call_operand.smem [shape: u32[34], index: -1, kind: input, shape index: {}]
  %s1 = sld [smem:[%s0]]
  %s2 = scalar_lea.smem %s0, 1
  %s3 = sld [smem:[%s2]]
  %s4 = scalar_lea.smem %s0, 2
  %s5 = sld [smem:[%s4]]
  %s6 = scalar_lea.smem %s0, 3
  %s7 = sld [smem:[%s6]]
  %s8 = scalar_lea.smem %s0, 4
  %s9 = sld [smem:[%s8]]
  %s10 = scalar_lea.smem %s0, 5
  %s11 = sld [smem:[%s10]]
  %s12 = scalar_lea.smem %s0, 6
  %s13 = sld [smem:[%s12]]
  %s14 = scalar_lea.smem %s0, 7
  %s15 = sld [smem:[%s14]]
  %s16 = scalar_lea.smem %s0, 8
  %s17 = sld [smem:[%s16]]
  %s18 = scalar_lea.smem %s0, 9
  %s19 = sld [smem:[%s18]]
  %s20 = scalar_lea.smem %s0, 10
  %s21 = sld [smem:[%s20]]
  %s22 = scalar_lea.smem %s0, 11
  %s23 = sld [smem:[%s22]]
  %s24 = scalar_lea.smem %s0, 12
  %s25 = sld [smem:[%s24]]
  %s26 = scalar_lea.smem %s0, 13
  %s27 = sld [smem:[%s26]]
  %s28 = scalar_lea.smem %s0, 14
  %s29 = sld [smem:[%s28]]
  %s30 = scalar_lea.smem %s0, 15
  %s31 = sld [smem:[%s30]]
  %s32 = scalar_lea.smem %s0, 16
  %s33 = sld [smem:[%s32]]
  %s34 = scalar_lea.smem %s0, 17
  %s35 = sld [smem:[%s34]]
  %s36 = scalar_lea.smem %s0, 18
  %s37 = sld [smem:[%s36]]
  %s38 = scalar_lea.smem %s0, 19
  %s39 = sld [smem:[%s38]]
  %s40 = scalar_lea.smem %s0, 20
  %s41 = sld [smem:[%s40]]
  %s42 = scalar_lea.smem %s0, 21
  %s43 = sld [smem:[%s42]]
  %s44 = scalar_lea.smem %s0, 22
  %s45 = sld [smem:[%s44]]
  %s46 = scalar_lea.smem %s0, 23
  %s47 = sld [smem:[%s46]]
  %s48 = scalar_lea.smem %s0, 24
  %s49 = sld [smem:[%s48]]
  %s50 = scalar_lea.smem %s0, 25
  %s51 = sld [smem:[%s50]]
  %s52 = scalar_lea.smem %s0, 26
  %s53 = sld [smem:[%s52]]
  %s54 = scalar_lea.smem %s0, 27
  %s55 = sld [smem:[%s54]]
  %s56 = scalar_lea.smem %s0, 28
  %s57 = sld [smem:[%s56]]
  %s58 = scalar_lea.smem %s0, 29
  %s59 = sld [smem:[%s58]]
  %s60 = scalar_lea.smem %s0, 30
  %s61 = sld [smem:[%s60]]
  %s62 = scalar_lea.smem %s0, 31
  %s63 = sld [smem:[%s62]]
  %s64 = scalar_lea.smem %s0, 32
  %s65 = sld [smem:[%s64]]
  %s66 = scalar_lea.smem %s0, 33
  %s67 = sld [smem:[%s66]]
  %s68 = sld [smem:[#allocation0]]
  $region142: #{_forward_impl.1} parent=0
    _
  %s70 = ssub.s32 1, %s68
  %s71 = scalar_select 0, %s70, %s68
  // Predicated region
  $region2: #{_forward_impl.1} parent=0 // pred_check
    _
  $region3: #{_forward_impl.1} parent=0 // pred_check_branch
    %73 = sbr.rel (0) target = $region5
  $region4: #{_forward_impl.1} parent=0 // pred_region
    _
  $region5: #{_forward_impl.1} parent=0 // pred_fallthru
    _
  // Predicated region
  $region6: #{_forward_impl.1} parent=0 // pred_check
    _
  $region7: #{_forward_impl.1} parent=0 // pred_check_branch
    %75 = sbr.rel (0) target = $region9
  $region8: #{_forward_impl.1} parent=0 // pred_region
    _
  $region9: #{_forward_impl.1} parent=0 // pred_fallthru
    _
  // Predicated region
  $region10: #{_forward_impl.1} parent=0 // pred_check
    _
  $region11: #{_forward_impl.1} parent=0 // pred_check_branch
    %77 = sbr.rel (0) target = $region13
  $region12: #{_forward_impl.1} parent=0 // pred_region
    _
  $region13: #{_forward_impl.1} parent=0 // pred_fallthru
    _
  // Predicated region
  $region14: #{_forward_impl.1} parent=0 // pred_check
    _
  $region15: #{_forward_impl.1} parent=0 // pred_check_branch
    %79 = sbr.rel (0) target = $region17
  $region16: #{_forward_impl.1} parent=0 // pred_region
    _
  $region17: #{_forward_impl.1} parent=0 // pred_fallthru
    _
  // Predicated region
  $region18: #{_forward_impl.1} parent=0 // pred_check
    _
  $region19: #{_forward_impl.1} parent=0 // pred_check_branch
    %81 = sbr.rel (0) target = $region21
  $region20: #{_forward_impl.1} parent=0 // pred_region
    _
  $region21: #{_forward_impl.1} parent=0 // pred_fallthru
    _
  // Predicated region
  $region22: #{_forward_impl.1} parent=0 // pred_check
    _
  $region23: #{_forward_impl.1} parent=0 // pred_check_branch
    %83 = sbr.rel (0) target = $region25
  $region24: #{_forward_impl.1} parent=0 // pred_region
    _
  $region25: #{_forward_impl.1} parent=0 // pred_fallthru
    _
  // Predicated region
  $region26: #{_forward_impl.1} parent=0 // pred_check
    _
  $region27: #{_forward_impl.1} parent=0 // pred_check_branch
    %85 = sbr.rel (0) target = $region29
  $region28: #{_forward_impl.1} parent=0 // pred_region
    _
  $region29: #{_forward_impl.1} parent=0 // pred_fallthru
    _
  // Predicated region
  $region30: #{_forward_impl.1} parent=0 // pred_check
    _
  $region31: #{_forward_impl.1} parent=0 // pred_check_branch
    %87 = sbr.rel (0) target = $region33
  $region32: #{_forward_impl.1} parent=0 // pred_region
    _
  $region33: #{_forward_impl.1} parent=0 // pred_fallthru
    _
  // Predicated region
  $region34: #{_forward_impl.1} parent=0 // pred_check
    _
  $region35: #{_forward_impl.1} parent=0 // pred_check_branch
    %89 = sbr.rel (0) target = $region37
  $region36: #{_forward_impl.1} parent=0 // pred_region
    _
  $region37: #{_forward_impl.1} parent=0 // pred_fallthru
    _
  // Predicated region
  $region38: #{_forward_impl.1} parent=0 // pred_check
    _
  $region39: #{_forward_impl.1} parent=0 // pred_check_branch
    %91 = sbr.rel (0) target = $region41
  $region40: #{_forward_impl.1} parent=0 // pred_region
    _
  $region41: #{_forward_impl.1} parent=0 // pred_fallthru
    _
  // Predicated region
  $region42: #{_forward_impl.1} parent=0 // pred_check
    _
  $region43: #{_forward_impl.1} parent=0 // pred_check_branch
    %93 = sbr.rel (0) target = $region45
  $region44: #{_forward_impl.1} parent=0 // pred_region
    _
  $region45: #{_forward_impl.1} parent=0 // pred_fallthru
    _
  // Predicated region
  $region46: #{_forward_impl.1} parent=0 // pred_check
    _
  $region47: #{_forward_impl.1} parent=0 // pred_check_branch
    %95 = sbr.rel (0) target = $region49
  $region48: #{_forward_impl.1} parent=0 // pred_region
    _
  $region49: #{_forward_impl.1} parent=0 // pred_fallthru
    _
  // Predicated region
  $region50: #{_forward_impl.1} parent=0 // pred_check
    _
  $region51: #{_forward_impl.1} parent=0 // pred_check_branch
    %97 = sbr.rel (0) target = $region53
  $region52: #{_forward_impl.1} parent=0 // pred_region
    _
  $region53: #{_forward_impl.1} parent=0 // pred_fallthru
    _
  // Predicated region
  $region54: #{_forward_impl.1} parent=0 // pred_check
    _
  $region55: #{_forward_impl.1} parent=0 // pred_check_branch
    %99 = sbr.rel (0) target = $region57
  $region56: #{_forward_impl.1} parent=0 // pred_region
    _
  $region57: #{_forward_impl.1} parent=0 // pred_fallthru
    _
  // Predicated region
  $region58: #{_forward_impl.1} parent=0 // pred_check
    _
  $region59: #{_forward_impl.1} parent=0 // pred_check_branch
    %101 = sbr.rel (0) target = $region61
  $region60: #{_forward_impl.1} parent=0 // pred_region
    _
  $region61: #{_forward_impl.1} parent=0 // pred_fallthru
    _
  // Predicated region
  $region62: #{_forward_impl.1} parent=0 // pred_check
    _
  $region63: #{_forward_impl.1} parent=0 // pred_check_branch
    %103 = sbr.rel (0) target = $region65
  $region64: #{_forward_impl.1} parent=0 // pred_region
    _
  $region65: #{_forward_impl.1} parent=0 // pred_fallthru
    _
  // Predicated region
  $region66: #{_forward_impl.1} parent=0 // pred_check
    _
  $region67: #{_forward_impl.1} parent=0 // pred_check_branch
    %105 = sbr.rel (0) target = $region69
  $region68: #{_forward_impl.1} parent=0 // pred_region
    _
  $region69: #{_forward_impl.1} parent=0 // pred_fallthru
    _
  // Predicated region
  $region70: #{_forward_impl.1} parent=0 // pred_check
    _
  $region71: #{_forward_impl.1} parent=0 // pred_check_branch
    %107 = sbr.rel (0) target = $region73
  $region72: #{_forward_impl.1} parent=0 // pred_region
    _
  $region73: #{_forward_impl.1} parent=0 // pred_fallthru
    _
  // Predicated region
  $region74: #{_forward_impl.1} parent=0 // pred_check
    _
  $region75: #{_forward_impl.1} parent=0 // pred_check_branch
    %109 = sbr.rel (0) target = $region77
  $region76: #{_forward_impl.1} parent=0 // pred_region
    _
  $region77: #{_forward_impl.1} parent=0 // pred_fallthru
    _
  // Predicated region
  $region78: #{_forward_impl.1} parent=0 // pred_check
    _
  $region79: #{_forward_impl.1} parent=0 // pred_check_branch
    %111 = sbr.rel (0) target = $region81
  $region80: #{_forward_impl.1} parent=0 // pred_region
    _
  $region81: #{_forward_impl.1} parent=0 // pred_fallthru
    _
  // Predicated region
  $region82: #{_forward_impl.1} parent=0 // pred_check
    _
  $region83: #{_forward_impl.1} parent=0 // pred_check_branch
    %113 = sbr.rel (0) target = $region85
  $region84: #{_forward_impl.1} parent=0 // pred_region
    _
  $region85: #{_forward_impl.1} parent=0 // pred_fallthru
    _
  // Predicated region
  $region86: #{_forward_impl.1} parent=0 // pred_check
    _
  $region87: #{_forward_impl.1} parent=0 // pred_check_branch
    %115 = sbr.rel (0) target = $region89
  $region88: #{_forward_impl.1} parent=0 // pred_region
    _
  $region89: #{_forward_impl.1} parent=0 // pred_fallthru
    _
  // Predicated region
  $region90: #{_forward_impl.1} parent=0 // pred_check
    _
  $region91: #{_forward_impl.1} parent=0 // pred_check_branch
    %117 = sbr.rel (0) target = $region93
  $region92: #{_forward_impl.1} parent=0 // pred_region
    _
  $region93: #{_forward_impl.1} parent=0 // pred_fallthru
    _
  // Predicated region
  $region94: #{_forward_impl.1} parent=0 // pred_check
    _
  $region95: #{_forward_impl.1} parent=0 // pred_check_branch
    %119 = sbr.rel (0) target = $region97
  $region96: #{_forward_impl.1} parent=0 // pred_region
    _
  $region97: #{_forward_impl.1} parent=0 // pred_fallthru
    _
  // Predicated region
  $region98: #{_forward_impl.1} parent=0 // pred_check
    _
  $region99: #{_forward_impl.1} parent=0 // pred_check_branch
    %121 = sbr.rel (0) target = $region101
  $region100: #{_forward_impl.1} parent=0 // pred_region
    _
  $region101: #{_forward_impl.1} parent=0 // pred_fallthru
    _
  // Predicated region
  $region102: #{_forward_impl.1} parent=0 // pred_check
    _
  $region103: #{_forward_impl.1} parent=0 // pred_check_branch
    %123 = sbr.rel (0) target = $region105
  $region104: #{_forward_impl.1} parent=0 // pred_region
    _
  $region105: #{_forward_impl.1} parent=0 // pred_fallthru
    _
  // Predicated region
  $region106: #{_forward_impl.1} parent=0 // pred_check
    _
  $region107: #{_forward_impl.1} parent=0 // pred_check_branch
    %125 = sbr.rel (0) target = $region109
  $region108: #{_forward_impl.1} parent=0 // pred_region
    _
  $region109: #{_forward_impl.1} parent=0 // pred_fallthru
    _
  // Predicated region
  $region110: #{_forward_impl.1} parent=0 // pred_check
    _
  $region111: #{_forward_impl.1} parent=0 // pred_check_branch
    %127 = sbr.rel (0) target = $region113
  $region112: #{_forward_impl.1} parent=0 // pred_region
    _
  $region113: #{_forward_impl.1} parent=0 // pred_fallthru
    _
  // Predicated region
  $region114: #{_forward_impl.1} parent=0 // pred_check
    _
  $region115: #{_forward_impl.1} parent=0 // pred_check_branch
    %129 = sbr.rel (0) target = $region117
  $region116: #{_forward_impl.1} parent=0 // pred_region
    _
  $region117: #{_forward_impl.1} parent=0 // pred_fallthru
    _
  // Predicated region
  $region118: #{_forward_impl.1} parent=0 // pred_check
    _
  $region119: #{_forward_impl.1} parent=0 // pred_check_branch
    %131 = sbr.rel (0) target = $region121
  $region120: #{_forward_impl.1} parent=0 // pred_region
    _
  $region121: #{_forward_impl.1} parent=0 // pred_fallthru
    _
  // Predicated region
  $region122: #{_forward_impl.1} parent=0 // pred_check
    _
  $region123: #{_forward_impl.1} parent=0 // pred_check_branch
    %133 = sbr.rel (0) target = $region125
  $region124: #{_forward_impl.1} parent=0 // pred_region
    _
  $region125: #{_forward_impl.1} parent=0 // pred_fallthru
    _
  // Predicated region
  $region126: #{_forward_impl.1} parent=0 // pred_check
    _
  $region127: #{_forward_impl.1} parent=0 // pred_check_branch
    %135 = sbr.rel (0) target = $region129
  $region128: #{_forward_impl.1} parent=0 // pred_region
    _
  $region129: #{_forward_impl.1} parent=0 // pred_fallthru
    _
  // Predicated region
  $region130: #{_forward_impl.1} parent=0 // pred_check
    _
  $region131: #{_forward_impl.1} parent=0 // pred_check_branch
    %137 = sbr.rel (0) target = $region133
  $region132: #{_forward_impl.1} parent=0 // pred_region
    _
  $region133: #{_forward_impl.1} parent=0 // pred_fallthru
    _
  %v138 = vld [vmem:[%s1] sm:$0xff]
  %v139 = vld [vmem:[%s1 + $0x8] sm:$0xff]
  %v140 = vlaneseq
  %v141 = vand.u32 %v140, 127
  %142 = vset.pattern.permute.xlu0 0
  %143 = vperm.xlu0 %142, %v138
  %v144 = vpop.permute.xlu0 %143
  %145 = vset.pattern.permute.xlu0 0
  %146 = vperm.xlu0 %145, %v139
  %v147 = vpop.permute.xlu0 %146
  %vm148 = vcmp.eq.s32.totalorder %v141, %v144
  %vm149 = vcmp.eq.s32.totalorder %v141, %v147
  %v150 = vsel %vm148, 1, 0
  %v151 = vsel %vm149, 1, 0
  %v152 = vcvt.s32.f32 %v150
  %v153 = vcvt.s32.f32 %v151
  %v154 = vld [vmem:[%s5] sm:$0xff]
  %v155 = vld [vmem:[%s5 + $0x8] sm:$0xff]
  %v156 = vld [vmem:[%s5 + $0x10] sm:$0xff]
  %v157 = vld [vmem:[%s5 + $0x18] sm:$0xff]
  %v158 = vld [vmem:[%s5 + $0x20] sm:$0xff]
  %v159 = vld [vmem:[%s5 + $0x28] sm:$0xff]
  %v160 = vld [vmem:[%s5 + $0x30] sm:$0xff]
  %v161 = vld [vmem:[%s5 + $0x38] sm:$0xff]
  %v162 = vld [vmem:[%s5 + $0x40] sm:$0xff]
  %v163 = vld [vmem:[%s7] sm:$0xff]
  %v164 = vld [vmem:[%s7 + $0x8] sm:$0xff]
  %vm165 = vcmask 588800
  %v167 = vsel %vm165, %v152, 0
  %v170 = vsel %vm165, %v153, 0
  %172 = vmatpush.msra.mxu0 0.0
  %173 = vmatpush.msra.mxu0 0.0
  %174 = vmatpush.msra.mxu0 0.0
  %175 = vmatpush.msra.mxu0 0.0
  %176 = vmatpush.msra.mxu0 0.0
  %177 = vmatpush.msra.mxu0 0.0
  %178 = vmatpush.msra.mxu0 0.0
  %179 = vmatpush.msra.mxu0 %v162
  %180 = vmatpush.msra.mxu0 %v161
  %181 = vmatpush.msra.mxu0 %v160
  %182 = vmatpush.msra.mxu0 %v159
  %183 = vmatpush.msra.mxu0 %v158
  %184 = vmatpush.msra.mxu0 %v157
  %185 = vmatpush.msra.mxu0 %v156
  %186 = vmatpush.msra.mxu0 %v155
  %187 = vmatpush.msra.mxu0 %v154
  %188 = vmatmul.f32.gmra.mxu0 %v167
  %v189 = vpop.f32.mrf.mxu0
  %v190 = vadd.f32 %v163, %v189
  %191 = vmatmul.f32.gmra.mxu0 %v170
  %v192 = vpop.f32.mrf.mxu0
  %v193 = vadd.f32 %v164, %v192
  %194 = vdwg.mxu0
  %v195 = vld [vmem:[%s3] sm:$0xff]
  %v196 = vld [vmem:[%s3 + $0x8] sm:$0xff]
  %v197 = vld [vmem:[%s9] sm:$0xff]
  %v198 = vld [vmem:[%s9 + $0x8] sm:$0xff]
  %v199 = vld [vmem:[%s9 + $0x10] sm:$0xff]
  %v200 = vld [vmem:[%s9 + $0x18] sm:$0xff]
  %v201 = vld [vmem:[%s9 + $0x20] sm:$0xff]
  %v202 = vld [vmem:[%s9 + $0x28] sm:$0xff]
  %v203 = vld [vmem:[%s9 + $0x30] sm:$0xff]
  %v204 = vld [vmem:[%s9 + $0x38] sm:$0xff]
  %v205 = vld [vmem:[%s23] sm:$0xff]
  %v206 = vld [vmem:[%s23 + $0x8] sm:$0xff]
  %v207 = vld [vmem:[%s23 + $0x10] sm:$0xff]
  %v208 = vld [vmem:[%s23 + $0x18] sm:$0xff]
  %v209 = vld [vmem:[%s23 + $0x20] sm:$0xff]
  %v210 = vld [vmem:[%s23 + $0x28] sm:$0xff]
  %v211 = vld [vmem:[%s23 + $0x30] sm:$0xff]
  %v212 = vld [vmem:[%s23 + $0x38] sm:$0xff]
  %v213 = vld [vmem:[%s25] sm:$0xff]
  %v214 = vld [vmem:[%s27] sm:$0xff]
  %v215 = vld [vmem:[%s27 + $0x8] sm:$0xff]
  %v216 = vld [vmem:[%s27 + $0x10] sm:$0xff]
  %v217 = vld [vmem:[%s27 + $0x18] sm:$0xff]
  %v218 = vld [vmem:[%s27 + $0x20] sm:$0xff]
  %v219 = vld [vmem:[%s27 + $0x28] sm:$0xff]
  %v220 = vld [vmem:[%s27 + $0x30] sm:$0xff]
  %v221 = vld [vmem:[%s27 + $0x38] sm:$0xff]
  %v222 = vld [vmem:[%s29] sm:$0xff]
  %v223 = vld [vmem:[%s29 + $0x8] sm:$0xff]
  %v224 = vld [vmem:[%s11] sm:$0xff]
  %v225 = vld [vmem:[%s11 + $0x8] sm:$0xff]
  %v226 = vld [vmem:[%s11 + $0x10] sm:$0xff]
  %v227 = vld [vmem:[%s11 + $0x18] sm:$0xff]
  %v228 = vld [vmem:[%s11 + $0x20] sm:$0xff]
  %v229 = vld [vmem:[%s11 + $0x28] sm:$0xff]
  %v230 = vld [vmem:[%s11 + $0x30] sm:$0xff]
  %v231 = vld [vmem:[%s11 + $0x38] sm:$0xff]
  %v232 = vld [vmem:[%s13] sm:$0xff]
  %v233 = vld [vmem:[%s13 + $0x8] sm:$0xff]
  %v234 = vld [vmem:[%s13 + $0x10] sm:$0xff]
  %v235 = vld [vmem:[%s13 + $0x18] sm:$0xff]
  %v236 = vld [vmem:[%s13 + $0x20] sm:$0xff]
  %v237 = vld [vmem:[%s13 + $0x28] sm:$0xff]
  %v238 = vld [vmem:[%s13 + $0x30] sm:$0xff]
  %v239 = vld [vmem:[%s13 + $0x38] sm:$0xff]
  %v240 = vld [vmem:[%s13 + $0x40] sm:$0xff]
  %v241 = vld [vmem:[%s13 + $0x48] sm:$0xff]
  %v242 = vld [vmem:[%s13 + $0x50] sm:$0xff]
  %v243 = vld [vmem:[%s13 + $0x58] sm:$0xff]
  %v244 = vld [vmem:[%s15] sm:$0xff]
  %v245 = vld [vmem:[%s15 + $0x8] sm:$0xff]
  %v246 = vld [vmem:[%s15 + $0x10] sm:$0xff]
  %v247 = vld [vmem:[%s15 + $0x18] sm:$0xff]
  %v248 = vld [vmem:[%s15 + $0x20] sm:$0xff]
  %v249 = vld [vmem:[%s15 + $0x28] sm:$0xff]
  %v250 = vld [vmem:[%s15 + $0x30] sm:$0xff]
  %v251 = vld [vmem:[%s15 + $0x38] sm:$0xff]
  %v252 = vld [vmem:[%s17] sm:$0xff]
  %v253 = vld [vmem:[%s17 + $0x8] sm:$0xff]
  %v254 = vld [vmem:[%s17 + $0x10] sm:$0xff]
  %v255 = vld [vmem:[%s17 + $0x18] sm:$0xff]
  %v256 = vld [vmem:[%s19] sm:$0xff]
  %v257 = vld [vmem:[%s19 + $0x8] sm:$0xff]
  %v258 = vld [vmem:[%s19 + $0x10] sm:$0xff]
  %v259 = vld [vmem:[%s19 + $0x18] sm:$0xff]
  %v260 = vld [vmem:[%s19 + $0x20] sm:$0xff]
  %v261 = vld [vmem:[%s19 + $0x28] sm:$0xff]
  %v262 = vld [vmem:[%s19 + $0x30] sm:$0xff]
  %v263 = vld [vmem:[%s19 + $0x38] sm:$0xff]
  %v264 = vld [vmem:[%s21] sm:$0xff]
  %v265 = vld [vmem:[%s21 + $0x8] sm:$0xff]
  %v266 = vld [vmem:[%s21 + $0x10] sm:$0xff]
  %v267 = vld [vmem:[%s21 + $0x18] sm:$0xff]
  %v268 = vld [vmem:[%s21 + $0x20] sm:$0xff]
  %v269 = vld [vmem:[%s21 + $0x28] sm:$0xff]
  %v270 = vld [vmem:[%s21 + $0x30] sm:$0xff]
  %v271 = vld [vmem:[%s21 + $0x38] sm:$0xff]
  %v272 = vld [vmem:[%s51] sm:$0x1]
  %v273 = vld [vmem:[%s53] sm:$0x1]
  %v274 = vld [vmem:[%s31] sm:$0xff]
  %v275 = vld [vmem:[%s31 + $0x8] sm:$0xff]
  %v276 = vld [vmem:[%s31 + $0x10] sm:$0xff]
  %v277 = vld [vmem:[%s31 + $0x18] sm:$0xff]
  %v278 = vld [vmem:[%s33] sm:$0x1]
  %v280 = vperm.slane %v278, 0
  %vm282 = vcmask 261120
  %v284 = vsel %vm282, %v190, 0
  %v287 = vsel %vm282, %v193, 0
  %289 = vmatpush.msra.mxu0 0.0
  %290 = vmatpush.msra.mxu0 0.0
  %291 = vmatpush.msra.mxu0 0.0
  %292 = vmatpush.msra.mxu0 0.0
  %293 = vmatpush.msra.mxu0 0.0
  %294 = vmatpush.msra.mxu0 0.0
  %295 = vmatpush.msra.mxu0 0.0
  %296 = vmatpush.msra.mxu0 0.0
  %297 = vmatpush.msra.mxu0 0.0
  %298 = vmatpush.msra.mxu0 0.0
  %299 = vmatpush.msra.mxu0 0.0
  %300 = vmatpush.msra.mxu0 0.0
  %301 = vmatpush.msra.mxu0 %v277
  %302 = vmatpush.msra.mxu0 %v276
  %303 = vmatpush.msra.mxu0 %v275
  %304 = vmatpush.msra.mxu0 %v274
  %305 = vmatmul.f32.gmra.mxu0 %v284
  %v306 = vpop.f32.mrf.mxu0
  %v307 = vadd.f32 %v280, %v306
  %308 = vmatmul.f32.gmra.mxu0 %v287
  %v309 = vpop.f32.mrf.mxu0
  %v310 = vadd.f32 %v280, %v309
  %311 = vdwg.mxu0
  %vm312 = vcmask 130048
  %v314 = vsel %vm312, %v197, 0
  %v317 = vsel %vm312, %v198, 0
  %v320 = vsel %vm312, %v199, 0
  %v323 = vsel %vm312, %v200, 0
  %v326 = vsel %vm312, %v201, 0
  %v329 = vsel %vm312, %v202, 0
  %v332 = vsel %vm312, %v203, 0
  %v335 = vsel %vm312, %v204, 0
  %337 = vmatpush.msra.mxu0 0.0
  %338 = vmatpush.msra.mxu0 0.0
  %339 = vmatpush.msra.mxu0 0.0
  %340 = vmatpush.msra.mxu0 0.0
  %341 = vmatpush.msra.mxu0 0.0
  %342 = vmatpush.msra.mxu0 0.0
  %343 = vmatpush.msra.mxu0 0.0
  %344 = vmatpush.msra.mxu0 0.0
  %345 = vmatpush.msra.mxu0 0.0
  %346 = vmatpush.msra.mxu0 0.0
  %347 = vmatpush.msra.mxu0 0.0
  %348 = vmatpush.msra.mxu0 0.0
  %349 = vmatpush.msra.mxu0 0.0
  %350 = vmatpush.msra.mxu0 0.0
  %351 = vmatpush.msra.mxu0 %v310
  %352 = vmatpush.msra.mxu0 %v307
  %353 = vmatmul.f32.gmra.mxu0 %v314
  %v354 = vpop.f32.mrf.mxu0
  %v355 = vadd.f32 0.0, %v354
  %356 = vmatmul.f32.gmra.mxu0 %v317
  %v357 = vpop.f32.mrf.mxu0
  %v358 = vadd.f32 0.0, %v357
  %359 = vmatmul.f32.gmra.mxu0 %v320
  %v360 = vpop.f32.mrf.mxu0
  %v361 = vadd.f32 0.0, %v360
  %362 = vmatmul.f32.gmra.mxu0 %v323
  %v363 = vpop.f32.mrf.mxu0
  %v364 = vadd.f32 0.0, %v363
  %365 = vmatmul.f32.gmra.mxu0 %v326
  %v366 = vpop.f32.mrf.mxu0
  %v367 = vadd.f32 0.0, %v366
  %368 = vmatmul.f32.gmra.mxu0 %v329
  %v369 = vpop.f32.mrf.mxu0
  %v370 = vadd.f32 0.0, %v369
  %371 = vmatmul.f32.gmra.mxu0 %v332
  %v372 = vpop.f32.mrf.mxu0
  %v373 = vadd.f32 0.0, %v372
  %374 = vmatmul.f32.gmra.mxu0 %v335
  %v375 = vpop.f32.mrf.mxu0
  %v376 = vadd.f32 0.0, %v375
  %377 = vdwg.mxu0
  %v378 = vmul.f32 %v355, %v224
  %v379 = vmul.f32 %v358, %v225
  %v380 = vmul.f32 %v361, %v226
  %v381 = vmul.f32 %v364, %v227
  %v382 = vmul.f32 %v367, %v228
  %v383 = vmul.f32 %v370, %v229
  %v384 = vmul.f32 %v373, %v230
  %v385 = vmul.f32 %v376, %v231
  %vm386 = vcmask 785408
  %v388 = vsel %vm386, %v378, 0
  %v391 = vsel %vm386, %v379, 0
  %v394 = vsel %vm386, %v380, 0
  %v397 = vsel %vm386, %v381, 0
  %v400 = vsel %vm386, %v382, 0
  %v403 = vsel %vm386, %v383, 0
  %v406 = vsel %vm386, %v384, 0
  %v409 = vsel %vm386, %v385, 0
  %411 = vmatpush.msra.mxu0 0.0
  %412 = vmatpush.msra.mxu0 0.0
  %413 = vmatpush.msra.mxu0 0.0
  %414 = vmatpush.msra.mxu0 0.0
  %415 = vmatpush.msra.mxu0 %v243
  %416 = vmatpush.msra.mxu0 %v242
  %417 = vmatpush.msra.mxu0 %v241
  %418 = vmatpush.msra.mxu0 %v240
  %419 = vmatpush.msra.mxu0 %v239
  %420 = vmatpush.msra.mxu0 %v238
  %421 = vmatpush.msra.mxu0 %v237
  %422 = vmatpush.msra.mxu0 %v236
  %423 = vmatpush.msra.mxu0 %v235
  %424 = vmatpush.msra.mxu0 %v234
  %425 = vmatpush.msra.mxu0 %v233
  %426 = vmatpush.msra.mxu0 %v232
  %427 = vmatmul.f32.gmra.mxu0 %v388
  %v428 = vpop.f32.mrf.mxu0
  %v429 = vadd.f32 0.0, %v428
  %430 = vmatmul.f32.gmra.mxu0 %v391
  %v431 = vpop.f32.mrf.mxu0
  %v432 = vadd.f32 0.0, %v431
  %433 = vmatmul.f32.gmra.mxu0 %v394
  %v434 = vpop.f32.mrf.mxu0
  %v435 = vadd.f32 0.0, %v434
  %436 = vmatmul.f32.gmra.mxu0 %v397
  %v437 = vpop.f32.mrf.mxu0
  %v438 = vadd.f32 0.0, %v437
  %439 = vmatmul.f32.gmra.mxu0 %v400
  %v440 = vpop.f32.mrf.mxu0
  %v441 = vadd.f32 0.0, %v440
  %442 = vmatmul.f32.gmra.mxu0 %v403
  %v443 = vpop.f32.mrf.mxu0
  %v444 = vadd.f32 0.0, %v443
  %445 = vmatmul.f32.gmra.mxu0 %v406
  %v446 = vpop.f32.mrf.mxu0
  %v447 = vadd.f32 0.0, %v446
  %448 = vmatmul.f32.gmra.mxu0 %v409
  %v449 = vpop.f32.mrf.mxu0
  %v450 = vadd.f32 0.0, %v449
  %451 = vdwg.mxu0
  %v452 = vld [vmem:[%s35] sm:$0xff]
  %v453 = vld [vmem:[%s35 + $0x8] sm:$0xff]
  %v454 = vld [vmem:[%s35 + $0x10] sm:$0xff]
  %v455 = vld [vmem:[%s35 + $0x18] sm:$0xff]
  %v456 = vld [vmem:[%s37] sm:$0x1]
  %465 = vrot.lane.b32.xlu0 %v429, 120
  %v466 = vpop.permute.xlu0 %465
  %467 = vrot.lane.b32.xlu0 %v432, 120
  %v468 = vpop.permute.xlu0 %467
  %469 = vrot.lane.b32.xlu0 %v435, 120
  %v470 = vpop.permute.xlu0 %469
  %471 = vrot.lane.b32.xlu0 %v438, 120
  %v472 = vpop.permute.xlu0 %471
  %473 = vrot.lane.b32.xlu0 %v441, 120
  %v474 = vpop.permute.xlu0 %473
  %475 = vrot.lane.b32.xlu0 %v444, 120
  %v476 = vpop.permute.xlu0 %475
  %477 = vrot.lane.b32.xlu0 %v447, 120
  %v478 = vpop.permute.xlu0 %477
  %479 = vrot.lane.b32.xlu0 %v450, 120
  %v480 = vpop.permute.xlu0 %479
  %vm481 = vcmask 64512
  %v482 = vsel %vm481, %v429, 0
  %v484 = vsel %vm481, %v432, 0
  %v486 = vsel %vm481, %v435, 0
  %v488 = vsel %vm481, %v438, 0
  %v490 = vsel %vm481, %v441, 0
  %v492 = vsel %vm481, %v444, 0
  %v494 = vsel %vm481, %v447, 0
  %v496 = vsel %vm481, %v450, 0
  %v498 = vsel %vm481, %v466, 0
  %v500 = vsel %vm481, %v468, 0
  %v502 = vsel %vm481, %v470, 0
  %v504 = vsel %vm481, %v472, 0
  %v506 = vsel %vm481, %v474, 0
  %v508 = vsel %vm481, %v476, 0
  %v510 = vsel %vm481, %v478, 0
  %v512 = vsel %vm481, %v480, 0
  %514 = vmatpush.xpose.msra.mxu0 0.0
  %515 = vmatpush.xpose.msra.mxu0 0.0
  %516 = vmatpush.xpose.msra.mxu0 0.0
  %517 = vmatpush.xpose.msra.mxu0 0.0
  %518 = vmatpush.xpose.msra.mxu0 0.0
  %519 = vmatpush.xpose.msra.mxu0 0.0
  %520 = vmatpush.xpose.msra.mxu0 0.0
  %521 = vmatpush.xpose.msra.mxu0 0.0
  %522 = vmatpush.xpose.msra.mxu0 %v512
  %523 = vmatpush.xpose.msra.mxu0 %v510
  %524 = vmatpush.xpose.msra.mxu0 %v508
  %525 = vmatpush.xpose.msra.mxu0 %v506
  %526 = vmatpush.xpose.msra.mxu0 %v504
  %527 = vmatpush.xpose.msra.mxu0 %v502
  %528 = vmatpush.xpose.msra.mxu0 %v500
  %529 = vmatpush.xpose.msra.mxu0 %v498
  %530 = vmatmul.f32.gmra.mxu0 %v482
  %v531 = vpop.f32.mrf.mxu0
  %v532 = vadd.f32 0.0, %v531
  %533 = vmatmul.f32.gmra.mxu0 %v484
  %v534 = vpop.f32.mrf.mxu0
  %v535 = vadd.f32 0.0, %v534
  %536 = vmatmul.f32.gmra.mxu0 %v486
  %v537 = vpop.f32.mrf.mxu0
  %v538 = vadd.f32 0.0, %v537
  %539 = vmatmul.f32.gmra.mxu0 %v488
  %v540 = vpop.f32.mrf.mxu0
  %v541 = vadd.f32 0.0, %v540
  %542 = vmatmul.f32.gmra.mxu0 %v490
  %v543 = vpop.f32.mrf.mxu0
  %v544 = vadd.f32 0.0, %v543
  %545 = vmatmul.f32.gmra.mxu0 %v492
  %v546 = vpop.f32.mrf.mxu0
  %v547 = vadd.f32 0.0, %v546
  %548 = vmatmul.f32.gmra.mxu0 %v494
  %v549 = vpop.f32.mrf.mxu0
  %v550 = vadd.f32 0.0, %v549
  %551 = vmatmul.f32.gmra.mxu0 %v496
  %v552 = vpop.f32.mrf.mxu0
  %v553 = vadd.f32 0.0, %v552
  %554 = vdwg.mxu0
  %v555 = vmul.f32 %v532, 0.35355338
  %v556 = vmul.f32 %v535, 0.35355338
  %v557 = vmul.f32 %v538, 0.35355338
  %v558 = vmul.f32 %v541, 0.35355338
  %v559 = vmul.f32 %v544, 0.35355338
  %v560 = vmul.f32 %v547, 0.35355338
  %v561 = vmul.f32 %v550, 0.35355338
  %v562 = vmul.f32 %v553, 0.35355338
  %v563 = vadd.f32 %v555, %v205
  %v564 = vadd.f32 %v556, %v206
  %v565 = vadd.f32 %v557, %v207
  %v566 = vadd.f32 %v558, %v208
  %v567 = vadd.f32 %v559, %v209
  %v568 = vadd.f32 %v560, %v210
  %v569 = vadd.f32 %v561, %v211
  %v570 = vadd.f32 %v562, %v212
  %vm571 = vcmask 523264
  %v572 = vsel %vm571, %v563, -inf
  %573 = vmax.xlane.f32.xlu0 %v572
  %v574 = vpop.xlane.xlu0 %573
  %v575 = vsel %vm571, %v564, -inf
  %576 = vmax.xlane.f32.xlu0 %v575
  %v577 = vpop.xlane.xlu0 %576
  %v578 = vsel %vm571, %v565, -inf
  %579 = vmax.xlane.f32.xlu0 %v578
  %v580 = vpop.xlane.xlu0 %579
  %v581 = vsel %vm571, %v566, -inf
  %582 = vmax.xlane.f32.xlu0 %v581
  %v583 = vpop.xlane.xlu0 %582
  %v584 = vsel %vm571, %v567, -inf
  %585 = vmax.xlane.f32.xlu0 %v584
  %v586 = vpop.xlane.xlu0 %585
  %v587 = vsel %vm571, %v568, -inf
  %588 = vmax.xlane.f32.xlu0 %v587
  %v589 = vpop.xlane.xlu0 %588
  %v590 = vsel %vm571, %v569, -inf
  %591 = vmax.xlane.f32.xlu0 %v590
  %v592 = vpop.xlane.xlu0 %591
  %v593 = vsel %vm571, %v570, -inf
  %594 = vmax.xlane.f32.xlu0 %v593
  %v595 = vpop.xlane.xlu0 %594
  %v596 = vsub.f32 %v563, %v574
  %v597 = vsub.f32 %v564, %v577
  %v598 = vsub.f32 %v565, %v580
  %v599 = vsub.f32 %v566, %v583
  %v600 = vsub.f32 %v567, %v586
  %v601 = vsub.f32 %v568, %v589
  %v602 = vsub.f32 %v569, %v592
  %v603 = vsub.f32 %v570, %v595
  %v604 = vmul.f32 %v596, 1.442695
  %v605 = vpow.pop %v604
  %v606 = vmul.f32 %v597, 1.442695
  %v607 = vpow.pop %v606
  %v608 = vmul.f32 %v598, 1.442695
  %v609 = vpow.pop %v608
  %v610 = vmul.f32 %v599, 1.442695
  %v611 = vpow.pop %v610
  %v612 = vmul.f32 %v600, 1.442695
  %v613 = vpow.pop %v612
  %v614 = vmul.f32 %v601, 1.442695
  %v615 = vpow.pop %v614
  %v616 = vmul.f32 %v602, 1.442695
  %v617 = vpow.pop %v616
  %v618 = vmul.f32 %v603, 1.442695
  %v619 = vpow.pop %v618
  %v620 = vsel %vm571, %v605, 0.0
  %621 = vadd.xlane.f32.xlu0 %v620
  %v622 = vpop.xlane.xlu0 %621
  %v623 = vsel %vm571, %v607, 0.0
  %624 = vadd.xlane.f32.xlu0 %v623
  %v625 = vpop.xlane.xlu0 %624
  %v626 = vsel %vm571, %v609, 0.0
  %627 = vadd.xlane.f32.xlu0 %v626
  %v628 = vpop.xlane.xlu0 %627
  %v629 = vsel %vm571, %v611, 0.0
  %630 = vadd.xlane.f32.xlu0 %v629
  %v631 = vpop.xlane.xlu0 %630
  %v632 = vsel %vm571, %v613, 0.0
  %633 = vadd.xlane.f32.xlu0 %v632
  %v634 = vpop.xlane.xlu0 %633
  %v635 = vsel %vm571, %v615, 0.0
  %636 = vadd.xlane.f32.xlu0 %v635
  %v637 = vpop.xlane.xlu0 %636
  %v638 = vsel %vm571, %v617, 0.0
  %639 = vadd.xlane.f32.xlu0 %v638
  %v640 = vpop.xlane.xlu0 %639
  %v641 = vsel %vm571, %v619, 0.0
  %642 = vadd.xlane.f32.xlu0 %v641
  %v643 = vpop.xlane.xlu0 %642
  %v644 = vrcp.pop %v622
  %v645 = vmul.f32 %v622, %v644
  %v646 = vsub.f32 1.0, %v645
  %v647 = vmul.f32 %v644, %v646
  %v648 = vadd.f32 %v644, %v647
  %vm649 = vweird.f32 %v622
  %vm650 = vweird.f32 %v644
  %vm651 = vmor %vm649, %vm650
  %v652 = vsel %vm651, %v644, %v648
  %v653 = vand.u32 2147483647, %v622
  %vm654 = vcmp.eq.f32.partialorder %v653, 8.507059e+37
  %v655 = vand.u32 %v622, 2147483648
  %v656 = vor.u32 1.1754944e-38, %v655
  %v657 = vsel %vm654, %v656, %v652
  %v658 = vrcp.pop %v625
  %v659 = vmul.f32 %v625, %v658
  %v660 = vsub.f32 1.0, %v659
  %v661 = vmul.f32 %v658, %v660
  %v662 = vadd.f32 %v658, %v661
  %vm663 = vweird.f32 %v625
  %vm664 = vweird.f32 %v658
  %vm665 = vmor %vm663, %vm664
  %v666 = vsel %vm665, %v658, %v662
  %v667 = vand.u32 2147483647, %v625
  %vm668 = vcmp.eq.f32.partialorder %v667, 8.507059e+37
  %v669 = vand.u32 %v625, 2147483648
  %v670 = vor.u32 1.1754944e-38, %v669
  %v671 = vsel %vm668, %v670, %v666
  %v672 = vrcp.pop %v628
  %v673 = vmul.f32 %v628, %v672
  %v674 = vsub.f32 1.0, %v673
  %v675 = vmul.f32 %v672, %v674
  %v676 = vadd.f32 %v672, %v675
  %vm677 = vweird.f32 %v628
  %vm678 = vweird.f32 %v672
  %vm679 = vmor %vm677, %vm678
  %v680 = vsel %vm679, %v672, %v676
  %v681 = vand.u32 2147483647, %v628
  %vm682 = vcmp.eq.f32.partialorder %v681, 8.507059e+37
  %v683 = vand.u32 %v628, 2147483648
  %v684 = vor.u32 1.1754944e-38, %v683
  %v685 = vsel %vm682, %v684, %v680
  %v686 = vrcp.pop %v631
  %v687 = vmul.f32 %v631, %v686
  %v688 = vsub.f32 1.0, %v687
  %v689 = vmul.f32 %v686, %v688
  %v690 = vadd.f32 %v686, %v689
  %vm691 = vweird.f32 %v631
  %vm692 = vweird.f32 %v686
  %vm693 = vmor %vm691, %vm692
  %v694 = vsel %vm693, %v686, %v690
  %v695 = vand.u32 2147483647, %v631
  %vm696 = vcmp.eq.f32.partialorder %v695, 8.507059e+37
  %v697 = vand.u32 %v631, 2147483648
  %v698 = vor.u32 1.1754944e-38, %v697
  %v699 = vsel %vm696, %v698, %v694
  %v700 = vrcp.pop %v634
  %v701 = vmul.f32 %v634, %v700
  %v702 = vsub.f32 1.0, %v701
  %v703 = vmul.f32 %v700, %v702
  %v704 = vadd.f32 %v700, %v703
  %vm705 = vweird.f32 %v634
  %vm706 = vweird.f32 %v700
  %vm707 = vmor %vm705, %vm706
  %v708 = vsel %vm707, %v700, %v704
  %v709 = vand.u32 2147483647, %v634
  %vm710 = vcmp.eq.f32.partialorder %v709, 8.507059e+37
  %v711 = vand.u32 %v634, 2147483648
  %v712 = vor.u32 1.1754944e-38, %v711
  %v713 = vsel %vm710, %v712, %v708
  %v714 = vrcp.pop %v637
  %v715 = vmul.f32 %v637, %v714
  %v716 = vsub.f32 1.0, %v715
  %v717 = vmul.f32 %v714, %v716
  %v718 = vadd.f32 %v714, %v717
  %vm719 = vweird.f32 %v637
  %vm720 = vweird.f32 %v714
  %vm721 = vmor %vm719, %vm720
  %v722 = vsel %vm721, %v714, %v718
  %v723 = vand.u32 2147483647, %v637
  %vm724 = vcmp.eq.f32.partialorder %v723, 8.507059e+37
  %v725 = vand.u32 %v637, 2147483648
  %v726 = vor.u32 1.1754944e-38, %v725
  %v727 = vsel %vm724, %v726, %v722
  %v728 = vrcp.pop %v640
  %v729 = vmul.f32 %v640, %v728
  %v730 = vsub.f32 1.0, %v729
  %v731 = vmul.f32 %v728, %v730
  %v732 = vadd.f32 %v728, %v731
  %vm733 = vweird.f32 %v640
  %vm734 = vweird.f32 %v728
  %vm735 = vmor %vm733, %vm734
  %v736 = vsel %vm735, %v728, %v732
  %v737 = vand.u32 2147483647, %v640
  %vm738 = vcmp.eq.f32.partialorder %v737, 8.507059e+37
  %v739 = vand.u32 %v640, 2147483648
  %v740 = vor.u32 1.1754944e-38, %v739
  %v741 = vsel %vm738, %v740, %v736
  %v742 = vrcp.pop %v643
  %v743 = vmul.f32 %v643, %v742
  %v744 = vsub.f32 1.0, %v743
  %v745 = vmul.f32 %v742, %v744
  %v746 = vadd.f32 %v742, %v745
  %vm747 = vweird.f32 %v643
  %vm748 = vweird.f32 %v742
  %vm749 = vmor %vm747, %vm748
  %v750 = vsel %vm749, %v742, %v746
  %v751 = vand.u32 2147483647, %v643
  %vm752 = vcmp.eq.f32.partialorder %v751, 8.507059e+37
  %v753 = vand.u32 %v643, 2147483648
  %v754 = vor.u32 1.1754944e-38, %v753
  %v755 = vsel %vm752, %v754, %v750
  %v756 = vmul.f32 %v605, %v657
  %v757 = vmul.f32 %v607, %v671
  %v758 = vmul.f32 %v609, %v685
  %v759 = vmul.f32 %v611, %v699
  %v760 = vmul.f32 %v613, %v713
  %v761 = vmul.f32 %v615, %v727
  %v762 = vmul.f32 %v617, %v741
  %v763 = vmul.f32 %v619, %v755
  %764 = vrot.lane.b32.xlu0 %v429, 112
  %v765 = vpop.permute.xlu0 %764
  %766 = vrot.lane.b32.xlu0 %v432, 112
  %v767 = vpop.permute.xlu0 %766
  %768 = vrot.lane.b32.xlu0 %v435, 112
  %v769 = vpop.permute.xlu0 %768
  %770 = vrot.lane.b32.xlu0 %v438, 112
  %v771 = vpop.permute.xlu0 %770
  %772 = vrot.lane.b32.xlu0 %v441, 112
  %v773 = vpop.permute.xlu0 %772
  %774 = vrot.lane.b32.xlu0 %v444, 112
  %v775 = vpop.permute.xlu0 %774
  %776 = vrot.lane.b32.xlu0 %v447, 112
  %v777 = vpop.permute.xlu0 %776
  %778 = vrot.lane.b32.xlu0 %v450, 112
  %v779 = vpop.permute.xlu0 %778
  %v789 = vsel %vm571, %v756, 0
  %v792 = vsel %vm571, %v757, 0
  %v795 = vsel %vm571, %v758, 0
  %v798 = vsel %vm571, %v759, 0
  %v801 = vsel %vm571, %v760, 0
  %v804 = vsel %vm571, %v761, 0
  %v807 = vsel %vm571, %v762, 0
  %v810 = vsel %vm571, %v763, 0
  %812 = vmatpush.msra.mxu0 0.0
  %813 = vmatpush.msra.mxu0 0.0
  %814 = vmatpush.msra.mxu0 0.0
  %815 = vmatpush.msra.mxu0 0.0
  %816 = vmatpush.msra.mxu0 0.0
  %817 = vmatpush.msra.mxu0 0.0
  %818 = vmatpush.msra.mxu0 0.0
  %819 = vmatpush.msra.mxu0 0.0
  %820 = vmatpush.msra.mxu0 %v779
  %821 = vmatpush.msra.mxu0 %v777
  %822 = vmatpush.msra.mxu0 %v775
  %823 = vmatpush.msra.mxu0 %v773
  %824 = vmatpush.msra.mxu0 %v771
  %825 = vmatpush.msra.mxu0 %v769
  %826 = vmatpush.msra.mxu0 %v767
  %827 = vmatpush.msra.mxu0 %v765
  %828 = vmatmul.f32.gmra.mxu0 %v789
  %v829 = vpop.f32.mrf.mxu0
  %v830 = vadd.f32 0.0, %v829
  %831 = vmatmul.f32.gmra.mxu0 %v792
  %v832 = vpop.f32.mrf.mxu0
  %v833 = vadd.f32 0.0, %v832
  %834 = vmatmul.f32.gmra.mxu0 %v795
  %v835 = vpop.f32.mrf.mxu0
  %v836 = vadd.f32 0.0, %v835
  %837 = vmatmul.f32.gmra.mxu0 %v798
  %v838 = vpop.f32.mrf.mxu0
  %v839 = vadd.f32 0.0, %v838
  %840 = vmatmul.f32.gmra.mxu0 %v801
  %v841 = vpop.f32.mrf.mxu0
  %v842 = vadd.f32 0.0, %v841
  %843 = vmatmul.f32.gmra.mxu0 %v804
  %v844 = vpop.f32.mrf.mxu0
  %v845 = vadd.f32 0.0, %v844
  %846 = vmatmul.f32.gmra.mxu0 %v807
  %v847 = vpop.f32.mrf.mxu0
  %v848 = vadd.f32 0.0, %v847
  %849 = vmatmul.f32.gmra.mxu0 %v810
  %v850 = vpop.f32.mrf.mxu0
  %v851 = vadd.f32 0.0, %v850
  %852 = vdwg.mxu0
  %v854 = vsel %vm481, %v830, 0
  %v857 = vsel %vm481, %v833, 0
  %v860 = vsel %vm481, %v836, 0
  %v863 = vsel %vm481, %v839, 0
  %v866 = vsel %vm481, %v842, 0
  %v869 = vsel %vm481, %v845, 0
  %v872 = vsel %vm481, %v848, 0
  %v875 = vsel %vm481, %v851, 0
  %877 = vmatpush.msra.mxu0 0.0
  %878 = vmatpush.msra.mxu0 0.0
  %879 = vmatpush.msra.mxu0 0.0
  %880 = vmatpush.msra.mxu0 0.0
  %881 = vmatpush.msra.mxu0 0.0
  %882 = vmatpush.msra.mxu0 0.0
  %883 = vmatpush.msra.mxu0 0.0
  %884 = vmatpush.msra.mxu0 0.0
  %885 = vmatpush.msra.mxu0 0.0
  %886 = vmatpush.msra.mxu0 0.0
  %887 = vmatpush.msra.mxu0 0.0
  %888 = vmatpush.msra.mxu0 0.0
  %889 = vmatpush.msra.mxu0 0.0
  %890 = vmatpush.msra.mxu0 0.0
  %891 = vmatpush.msra.mxu0 0.0
  %892 = vmatpush.msra.mxu0 %v213
  %893 = vmatmul.f32.gmra.mxu0 %v854
  %v894 = vpop.f32.mrf.mxu0
  %v895 = vadd.f32 0.0, %v894
  %896 = vmatmul.f32.gmra.mxu0 %v857
  %v897 = vpop.f32.mrf.mxu0
  %v898 = vadd.f32 0.0, %v897
  %899 = vmatmul.f32.gmra.mxu0 %v860
  %v900 = vpop.f32.mrf.mxu0
  %v901 = vadd.f32 0.0, %v900
  %902 = vmatmul.f32.gmra.mxu0 %v863
  %v903 = vpop.f32.mrf.mxu0
  %v904 = vadd.f32 0.0, %v903
  %905 = vmatmul.f32.gmra.mxu0 %v866
  %v906 = vpop.f32.mrf.mxu0
  %v907 = vadd.f32 0.0, %v906
  %908 = vmatmul.f32.gmra.mxu0 %v869
  %v909 = vpop.f32.mrf.mxu0
  %v910 = vadd.f32 0.0, %v909
  %911 = vmatmul.f32.gmra.mxu0 %v872
  %v912 = vpop.f32.mrf.mxu0
  %v913 = vadd.f32 0.0, %v912
  %914 = vmatmul.f32.gmra.mxu0 %v875
  %v915 = vpop.f32.mrf.mxu0
  %v916 = vadd.f32 0.0, %v915
  %917 = vdwg.mxu0
  %v918 = vmul.f32 %v895, %v214
  %v919 = vmul.f32 %v898, %v215
  %v920 = vmul.f32 %v901, %v216
  %v921 = vmul.f32 %v904, %v217
  %v922 = vmul.f32 %v907, %v218
  %v923 = vmul.f32 %v910, %v219
  %v924 = vmul.f32 %v913, %v220
  %v925 = vmul.f32 %v916, %v221
  %v927 = vsel %vm282, %v918, 0
  %v930 = vsel %vm282, %v919, 0
  %v933 = vsel %vm282, %v920, 0
  %v936 = vsel %vm282, %v921, 0
  %v939 = vsel %vm282, %v922, 0
  %v942 = vsel %vm282, %v923, 0
  %v945 = vsel %vm282, %v924, 0
  %v948 = vsel %vm282, %v925, 0
  %950 = vmatpush.msra.mxu0 0.0
  %951 = vmatpush.msra.mxu0 0.0
  %952 = vmatpush.msra.mxu0 0.0
  %953 = vmatpush.msra.mxu0 0.0
  %954 = vmatpush.msra.mxu0 0.0
  %955 = vmatpush.msra.mxu0 0.0
  %956 = vmatpush.msra.mxu0 0.0
  %957 = vmatpush.msra.mxu0 0.0
  %958 = vmatpush.msra.mxu0 0.0
  %959 = vmatpush.msra.mxu0 0.0
  %960 = vmatpush.msra.mxu0 0.0
  %961 = vmatpush.msra.mxu0 0.0
  %962 = vmatpush.msra.mxu0 %v455
  %963 = vmatpush.msra.mxu0 %v454
  %964 = vmatpush.msra.mxu0 %v453
  %965 = vmatpush.msra.mxu0 %v452
  %966 = vmatmul.f32.gmra.mxu0 %v927
  %v967 = vpop.f32.mrf.mxu0
  %v968 = vadd.f32 0.0, %v967
  %969 = vmatmul.f32.gmra.mxu0 %v930
  %v970 = vpop.f32.mrf.mxu0
  %v971 = vadd.f32 0.0, %v970
  %972 = vmatmul.f32.gmra.mxu0 %v933
  %v973 = vpop.f32.mrf.mxu0
  %v974 = vadd.f32 0.0, %v973
  %975 = vmatmul.f32.gmra.mxu0 %v936
  %v976 = vpop.f32.mrf.mxu0
  %v977 = vadd.f32 0.0, %v976
  %978 = vmatmul.f32.gmra.mxu0 %v939
  %v979 = vpop.f32.mrf.mxu0
  %v980 = vadd.f32 0.0, %v979
  %981 = vmatmul.f32.gmra.mxu0 %v942
  %v982 = vpop.f32.mrf.mxu0
  %v983 = vadd.f32 0.0, %v982
  %984 = vmatmul.f32.gmra.mxu0 %v945
  %v985 = vpop.f32.mrf.mxu0
  %v986 = vadd.f32 0.0, %v985
  %987 = vmatmul.f32.gmra.mxu0 %v948
  %v988 = vpop.f32.mrf.mxu0
  %v989 = vadd.f32 0.0, %v988
  %990 = vdwg.mxu0
  %v992 = vperm.slane %v456, 0
  %v995 = vsel %vm571, %v222, 0
  %v998 = vsel %vm571, %v223, 0
  %1000 = vmatpush.msra.mxu0 0.0
  %1001 = vmatpush.msra.mxu0 0.0
  %1002 = vmatpush.msra.mxu0 0.0
  %1003 = vmatpush.msra.mxu0 0.0
  %1004 = vmatpush.msra.mxu0 0.0
  %1005 = vmatpush.msra.mxu0 0.0
  %1006 = vmatpush.msra.mxu0 0.0
  %1007 = vmatpush.msra.mxu0 0.0
  %1008 = vmatpush.msra.mxu0 %v989
  %1009 = vmatpush.msra.mxu0 %v986
  %1010 = vmatpush.msra.mxu0 %v983
  %1011 = vmatpush.msra.mxu0 %v980
  %1012 = vmatpush.msra.mxu0 %v977
  %1013 = vmatpush.msra.mxu0 %v974
  %1014 = vmatpush.msra.mxu0 %v971
  %1015 = vmatpush.msra.mxu0 %v968
  %1016 = vmatmul.f32.gmra.mxu0 %v995
  %v1017 = vpop.f32.mrf.mxu0
  %v1018 = vadd.f32 %v992, %v1017
  %1019 = vmatmul.f32.gmra.mxu0 %v998
  %v1020 = vpop.f32.mrf.mxu0
  %v1021 = vadd.f32 %v992, %v1020
  %1022 = vdwg.mxu0
  %v1023 = vadd.f32 %v190, %v1018
  %v1024 = vadd.f32 %v193, %v1021
  %v1025 = vsel %vm282, %v1023, 0.0
  %1026 = vadd.xlane.f32.xlu0 %v1025
  %v1027 = vpop.xlane.xlu0 %1026
  %v1028 = vsel %vm282, %v1024, 0.0
  %1029 = vadd.xlane.f32.xlu0 %v1028
  %v1030 = vpop.xlane.xlu0 %1029
  %v1031 = vrcp.pop 32.0
  %v1032 = vmul.f32 32.0, %v1031
  %v1033 = vsub.f32 1.0, %v1032
  %v1034 = vmul.f32 %v1031, %v1033
  %v1035 = vadd.f32 %v1031, %v1034
  %vm1036 = vweird.f32 %v1031
  %v1037 = vsel %vm1036, %v1031, %v1035
  %v1038 = vmul.f32 %v1027, %v1037
  %v1039 = vmul.f32 %v1030, %v1037
  %v1040 = vsub.f32 %v1023, %v1038
  %v1041 = vsub.f32 %v1024, %v1039
  %v1042 = vmul.f32 %v1040, %v1040
  %v1043 = vmul.f32 %v1041, %v1041
  %v1044 = vsel %vm282, %v1042, 0.0
  %1045 = vadd.xlane.f32.xlu0 %v1044
  %v1046 = vpop.xlane.xlu0 %1045
  %v1047 = vsel %vm282, %v1043, 0.0
  %1048 = vadd.xlane.f32.xlu0 %v1047
  %v1049 = vpop.xlane.xlu0 %1048
  %v1050 = vmul.f32 %v1046, %v1037
  %v1051 = vmul.f32 %v1049, %v1037
  %v1052 = vadd.f32 %v1050, 1e-05
  %v1053 = vadd.f32 %v1051, 1e-05
  %v1054 = vrsqrt.pop %v1052
  %v1055 = vmul.f32 %v1054, %v1052
  %v1056 = vmul.f32 %v1055, %v1054
  %v1057 = vmul.f32 0.5, %v1056
  %v1058 = vsub.f32 1.5, %v1057
  %v1059 = vmul.f32 %v1054, %v1058
  %vm1060 = vweird.f32 %v1052
  %vm1061 = vweird.f32 %v1054
  %vm1062 = vmor %vm1060, %vm1061
  %v1063 = vsel %vm1062, %v1054, %v1059
  %v1064 = vrsqrt.pop %v1053
  %v1065 = vmul.f32 %v1064, %v1053
  %v1066 = vmul.f32 %v1065, %v1064
  %v1067 = vmul.f32 0.5, %v1066
  %v1068 = vsub.f32 1.5, %v1067
  %v1069 = vmul.f32 %v1064, %v1068
  %vm1070 = vweird.f32 %v1053
  %vm1071 = vweird.f32 %v1064
  %vm1072 = vmor %vm1070, %vm1071
  %v1073 = vsel %vm1072, %v1064, %v1069
  %v1074 = vmul.f32 %v1040, %v1063
  %v1075 = vmul.f32 %v1041, %v1073
  %v1077 = vperm.slane %v272, 0
  %v1079 = vmul.f32 %v1074, %v1077
  %v1080 = vmul.f32 %v1075, %v1077
  %v1082 = vperm.slane %v273, 0
  %v1084 = vadd.f32 %v1079, %v1082
  %v1085 = vadd.f32 %v1080, %v1082
  %v1086 = vld [vmem:[%s39] sm:$0xff]
  %v1087 = vld [vmem:[%s39 + $0x8] sm:$0xff]
  %v1088 = vld [vmem:[%s39 + $0x10] sm:$0xff]
  %v1089 = vld [vmem:[%s39 + $0x18] sm:$0xff]
  %v1090 = vld [vmem:[%s41] sm:$0x1]
  %v1092 = vperm.slane %v1090, 0
  %v1095 = vsel %vm282, %v1084, 0
  %v1098 = vsel %vm282, %v1085, 0
  %1100 = vmatpush.msra.mxu0 0.0
  %1101 = vmatpush.msra.mxu0 0.0
  %1102 = vmatpush.msra.mxu0 0.0
  %1103 = vmatpush.msra.mxu0 0.0
  %1104 = vmatpush.msra.mxu0 0.0
  %1105 = vmatpush.msra.mxu0 0.0
  %1106 = vmatpush.msra.mxu0 0.0
  %1107 = vmatpush.msra.mxu0 0.0
  %1108 = vmatpush.msra.mxu0 0.0
  %1109 = vmatpush.msra.mxu0 0.0
  %1110 = vmatpush.msra.mxu0 0.0
  %1111 = vmatpush.msra.mxu0 0.0
  %1112 = vmatpush.msra.mxu0 %v1089
  %1113 = vmatpush.msra.mxu0 %v1088
  %1114 = vmatpush.msra.mxu0 %v1087
  %1115 = vmatpush.msra.mxu0 %v1086
  %1116 = vmatmul.f32.gmra.mxu0 %v1095
  %v1117 = vpop.f32.mrf.mxu0
  %v1118 = vadd.f32 %v1092, %v1117
  %1119 = vmatmul.f32.gmra.mxu0 %v1098
  %v1120 = vpop.f32.mrf.mxu0
  %v1121 = vadd.f32 %v1092, %v1120
  %1122 = vdwg.mxu0
  %v1123 = vld [vmem:[%s43] sm:$0xff]
  %v1124 = vld [vmem:[%s43 + $0x8] sm:$0xff]
  %v1125 = vld [vmem:[%s43 + $0x10] sm:$0xff]
  %v1126 = vld [vmem:[%s43 + $0x18] sm:$0xff]
  %v1127 = vld [vmem:[%s45] sm:$0x1]
  %v1129 = vperm.slane %v1127, 0
  %v1132 = vsel %vm282, %v195, 0
  %v1135 = vsel %vm282, %v196, 0
  %1137 = vmatpush.msra.mxu0 0.0
  %1138 = vmatpush.msra.mxu0 0.0
  %1139 = vmatpush.msra.mxu0 0.0
  %1140 = vmatpush.msra.mxu0 0.0
  %1141 = vmatpush.msra.mxu0 0.0
  %1142 = vmatpush.msra.mxu0 0.0
  %1143 = vmatpush.msra.mxu0 0.0
  %1144 = vmatpush.msra.mxu0 0.0
  %1145 = vmatpush.msra.mxu0 0.0
  %1146 = vmatpush.msra.mxu0 0.0
  %1147 = vmatpush.msra.mxu0 0.0
  %1148 = vmatpush.msra.mxu0 0.0
  %1149 = vmatpush.msra.mxu0 %v1126
  %1150 = vmatpush.msra.mxu0 %v1125
  %1151 = vmatpush.msra.mxu0 %v1124
  %1152 = vmatpush.msra.mxu0 %v1123
  %1153 = vmatmul.f32.gmra.mxu0 %v1132
  %v1154 = vpop.f32.mrf.mxu0
  %v1155 = vadd.f32 %v1129, %v1154
  %1156 = vmatmul.f32.gmra.mxu0 %v1135
  %v1157 = vpop.f32.mrf.mxu0
  %v1158 = vadd.f32 %v1129, %v1157
  %1159 = vdwg.mxu0
  %1160 = vmatpush.msra.mxu0 0.0
  %1161 = vmatpush.msra.mxu0 0.0
  %1162 = vmatpush.msra.mxu0 0.0
  %1163 = vmatpush.msra.mxu0 0.0
  %1164 = vmatpush.msra.mxu0 0.0
  %1165 = vmatpush.msra.mxu0 0.0
  %1166 = vmatpush.msra.mxu0 0.0
  %1167 = vmatpush.msra.mxu0 0.0
  %1168 = vmatpush.msra.mxu0 0.0
  %1169 = vmatpush.msra.mxu0 0.0
  %1170 = vmatpush.msra.mxu0 0.0
  %1171 = vmatpush.msra.mxu0 0.0
  %1172 = vmatpush.msra.mxu0 0.0
  %1173 = vmatpush.msra.mxu0 0.0
  %1174 = vmatpush.msra.mxu0 %v1121
  %1175 = vmatpush.msra.mxu0 %v1118
  %1176 = vmatmul.f32.gmra.mxu0 %v314
  %v1177 = vpop.f32.mrf.mxu0
  %v1178 = vadd.f32 0.0, %v1177
  %1179 = vmatmul.f32.gmra.mxu0 %v317
  %v1180 = vpop.f32.mrf.mxu0
  %v1181 = vadd.f32 0.0, %v1180
  %1182 = vmatmul.f32.gmra.mxu0 %v320
  %v1183 = vpop.f32.mrf.mxu0
  %v1184 = vadd.f32 0.0, %v1183
  %1185 = vmatmul.f32.gmra.mxu0 %v323
  %v1186 = vpop.f32.mrf.mxu0
  %v1187 = vadd.f32 0.0, %v1186
  %1188 = vmatmul.f32.gmra.mxu0 %v326
  %v1189 = vpop.f32.mrf.mxu0
  %v1190 = vadd.f32 0.0, %v1189
  %1191 = vmatmul.f32.gmra.mxu0 %v329
  %v1192 = vpop.f32.mrf.mxu0
  %v1193 = vadd.f32 0.0, %v1192
  %1194 = vmatmul.f32.gmra.mxu0 %v332
  %v1195 = vpop.f32.mrf.mxu0
  %v1196 = vadd.f32 0.0, %v1195
  %1197 = vmatmul.f32.gmra.mxu0 %v335
  %v1198 = vpop.f32.mrf.mxu0
  %v1199 = vadd.f32 0.0, %v1198
  %1200 = vdwg.mxu0
  %v1201 = vmul.f32 %v1178, %v244
  %v1202 = vmul.f32 %v1181, %v245
  %v1203 = vmul.f32 %v1184, %v246
  %v1204 = vmul.f32 %v1187, %v247
  %v1205 = vmul.f32 %v1190, %v248
  %v1206 = vmul.f32 %v1193, %v249
  %v1207 = vmul.f32 %v1196, %v250
  %v1208 = vmul.f32 %v1199, %v251
  %v1210 = vsel %vm282, %v1201, 0
  %v1213 = vsel %vm282, %v1202, 0
  %v1216 = vsel %vm282, %v1203, 0
  %v1219 = vsel %vm282, %v1204, 0
  %v1222 = vsel %vm282, %v1205, 0
  %v1225 = vsel %vm282, %v1206, 0
  %v1228 = vsel %vm282, %v1207, 0
  %v1231 = vsel %vm282, %v1208, 0
  %1233 = vmatpush.msra.mxu0 0.0
  %1234 = vmatpush.msra.mxu0 0.0
  %1235 = vmatpush.msra.mxu0 0.0
  %1236 = vmatpush.msra.mxu0 0.0
  %1237 = vmatpush.msra.mxu0 0.0
  %1238 = vmatpush.msra.mxu0 0.0
  %1239 = vmatpush.msra.mxu0 0.0
  %1240 = vmatpush.msra.mxu0 0.0
  %1241 = vmatpush.msra.mxu0 0.0
  %1242 = vmatpush.msra.mxu0 0.0
  %1243 = vmatpush.msra.mxu0 0.0
  %1244 = vmatpush.msra.mxu0 0.0
  %1245 = vmatpush.msra.mxu0 %v255
  %1246 = vmatpush.msra.mxu0 %v254
  %1247 = vmatpush.msra.mxu0 %v253
  %1248 = vmatpush.msra.mxu0 %v252
  %1249 = vmatmul.f32.gmra.mxu0 %v1210
  %v1250 = vpop.f32.mrf.mxu0
  %v1251 = vadd.f32 0.0, %v1250
  %1252 = vmatmul.f32.gmra.mxu0 %v1213
  %v1253 = vpop.f32.mrf.mxu0
  %v1254 = vadd.f32 0.0, %v1253
  %1255 = vmatmul.f32.gmra.mxu0 %v1216
  %v1256 = vpop.f32.mrf.mxu0
  %v1257 = vadd.f32 0.0, %v1256
  %1258 = vmatmul.f32.gmra.mxu0 %v1219
  %v1259 = vpop.f32.mrf.mxu0
  %v1260 = vadd.f32 0.0, %v1259
  %1261 = vmatmul.f32.gmra.mxu0 %v1222
  %v1262 = vpop.f32.mrf.mxu0
  %v1263 = vadd.f32 0.0, %v1262
  %1264 = vmatmul.f32.gmra.mxu0 %v1225
  %v1265 = vpop.f32.mrf.mxu0
  %v1266 = vadd.f32 0.0, %v1265
  %1267 = vmatmul.f32.gmra.mxu0 %v1228
  %v1268 = vpop.f32.mrf.mxu0
  %v1269 = vadd.f32 0.0, %v1268
  %1270 = vmatmul.f32.gmra.mxu0 %v1231
  %v1271 = vpop.f32.mrf.mxu0
  %v1272 = vadd.f32 0.0, %v1271
  %1273 = vdwg.mxu0
  %1274 = vmatpush.msra.mxu0 0.0
  %1275 = vmatpush.msra.mxu0 0.0
  %1276 = vmatpush.msra.mxu0 0.0
  %1277 = vmatpush.msra.mxu0 0.0
  %1278 = vmatpush.msra.mxu0 0.0
  %1279 = vmatpush.msra.mxu0 0.0
  %1280 = vmatpush.msra.mxu0 0.0
  %1281 = vmatpush.msra.mxu0 0.0
  %1282 = vmatpush.msra.mxu0 0.0
  %1283 = vmatpush.msra.mxu0 0.0
  %1284 = vmatpush.msra.mxu0 0.0
  %1285 = vmatpush.msra.mxu0 0.0
  %1286 = vmatpush.msra.mxu0 0.0
  %1287 = vmatpush.msra.mxu0 0.0
  %1288 = vmatpush.msra.mxu0 %v1158
  %1289 = vmatpush.msra.mxu0 %v1155
  %1290 = vmatmul.f32.gmra.mxu0 %v314
  %v1291 = vpop.f32.mrf.mxu0
  %v1292 = vadd.f32 0.0, %v1291
  %1293 = vmatmul.f32.gmra.mxu0 %v317
  %v1294 = vpop.f32.mrf.mxu0
  %v1295 = vadd.f32 0.0, %v1294
  %1296 = vmatmul.f32.gmra.mxu0 %v320
  %v1297 = vpop.f32.mrf.mxu0
  %v1298 = vadd.f32 0.0, %v1297
  %1299 = vmatmul.f32.gmra.mxu0 %v323
  %v1300 = vpop.f32.mrf.mxu0
  %v1301 = vadd.f32 0.0, %v1300
  %1302 = vmatmul.f32.gmra.mxu0 %v326
  %v1303 = vpop.f32.mrf.mxu0
  %v1304 = vadd.f32 0.0, %v1303
  %1305 = vmatmul.f32.gmra.mxu0 %v329
  %v1306 = vpop.f32.mrf.mxu0
  %v1307 = vadd.f32 0.0, %v1306
  %1308 = vmatmul.f32.gmra.mxu0 %v332
  %v1309 = vpop.f32.mrf.mxu0
  %v1310 = vadd.f32 0.0, %v1309
  %1311 = vmatmul.f32.gmra.mxu0 %v335
  %v1312 = vpop.f32.mrf.mxu0
  %v1313 = vadd.f32 0.0, %v1312
  %1314 = vdwg.mxu0
  %v1315 = vmul.f32 %v1292, %v256
  %v1316 = vmul.f32 %v1295, %v257
  %v1317 = vmul.f32 %v1298, %v258
  %v1318 = vmul.f32 %v1301, %v259
  %v1319 = vmul.f32 %v1304, %v260
  %v1320 = vmul.f32 %v1307, %v261
  %v1321 = vmul.f32 %v1310, %v262
  %v1322 = vmul.f32 %v1313, %v263
  %v1324 = vsel %vm571, %v1315, 0
  %v1327 = vsel %vm571, %v1316, 0
  %v1330 = vsel %vm571, %v1317, 0
  %v1333 = vsel %vm571, %v1318, 0
  %v1336 = vsel %vm571, %v1319, 0
  %v1339 = vsel %vm571, %v1320, 0
  %v1342 = vsel %vm571, %v1321, 0
  %v1345 = vsel %vm571, %v1322, 0
  %1347 = vmatpush.msra.mxu0 0.0
  %1348 = vmatpush.msra.mxu0 0.0
  %1349 = vmatpush.msra.mxu0 0.0
  %1350 = vmatpush.msra.mxu0 0.0
  %1351 = vmatpush.msra.mxu0 0.0
  %1352 = vmatpush.msra.mxu0 0.0
  %1353 = vmatpush.msra.mxu0 0.0
  %1354 = vmatpush.msra.mxu0 0.0
  %1355 = vmatpush.msra.mxu0 %v271
  %1356 = vmatpush.msra.mxu0 %v270
  %1357 = vmatpush.msra.mxu0 %v269
  %1358 = vmatpush.msra.mxu0 %v268
  %1359 = vmatpush.msra.mxu0 %v267
  %1360 = vmatpush.msra.mxu0 %v266
  %1361 = vmatpush.msra.mxu0 %v265
  %1362 = vmatpush.msra.mxu0 %v264
  %1363 = vmatmul.f32.gmra.mxu0 %v1324
  %v1364 = vpop.f32.mrf.mxu0
  %v1365 = vadd.f32 0.0, %v1364
  %1366 = vmatmul.f32.gmra.mxu0 %v1327
  %v1367 = vpop.f32.mrf.mxu0
  %v1368 = vadd.f32 0.0, %v1367
  %1369 = vmatmul.f32.gmra.mxu0 %v1330
  %v1370 = vpop.f32.mrf.mxu0
  %v1371 = vadd.f32 0.0, %v1370
  %1372 = vmatmul.f32.gmra.mxu0 %v1333
  %v1373 = vpop.f32.mrf.mxu0
  %v1374 = vadd.f32 0.0, %v1373
  %1375 = vmatmul.f32.gmra.mxu0 %v1336
  %v1376 = vpop.f32.mrf.mxu0
  %v1377 = vadd.f32 0.0, %v1376
  %1378 = vmatmul.f32.gmra.mxu0 %v1339
  %v1379 = vpop.f32.mrf.mxu0
  %v1380 = vadd.f32 0.0, %v1379
  %1381 = vmatmul.f32.gmra.mxu0 %v1342
  %v1382 = vpop.f32.mrf.mxu0
  %v1383 = vadd.f32 0.0, %v1382
  %1384 = vmatmul.f32.gmra.mxu0 %v1345
  %v1385 = vpop.f32.mrf.mxu0
  %v1386 = vadd.f32 0.0, %v1385
  %1387 = vdwg.mxu0
  %v1388 = vld [vmem:[%s47] sm:$0xff]
  %v1389 = vld [vmem:[%s47 + $0x8] sm:$0xff]
  %v1390 = vld [vmem:[%s47 + $0x10] sm:$0xff]
  %v1391 = vld [vmem:[%s47 + $0x18] sm:$0xff]
  %v1392 = vld [vmem:[%s49] sm:$0x1]
  %v1394 = vsel %vm481, %v1251, 0
  %v1397 = vsel %vm481, %v1254, 0
  %v1400 = vsel %vm481, %v1257, 0
  %v1403 = vsel %vm481, %v1260, 0
  %v1406 = vsel %vm481, %v1263, 0
  %v1409 = vsel %vm481, %v1266, 0
  %v1412 = vsel %vm481, %v1269, 0
  %v1415 = vsel %vm481, %v1272, 0
  %v1418 = vsel %vm481, %v1365, 0
  %v1421 = vsel %vm481, %v1368, 0
  %v1424 = vsel %vm481, %v1371, 0
  %v1427 = vsel %vm481, %v1374, 0
  %v1430 = vsel %vm481, %v1377, 0
  %v1433 = vsel %vm481, %v1380, 0
  %v1436 = vsel %vm481, %v1383, 0
  %v1439 = vsel %vm481, %v1386, 0
  %1441 = vmatpush.xpose.msra.mxu0 0.0
  %1442 = vmatpush.xpose.msra.mxu0 0.0
  %1443 = vmatpush.xpose.msra.mxu0 0.0
  %1444 = vmatpush.xpose.msra.mxu0 0.0
  %1445 = vmatpush.xpose.msra.mxu0 0.0
  %1446 = vmatpush.xpose.msra.mxu0 0.0
  %1447 = vmatpush.xpose.msra.mxu0 0.0
  %1448 = vmatpush.xpose.msra.mxu0 0.0
  %1449 = vmatpush.xpose.msra.mxu0 %v1439
  %1450 = vmatpush.xpose.msra.mxu0 %v1436
  %1451 = vmatpush.xpose.msra.mxu0 %v1433
  %1452 = vmatpush.xpose.msra.mxu0 %v1430
  %1453 = vmatpush.xpose.msra.mxu0 %v1427
  %1454 = vmatpush.xpose.msra.mxu0 %v1424
  %1455 = vmatpush.xpose.msra.mxu0 %v1421
  %1456 = vmatpush.xpose.msra.mxu0 %v1418
  %1457 = vmatmul.f32.gmra.mxu0 %v1394
  %v1458 = vpop.f32.mrf.mxu0
  %v1459 = vadd.f32 0.0, %v1458
  %1460 = vmatmul.f32.gmra.mxu0 %v1397
  %v1461 = vpop.f32.mrf.mxu0
  %v1462 = vadd.f32 0.0, %v1461
  %1463 = vmatmul.f32.gmra.mxu0 %v1400
  %v1464 = vpop.f32.mrf.mxu0
  %v1465 = vadd.f32 0.0, %v1464
  %1466 = vmatmul.f32.gmra.mxu0 %v1403
  %v1467 = vpop.f32.mrf.mxu0
  %v1468 = vadd.f32 0.0, %v1467
  %1469 = vmatmul.f32.gmra.mxu0 %v1406
  %v1470 = vpop.f32.mrf.mxu0
  %v1471 = vadd.f32 0.0, %v1470
  %1472 = vmatmul.f32.gmra.mxu0 %v1409
  %v1473 = vpop.f32.mrf.mxu0
  %v1474 = vadd.f32 0.0, %v1473
  %1475 = vmatmul.f32.gmra.mxu0 %v1412
  %v1476 = vpop.f32.mrf.mxu0
  %v1477 = vadd.f32 0.0, %v1476
  %1478 = vmatmul.f32.gmra.mxu0 %v1415
  %v1479 = vpop.f32.mrf.mxu0
  %v1480 = vadd.f32 0.0, %v1479
  %1481 = vdwg.mxu0
  %v1482 = vmul.f32 %v1459, 0.35355338
  %v1483 = vmul.f32 %v1462, 0.35355338
  %v1484 = vmul.f32 %v1465, 0.35355338
  %v1485 = vmul.f32 %v1468, 0.35355338
  %v1486 = vmul.f32 %v1471, 0.35355338
  %v1487 = vmul.f32 %v1474, 0.35355338
  %v1488 = vmul.f32 %v1477, 0.35355338
  %v1489 = vmul.f32 %v1480, 0.35355338
  %v1490 = vadd.f32 %v1482, %v205
  %v1491 = vadd.f32 %v1483, %v206
  %v1492 = vadd.f32 %v1484, %v207
  %v1493 = vadd.f32 %v1485, %v208
  %v1494 = vadd.f32 %v1486, %v209
  %v1495 = vadd.f32 %v1487, %v210
  %v1496 = vadd.f32 %v1488, %v211
  %v1497 = vadd.f32 %v1489, %v212
  %v1498 = vsel %vm571, %v1490, -inf
  %1499 = vmax.xlane.f32.xlu0 %v1498
  %v1500 = vpop.xlane.xlu0 %1499
  %v1501 = vsel %vm571, %v1491, -inf
  %1502 = vmax.xlane.f32.xlu0 %v1501
  %v1503 = vpop.xlane.xlu0 %1502
  %v1504 = vsel %vm571, %v1492, -inf
  %1505 = vmax.xlane.f32.xlu0 %v1504
  %v1506 = vpop.xlane.xlu0 %1505
  %v1507 = vsel %vm571, %v1493, -inf
  %1508 = vmax.xlane.f32.xlu0 %v1507
  %v1509 = vpop.xlane.xlu0 %1508
  %v1510 = vsel %vm571, %v1494, -inf
  %1511 = vmax.xlane.f32.xlu0 %v1510
  %v1512 = vpop.xlane.xlu0 %1511
  %v1513 = vsel %vm571, %v1495, -inf
  %1514 = vmax.xlane.f32.xlu0 %v1513
  %v1515 = vpop.xlane.xlu0 %1514
  %v1516 = vsel %vm571, %v1496, -inf
  %1517 = vmax.xlane.f32.xlu0 %v1516
  %v1518 = vpop.xlane.xlu0 %1517
  %v1519 = vsel %vm571, %v1497, -inf
  %1520 = vmax.xlane.f32.xlu0 %v1519
  %v1521 = vpop.xlane.xlu0 %1520
  %v1522 = vsub.f32 %v1490, %v1500
  %v1523 = vsub.f32 %v1491, %v1503
  %v1524 = vsub.f32 %v1492, %v1506
  %v1525 = vsub.f32 %v1493, %v1509
  %v1526 = vsub.f32 %v1494, %v1512
  %v1527 = vsub.f32 %v1495, %v1515
  %v1528 = vsub.f32 %v1496, %v1518
  %v1529 = vsub.f32 %v1497, %v1521
  %v1530 = vmul.f32 %v1522, 1.442695
  %v1531 = vpow.pop %v1530
  %v1532 = vmul.f32 %v1523, 1.442695
  %v1533 = vpow.pop %v1532
  %v1534 = vmul.f32 %v1524, 1.442695
  %v1535 = vpow.pop %v1534
  %v1536 = vmul.f32 %v1525, 1.442695
  %v1537 = vpow.pop %v1536
  %v1538 = vmul.f32 %v1526, 1.442695
  %v1539 = vpow.pop %v1538
  %v1540 = vmul.f32 %v1527, 1.442695
  %v1541 = vpow.pop %v1540
  %v1542 = vmul.f32 %v1528, 1.442695
  %v1543 = vpow.pop %v1542
  %v1544 = vmul.f32 %v1529, 1.442695
  %v1545 = vpow.pop %v1544
  %v1546 = vsel %vm571, %v1531, 0.0
  %1547 = vadd.xlane.f32.xlu0 %v1546
  %v1548 = vpop.xlane.xlu0 %1547
  %v1549 = vsel %vm571, %v1533, 0.0
  %1550 = vadd.xlane.f32.xlu0 %v1549
  %v1551 = vpop.xlane.xlu0 %1550
  %v1552 = vsel %vm571, %v1535, 0.0
  %1553 = vadd.xlane.f32.xlu0 %v1552
  %v1554 = vpop.xlane.xlu0 %1553
  %v1555 = vsel %vm571, %v1537, 0.0
  %1556 = vadd.xlane.f32.xlu0 %v1555
  %v1557 = vpop.xlane.xlu0 %1556
  %v1558 = vsel %vm571, %v1539, 0.0
  %1559 = vadd.xlane.f32.xlu0 %v1558
  %v1560 = vpop.xlane.xlu0 %1559
  %v1561 = vsel %vm571, %v1541, 0.0
  %1562 = vadd.xlane.f32.xlu0 %v1561
  %v1563 = vpop.xlane.xlu0 %1562
  %v1564 = vsel %vm571, %v1543, 0.0
  %1565 = vadd.xlane.f32.xlu0 %v1564
  %v1566 = vpop.xlane.xlu0 %1565
  %v1567 = vsel %vm571, %v1545, 0.0
  %1568 = vadd.xlane.f32.xlu0 %v1567
  %v1569 = vpop.xlane.xlu0 %1568
  %v1570 = vrcp.pop %v1548
  %v1571 = vmul.f32 %v1548, %v1570
  %v1572 = vsub.f32 1.0, %v1571
  %v1573 = vmul.f32 %v1570, %v1572
  %v1574 = vadd.f32 %v1570, %v1573
  %vm1575 = vweird.f32 %v1548
  %vm1576 = vweird.f32 %v1570
  %vm1577 = vmor %vm1575, %vm1576
  %v1578 = vsel %vm1577, %v1570, %v1574
  %v1579 = vand.u32 2147483647, %v1548
  %vm1580 = vcmp.eq.f32.partialorder %v1579, 8.507059e+37
  %v1581 = vand.u32 %v1548, 2147483648
  %v1582 = vor.u32 1.1754944e-38, %v1581
  %v1583 = vsel %vm1580, %v1582, %v1578
  %v1584 = vrcp.pop %v1551
  %v1585 = vmul.f32 %v1551, %v1584
  %v1586 = vsub.f32 1.0, %v1585
  %v1587 = vmul.f32 %v1584, %v1586
  %v1588 = vadd.f32 %v1584, %v1587
  %vm1589 = vweird.f32 %v1551
  %vm1590 = vweird.f32 %v1584
  %vm1591 = vmor %vm1589, %vm1590
  %v1592 = vsel %vm1591, %v1584, %v1588
  %v1593 = vand.u32 2147483647, %v1551
  %vm1594 = vcmp.eq.f32.partialorder %v1593, 8.507059e+37
  %v1595 = vand.u32 %v1551, 2147483648
  %v1596 = vor.u32 1.1754944e-38, %v1595
  %v1597 = vsel %vm1594, %v1596, %v1592
  %v1598 = vrcp.pop %v1554
  %v1599 = vmul.f32 %v1554, %v1598
  %v1600 = vsub.f32 1.0, %v1599
  %v1601 = vmul.f32 %v1598, %v1600
  %v1602 = vadd.f32 %v1598, %v1601
  %vm1603 = vweird.f32 %v1554
  %vm1604 = vweird.f32 %v1598
  %vm1605 = vmor %vm1603, %vm1604
  %v1606 = vsel %vm1605, %v1598, %v1602
  %v1607 = vand.u32 2147483647, %v1554
  %vm1608 = vcmp.eq.f32.partialorder %v1607, 8.507059e+37
  %v1609 = vand.u32 %v1554, 2147483648
  %v1610 = vor.u32 1.1754944e-38, %v1609
  %v1611 = vsel %vm1608, %v1610, %v1606
  %v1612 = vrcp.pop %v1557
  %v1613 = vmul.f32 %v1557, %v1612
  %v1614 = vsub.f32 1.0, %v1613
  %v1615 = vmul.f32 %v1612, %v1614
  %v1616 = vadd.f32 %v1612, %v1615
  %vm1617 = vweird.f32 %v1557
  %vm1618 = vweird.f32 %v1612
  %vm1619 = vmor %vm1617, %vm1618
  %v1620 = vsel %vm1619, %v1612, %v1616
  %v1621 = vand.u32 2147483647, %v1557
  %vm1622 = vcmp.eq.f32.partialorder %v1621, 8.507059e+37
  %v1623 = vand.u32 %v1557, 2147483648
  %v1624 = vor.u32 1.1754944e-38, %v1623
  %v1625 = vsel %vm1622, %v1624, %v1620
  %v1626 = vrcp.pop %v1560
  %v1627 = vmul.f32 %v1560, %v1626
  %v1628 = vsub.f32 1.0, %v1627
  %v1629 = vmul.f32 %v1626, %v1628
  %v1630 = vadd.f32 %v1626, %v1629
  %vm1631 = vweird.f32 %v1560
  %vm1632 = vweird.f32 %v1626
  %vm1633 = vmor %vm1631, %vm1632
  %v1634 = vsel %vm1633, %v1626, %v1630
  %v1635 = vand.u32 2147483647, %v1560
  %vm1636 = vcmp.eq.f32.partialorder %v1635, 8.507059e+37
  %v1637 = vand.u32 %v1560, 2147483648
  %v1638 = vor.u32 1.1754944e-38, %v1637
  %v1639 = vsel %vm1636, %v1638, %v1634
  %v1640 = vrcp.pop %v1563
  %v1641 = vmul.f32 %v1563, %v1640
  %v1642 = vsub.f32 1.0, %v1641
  %v1643 = vmul.f32 %v1640, %v1642
  %v1644 = vadd.f32 %v1640, %v1643
  %vm1645 = vweird.f32 %v1563
  %vm1646 = vweird.f32 %v1640
  %vm1647 = vmor %vm1645, %vm1646
  %v1648 = vsel %vm1647, %v1640, %v1644
  %v1649 = vand.u32 2147483647, %v1563
  %vm1650 = vcmp.eq.f32.partialorder %v1649, 8.507059e+37
  %v1651 = vand.u32 %v1563, 2147483648
  %v1652 = vor.u32 1.1754944e-38, %v1651
  %v1653 = vsel %vm1650, %v1652, %v1648
  %v1654 = vrcp.pop %v1566
  %v1655 = vmul.f32 %v1566, %v1654
  %v1656 = vsub.f32 1.0, %v1655
  %v1657 = vmul.f32 %v1654, %v1656
  %v1658 = vadd.f32 %v1654, %v1657
  %vm1659 = vweird.f32 %v1566
  %vm1660 = vweird.f32 %v1654
  %vm1661 = vmor %vm1659, %vm1660
  %v1662 = vsel %vm1661, %v1654, %v1658
  %v1663 = vand.u32 2147483647, %v1566
  %vm1664 = vcmp.eq.f32.partialorder %v1663, 8.507059e+37
  %v1665 = vand.u32 %v1566, 2147483648
  %v1666 = vor.u32 1.1754944e-38, %v1665
  %v1667 = vsel %vm1664, %v1666, %v1662
  %v1668 = vrcp.pop %v1569
  %v1669 = vmul.f32 %v1569, %v1668
  %v1670 = vsub.f32 1.0, %v1669
  %v1671 = vmul.f32 %v1668, %v1670
  %v1672 = vadd.f32 %v1668, %v1671
  %vm1673 = vweird.f32 %v1569
  %vm1674 = vweird.f32 %v1668
  %vm1675 = vmor %vm1673, %vm1674
  %v1676 = vsel %vm1675, %v1668, %v1672
  %v1677 = vand.u32 2147483647, %v1569
  %vm1678 = vcmp.eq.f32.partialorder %v1677, 8.507059e+37
  %v1679 = vand.u32 %v1569, 2147483648
  %v1680 = vor.u32 1.1754944e-38, %v1679
  %v1681 = vsel %vm1678, %v1680, %v1676
  %v1682 = vmul.f32 %v1531, %v1583
  %v1683 = vmul.f32 %v1533, %v1597
  %v1684 = vmul.f32 %v1535, %v1611
  %v1685 = vmul.f32 %v1537, %v1625
  %v1686 = vmul.f32 %v1539, %v1639
  %v1687 = vmul.f32 %v1541, %v1653
  %v1688 = vmul.f32 %v1543, %v1667
  %v1689 = vmul.f32 %v1545, %v1681
  %1690 = vrot.lane.b32.xlu0 %v1365, 120
  %v1691 = vpop.permute.xlu0 %1690
  %1692 = vrot.lane.b32.xlu0 %v1368, 120
  %v1693 = vpop.permute.xlu0 %1692
  %1694 = vrot.lane.b32.xlu0 %v1371, 120
  %v1695 = vpop.permute.xlu0 %1694
  %1696 = vrot.lane.b32.xlu0 %v1374, 120
  %v1697 = vpop.permute.xlu0 %1696
  %1698 = vrot.lane.b32.xlu0 %v1377, 120
  %v1699 = vpop.permute.xlu0 %1698
  %1700 = vrot.lane.b32.xlu0 %v1380, 120
  %v1701 = vpop.permute.xlu0 %1700
  %1702 = vrot.lane.b32.xlu0 %v1383, 120
  %v1703 = vpop.permute.xlu0 %1702
  %1704 = vrot.lane.b32.xlu0 %v1386, 120
  %v1705 = vpop.permute.xlu0 %1704
  %v1715 = vsel %vm571, %v1682, 0
  %v1718 = vsel %vm571, %v1683, 0
  %v1721 = vsel %vm571, %v1684, 0
  %v1724 = vsel %vm571, %v1685, 0
  %v1727 = vsel %vm571, %v1686, 0
  %v1730 = vsel %vm571, %v1687, 0
  %v1733 = vsel %vm571, %v1688, 0
  %v1736 = vsel %vm571, %v1689, 0
  %1738 = vmatpush.msra.mxu0 0.0
  %1739 = vmatpush.msra.mxu0 0.0
  %1740 = vmatpush.msra.mxu0 0.0
  %1741 = vmatpush.msra.mxu0 0.0
  %1742 = vmatpush.msra.mxu0 0.0
  %1743 = vmatpush.msra.mxu0 0.0
  %1744 = vmatpush.msra.mxu0 0.0
  %1745 = vmatpush.msra.mxu0 0.0
  %1746 = vmatpush.msra.mxu0 %v1705
  %1747 = vmatpush.msra.mxu0 %v1703
  %1748 = vmatpush.msra.mxu0 %v1701
  %1749 = vmatpush.msra.mxu0 %v1699
  %1750 = vmatpush.msra.mxu0 %v1697
  %1751 = vmatpush.msra.mxu0 %v1695
  %1752 = vmatpush.msra.mxu0 %v1693
  %1753 = vmatpush.msra.mxu0 %v1691
  %1754 = vmatmul.f32.gmra.mxu0 %v1715
  %v1755 = vpop.f32.mrf.mxu0
  %v1756 = vadd.f32 0.0, %v1755
  %1757 = vmatmul.f32.gmra.mxu0 %v1718
  %v1758 = vpop.f32.mrf.mxu0
  %v1759 = vadd.f32 0.0, %v1758
  %1760 = vmatmul.f32.gmra.mxu0 %v1721
  %v1761 = vpop.f32.mrf.mxu0
  %v1762 = vadd.f32 0.0, %v1761
  %1763 = vmatmul.f32.gmra.mxu0 %v1724
  %v1764 = vpop.f32.mrf.mxu0
  %v1765 = vadd.f32 0.0, %v1764
  %1766 = vmatmul.f32.gmra.mxu0 %v1727
  %v1767 = vpop.f32.mrf.mxu0
  %v1768 = vadd.f32 0.0, %v1767
  %1769 = vmatmul.f32.gmra.mxu0 %v1730
  %v1770 = vpop.f32.mrf.mxu0
  %v1771 = vadd.f32 0.0, %v1770
  %1772 = vmatmul.f32.gmra.mxu0 %v1733
  %v1773 = vpop.f32.mrf.mxu0
  %v1774 = vadd.f32 0.0, %v1773
  %1775 = vmatmul.f32.gmra.mxu0 %v1736
  %v1776 = vpop.f32.mrf.mxu0
  %v1777 = vadd.f32 0.0, %v1776
  %1778 = vdwg.mxu0
  %v1780 = vsel %vm481, %v1756, 0
  %v1783 = vsel %vm481, %v1759, 0
  %v1786 = vsel %vm481, %v1762, 0
  %v1789 = vsel %vm481, %v1765, 0
  %v1792 = vsel %vm481, %v1768, 0
  %v1795 = vsel %vm481, %v1771, 0
  %v1798 = vsel %vm481, %v1774, 0
  %v1801 = vsel %vm481, %v1777, 0
  %1803 = vmatpush.msra.mxu0 0.0
  %1804 = vmatpush.msra.mxu0 0.0
  %1805 = vmatpush.msra.mxu0 0.0
  %1806 = vmatpush.msra.mxu0 0.0
  %1807 = vmatpush.msra.mxu0 0.0
  %1808 = vmatpush.msra.mxu0 0.0
  %1809 = vmatpush.msra.mxu0 0.0
  %1810 = vmatpush.msra.mxu0 0.0
  %1811 = vmatpush.msra.mxu0 0.0
  %1812 = vmatpush.msra.mxu0 0.0
  %1813 = vmatpush.msra.mxu0 0.0
  %1814 = vmatpush.msra.mxu0 0.0
  %1815 = vmatpush.msra.mxu0 0.0
  %1816 = vmatpush.msra.mxu0 0.0
  %1817 = vmatpush.msra.mxu0 0.0
  %1818 = vmatpush.msra.mxu0 %v213
  %1819 = vmatmul.f32.gmra.mxu0 %v1780
  %v1820 = vpop.f32.mrf.mxu0
  %v1821 = vadd.f32 0.0, %v1820
  %1822 = vmatmul.f32.gmra.mxu0 %v1783
  %v1823 = vpop.f32.mrf.mxu0
  %v1824 = vadd.f32 0.0, %v1823
  %1825 = vmatmul.f32.gmra.mxu0 %v1786
  %v1826 = vpop.f32.mrf.mxu0
  %v1827 = vadd.f32 0.0, %v1826
  %1828 = vmatmul.f32.gmra.mxu0 %v1789
  %v1829 = vpop.f32.mrf.mxu0
  %v1830 = vadd.f32 0.0, %v1829
  %1831 = vmatmul.f32.gmra.mxu0 %v1792
  %v1832 = vpop.f32.mrf.mxu0
  %v1833 = vadd.f32 0.0, %v1832
  %1834 = vmatmul.f32.gmra.mxu0 %v1795
  %v1835 = vpop.f32.mrf.mxu0
  %v1836 = vadd.f32 0.0, %v1835
  %1837 = vmatmul.f32.gmra.mxu0 %v1798
  %v1838 = vpop.f32.mrf.mxu0
  %v1839 = vadd.f32 0.0, %v1838
  %1840 = vmatmul.f32.gmra.mxu0 %v1801
  %v1841 = vpop.f32.mrf.mxu0
  %v1842 = vadd.f32 0.0, %v1841
  %1843 = vdwg.mxu0
  %v1844 = vmul.f32 %v1821, %v214
  %v1845 = vmul.f32 %v1824, %v215
  %v1846 = vmul.f32 %v1827, %v216
  %v1847 = vmul.f32 %v1830, %v217
  %v1848 = vmul.f32 %v1833, %v218
  %v1849 = vmul.f32 %v1836, %v219
  %v1850 = vmul.f32 %v1839, %v220
  %v1851 = vmul.f32 %v1842, %v221
  %v1853 = vsel %vm282, %v1844, 0
  %v1856 = vsel %vm282, %v1845, 0
  %v1859 = vsel %vm282, %v1846, 0
  %v1862 = vsel %vm282, %v1847, 0
  %v1865 = vsel %vm282, %v1848, 0
  %v1868 = vsel %vm282, %v1849, 0
  %v1871 = vsel %vm282, %v1850, 0
  %v1874 = vsel %vm282, %v1851, 0
  %1876 = vmatpush.msra.mxu0 0.0
  %1877 = vmatpush.msra.mxu0 0.0
  %1878 = vmatpush.msra.mxu0 0.0
  %1879 = vmatpush.msra.mxu0 0.0
  %1880 = vmatpush.msra.mxu0 0.0
  %1881 = vmatpush.msra.mxu0 0.0
  %1882 = vmatpush.msra.mxu0 0.0
  %1883 = vmatpush.msra.mxu0 0.0
  %1884 = vmatpush.msra.mxu0 0.0
  %1885 = vmatpush.msra.mxu0 0.0
  %1886 = vmatpush.msra.mxu0 0.0
  %1887 = vmatpush.msra.mxu0 0.0
  %1888 = vmatpush.msra.mxu0 %v1391
  %1889 = vmatpush.msra.mxu0 %v1390
  %1890 = vmatpush.msra.mxu0 %v1389
  %1891 = vmatpush.msra.mxu0 %v1388
  %1892 = vmatmul.f32.gmra.mxu0 %v1853
  %v1893 = vpop.f32.mrf.mxu0
  %v1894 = vadd.f32 0.0, %v1893
  %1895 = vmatmul.f32.gmra.mxu0 %v1856
  %v1896 = vpop.f32.mrf.mxu0
  %v1897 = vadd.f32 0.0, %v1896
  %1898 = vmatmul.f32.gmra.mxu0 %v1859
  %v1899 = vpop.f32.mrf.mxu0
  %v1900 = vadd.f32 0.0, %v1899
  %1901 = vmatmul.f32.gmra.mxu0 %v1862
  %v1902 = vpop.f32.mrf.mxu0
  %v1903 = vadd.f32 0.0, %v1902
  %1904 = vmatmul.f32.gmra.mxu0 %v1865
  %v1905 = vpop.f32.mrf.mxu0
  %v1906 = vadd.f32 0.0, %v1905
  %1907 = vmatmul.f32.gmra.mxu0 %v1868
  %v1908 = vpop.f32.mrf.mxu0
  %v1909 = vadd.f32 0.0, %v1908
  %1910 = vmatmul.f32.gmra.mxu0 %v1871
  %v1911 = vpop.f32.mrf.mxu0
  %v1912 = vadd.f32 0.0, %v1911
  %1913 = vmatmul.f32.gmra.mxu0 %v1874
  %v1914 = vpop.f32.mrf.mxu0
  %v1915 = vadd.f32 0.0, %v1914
  %1916 = vdwg.mxu0
  %v1918 = vperm.slane %v1392, 0
  %1920 = vmatpush.msra.mxu0 0.0
  %1921 = vmatpush.msra.mxu0 0.0
  %1922 = vmatpush.msra.mxu0 0.0
  %1923 = vmatpush.msra.mxu0 0.0
  %1924 = vmatpush.msra.mxu0 0.0
  %1925 = vmatpush.msra.mxu0 0.0
  %1926 = vmatpush.msra.mxu0 0.0
  %1927 = vmatpush.msra.mxu0 0.0
  %1928 = vmatpush.msra.mxu0 %v1915
  %1929 = vmatpush.msra.mxu0 %v1912
  %1930 = vmatpush.msra.mxu0 %v1909
  %1931 = vmatpush.msra.mxu0 %v1906
  %1932 = vmatpush.msra.mxu0 %v1903
  %1933 = vmatpush.msra.mxu0 %v1900
  %1934 = vmatpush.msra.mxu0 %v1897
  %1935 = vmatpush.msra.mxu0 %v1894
  %1936 = vmatmul.f32.gmra.mxu0 %v995
  %v1937 = vpop.f32.mrf.mxu0
  %v1938 = vadd.f32 %v1918, %v1937
  %1939 = vmatmul.f32.gmra.mxu0 %v998
  %v1940 = vpop.f32.mrf.mxu0
  %v1941 = vadd.f32 %v1918, %v1940
  %1942 = vdwg.mxu0
  %v1943 = vadd.f32 %v1084, %v1938
  %v1944 = vadd.f32 %v1085, %v1941
  %v1945 = vsel %vm282, %v1943, 0.0
  %1946 = vadd.xlane.f32.xlu0 %v1945
  %v1947 = vpop.xlane.xlu0 %1946
  %v1948 = vsel %vm282, %v1944, 0.0
  %1949 = vadd.xlane.f32.xlu0 %v1948
  %v1950 = vpop.xlane.xlu0 %1949
  %v1951 = vmul.f32 %v1947, %v1037
  %v1952 = vmul.f32 %v1950, %v1037
  %v1953 = vsub.f32 %v1943, %v1951
  %v1954 = vsub.f32 %v1944, %v1952
  %v1955 = vmul.f32 %v1953, %v1953
  %v1956 = vmul.f32 %v1954, %v1954
  %v1957 = vsel %vm282, %v1955, 0.0
  %1958 = vadd.xlane.f32.xlu0 %v1957
  %v1959 = vpop.xlane.xlu0 %1958
  %v1960 = vsel %vm282, %v1956, 0.0
  %1961 = vadd.xlane.f32.xlu0 %v1960
  %v1962 = vpop.xlane.xlu0 %1961
  %v1963 = vmul.f32 %v1959, %v1037
  %v1964 = vmul.f32 %v1962, %v1037
  %v1965 = vadd.f32 %v1963, 1e-05
  %v1966 = vadd.f32 %v1964, 1e-05
  %v1967 = vrsqrt.pop %v1965
  %v1968 = vmul.f32 %v1967, %v1965
  %v1969 = vmul.f32 %v1968, %v1967
  %v1970 = vmul.f32 0.5, %v1969
  %v1971 = vsub.f32 1.5, %v1970
  %v1972 = vmul.f32 %v1967, %v1971
  %vm1973 = vweird.f32 %v1965
  %vm1974 = vweird.f32 %v1967
  %vm1975 = vmor %vm1973, %vm1974
  %v1976 = vsel %vm1975, %v1967, %v1972
  %v1977 = vrsqrt.pop %v1966
  %v1978 = vmul.f32 %v1977, %v1966
  %v1979 = vmul.f32 %v1978, %v1977
  %v1980 = vmul.f32 0.5, %v1979
  %v1981 = vsub.f32 1.5, %v1980
  %v1982 = vmul.f32 %v1977, %v1981
  %vm1983 = vweird.f32 %v1966
  %vm1984 = vweird.f32 %v1977
  %vm1985 = vmor %vm1983, %vm1984
  %v1986 = vsel %vm1985, %v1977, %v1982
  %v1987 = vmul.f32 %v1953, %v1976
  %v1988 = vmul.f32 %v1954, %v1986
  %v1989 = vmul.f32 %v1987, %v1077
  %v1990 = vmul.f32 %v1988, %v1077
  %v1991 = vadd.f32 %v1989, %v1082
  %v1992 = vadd.f32 %v1990, %v1082
  %v1993 = vld [vmem:[%s55] sm:$0xff]
  %v1994 = vld [vmem:[%s55 + $0x8] sm:$0xff]
  %v1995 = vld [vmem:[%s55 + $0x10] sm:$0xff]
  %v1996 = vld [vmem:[%s55 + $0x18] sm:$0xff]
  %v1997 = vld [vmem:[%s57] sm:$0x1]
  %v1999 = vperm.slane %v1997, 0
  %v2002 = vsel %vm282, %v1991, 0
  %v2005 = vsel %vm282, %v1992, 0
  %2007 = vmatpush.msra.mxu0 0.0
  %2008 = vmatpush.msra.mxu0 0.0
  %2009 = vmatpush.msra.mxu0 0.0
  %2010 = vmatpush.msra.mxu0 0.0
  %2011 = vmatpush.msra.mxu0 0.0
  %2012 = vmatpush.msra.mxu0 0.0
  %2013 = vmatpush.msra.mxu0 0.0
  %2014 = vmatpush.msra.mxu0 0.0
  %2015 = vmatpush.msra.mxu0 0.0
  %2016 = vmatpush.msra.mxu0 0.0
  %2017 = vmatpush.msra.mxu0 0.0
  %2018 = vmatpush.msra.mxu0 0.0
  %2019 = vmatpush.msra.mxu0 %v1996
  %2020 = vmatpush.msra.mxu0 %v1995
  %2021 = vmatpush.msra.mxu0 %v1994
  %2022 = vmatpush.msra.mxu0 %v1993
  %2023 = vmatmul.f32.gmra.mxu0 %v2002
  %v2024 = vpop.f32.mrf.mxu0
  %v2025 = vadd.f32 %v1999, %v2024
  %2026 = vmatmul.f32.gmra.mxu0 %v2005
  %v2027 = vpop.f32.mrf.mxu0
  %v2028 = vadd.f32 %v1999, %v2027
  %2029 = vdwg.mxu0
  %v2030 = vmax.f32 %v2025, 0.0
  %v2031 = vmax.f32 %v2028, 0.0
  %v2032 = vld [vmem:[%s59] sm:$0xff]
  %v2033 = vld [vmem:[%s59 + $0x8] sm:$0xff]
  %v2034 = vld [vmem:[%s59 + $0x10] sm:$0xff]
  %v2035 = vld [vmem:[%s59 + $0x18] sm:$0xff]
  %v2036 = vld [vmem:[%s59 + $0x20] sm:$0xff]
  %v2037 = vld [vmem:[%s59 + $0x28] sm:$0xff]
  %v2038 = vld [vmem:[%s59 + $0x30] sm:$0xff]
  %v2039 = vld [vmem:[%s59 + $0x38] sm:$0xff]
  %v2040 = vld [vmem:[%s59 + $0x40] sm:$0xff]
  %v2041 = vld [vmem:[%s59 + $0x48] sm:$0xff]
  %v2042 = vld [vmem:[%s59 + $0x50] sm:$0xff]
  %v2043 = vld [vmem:[%s59 + $0x58] sm:$0xff]
  %v2044 = vld [vmem:[%s59 + $0x60] sm:$0xff]
  %v2045 = vld [vmem:[%s59 + $0x68] sm:$0xff]
  %v2046 = vld [vmem:[%s59 + $0x70] sm:$0xff]
  %v2047 = vld [vmem:[%s59 + $0x78] sm:$0xff]
  %v2048 = vld [vmem:[%s61] sm:$0x1]
  %v2050 = vperm.slane %v2048, 0
  %2052 = vmatpush.msra.mxu0 %v2047
  %2053 = vmatpush.msra.mxu0 %v2046
  %2054 = vmatpush.msra.mxu0 %v2045
  %2055 = vmatpush.msra.mxu0 %v2044
  %2056 = vmatpush.msra.mxu0 %v2043
  %2057 = vmatpush.msra.mxu0 %v2042
  %2058 = vmatpush.msra.mxu0 %v2041
  %2059 = vmatpush.msra.mxu0 %v2040
  %2060 = vmatpush.msra.mxu0 %v2039
  %2061 = vmatpush.msra.mxu0 %v2038
  %2062 = vmatpush.msra.mxu0 %v2037
  %2063 = vmatpush.msra.mxu0 %v2036
  %2064 = vmatpush.msra.mxu0 %v2035
  %2065 = vmatpush.msra.mxu0 %v2034
  %2066 = vmatpush.msra.mxu0 %v2033
  %2067 = vmatpush.msra.mxu0 %v2032
  %2068 = vmatmul.f32.gmra.mxu0 %v2030
  %v2069 = vpop.f32.mrf.mxu0
  %v2070 = vadd.f32 %v2050, %v2069
  %2071 = vmatmul.f32.gmra.mxu0 %v2031
  %v2072 = vpop.f32.mrf.mxu0
  %v2073 = vadd.f32 %v2050, %v2072
  %2074 = vdwg.mxu0
  %v2075 = vadd.f32 %v1991, %v2070
  %v2076 = vadd.f32 %v1992, %v2073
  %v2077 = vsel %vm282, %v2075, 0.0
  %2078 = vadd.xlane.f32.xlu0 %v2077
  %v2079 = vpop.xlane.xlu0 %2078
  %v2080 = vsel %vm282, %v2076, 0.0
  %2081 = vadd.xlane.f32.xlu0 %v2080
  %v2082 = vpop.xlane.xlu0 %2081
  %v2083 = vmul.f32 %v2079, %v1037
  %v2084 = vmul.f32 %v2082, %v1037
  %v2085 = vsub.f32 %v2075, %v2083
  %v2086 = vsub.f32 %v2076, %v2084
  %v2087 = vmul.f32 %v2085, %v2085
  %v2088 = vmul.f32 %v2086, %v2086
  %v2089 = vsel %vm282, %v2087, 0.0
  %2090 = vadd.xlane.f32.xlu0 %v2089
  %v2091 = vpop.xlane.xlu0 %2090
  %v2092 = vsel %vm282, %v2088, 0.0
  %2093 = vadd.xlane.f32.xlu0 %v2092
  %v2094 = vpop.xlane.xlu0 %2093
  %v2095 = vmul.f32 %v2091, %v1037
  %v2096 = vmul.f32 %v2094, %v1037
  %v2097 = vadd.f32 %v2095, 1e-05
  %v2098 = vadd.f32 %v2096, 1e-05
  %v2099 = vrsqrt.pop %v2097
  %v2100 = vmul.f32 %v2099, %v2097
  %v2101 = vmul.f32 %v2100, %v2099
  %v2102 = vmul.f32 0.5, %v2101
  %v2103 = vsub.f32 1.5, %v2102
  %v2104 = vmul.f32 %v2099, %v2103
  %vm2105 = vweird.f32 %v2097
  %vm2106 = vweird.f32 %v2099
  %vm2107 = vmor %vm2105, %vm2106
  %v2108 = vsel %vm2107, %v2099, %v2104
  %v2109 = vrsqrt.pop %v2098
  %v2110 = vmul.f32 %v2109, %v2098
  %v2111 = vmul.f32 %v2110, %v2109
  %v2112 = vmul.f32 0.5, %v2111
  %v2113 = vsub.f32 1.5, %v2112
  %v2114 = vmul.f32 %v2109, %v2113
  %vm2115 = vweird.f32 %v2098
  %vm2116 = vweird.f32 %v2109
  %vm2117 = vmor %vm2115, %vm2116
  %v2118 = vsel %vm2117, %v2109, %v2114
  %v2119 = vmul.f32 %v2085, %v2108
  %v2120 = vmul.f32 %v2086, %v2118
  %v2121 = vmul.f32 %v2119, %v1077
  %v2122 = vmul.f32 %v2120, %v1077
  %v2123 = vadd.f32 %v2121, %v1082
  %v2124 = vadd.f32 %v2122, %v1082
  %s2125 = scalar_lea.vmem %s51, 1
  %v2126 = vld [vmem:[%s2125] sm:$0x1]
  %s2127 = scalar_lea.vmem %s53, 1
  %v2128 = vld [vmem:[%s2127] sm:$0x1]
  %s2129 = scalar_lea.vmem %s31, 32
  %v2130 = vld [vmem:[%s2129] sm:$0xff]
  %v2131 = vld [vmem:[%s2129 + $0x8] sm:$0xff]
  %v2132 = vld [vmem:[%s2129 + $0x10] sm:$0xff]
  %v2133 = vld [vmem:[%s2129 + $0x18] sm:$0xff]
  %s2134 = scalar_lea.vmem %s33, 1
  %v2135 = vld [vmem:[%s2134] sm:$0x1]
  %v2137 = vperm.slane %v2135, 0
  %v2140 = vsel %vm282, %v2123, 0
  %v2143 = vsel %vm282, %v2124, 0
  %2145 = vmatpush.msra.mxu0 0.0
  %2146 = vmatpush.msra.mxu0 0.0
  %2147 = vmatpush.msra.mxu0 0.0
  %2148 = vmatpush.msra.mxu0 0.0
  %2149 = vmatpush.msra.mxu0 0.0
  %2150 = vmatpush.msra.mxu0 0.0
  %2151 = vmatpush.msra.mxu0 0.0
  %2152 = vmatpush.msra.mxu0 0.0
  %2153 = vmatpush.msra.mxu0 0.0
  %2154 = vmatpush.msra.mxu0 0.0
  %2155 = vmatpush.msra.mxu0 0.0
  %2156 = vmatpush.msra.mxu0 0.0
  %2157 = vmatpush.msra.mxu0 %v2133
  %2158 = vmatpush.msra.mxu0 %v2132
  %2159 = vmatpush.msra.mxu0 %v2131
  %2160 = vmatpush.msra.mxu0 %v2130
  %2161 = vmatmul.f32.gmra.mxu0 %v2140
  %v2162 = vpop.f32.mrf.mxu0
  %v2163 = vadd.f32 %v2137, %v2162
  %2164 = vmatmul.f32.gmra.mxu0 %v2143
  %v2165 = vpop.f32.mrf.mxu0
  %v2166 = vadd.f32 %v2137, %v2165
  %2167 = vdwg.mxu0
  %2168 = vmatpush.msra.mxu0 0.0
  %2169 = vmatpush.msra.mxu0 0.0
  %2170 = vmatpush.msra.mxu0 0.0
  %2171 = vmatpush.msra.mxu0 0.0
  %2172 = vmatpush.msra.mxu0 0.0
  %2173 = vmatpush.msra.mxu0 0.0
  %2174 = vmatpush.msra.mxu0 0.0
  %2175 = vmatpush.msra.mxu0 0.0
  %2176 = vmatpush.msra.mxu0 0.0
  %2177 = vmatpush.msra.mxu0 0.0
  %2178 = vmatpush.msra.mxu0 0.0
  %2179 = vmatpush.msra.mxu0 0.0
  %2180 = vmatpush.msra.mxu0 0.0
  %2181 = vmatpush.msra.mxu0 0.0
  %2182 = vmatpush.msra.mxu0 %v2166
  %2183 = vmatpush.msra.mxu0 %v2163
  %2184 = vmatmul.f32.gmra.mxu0 %v314
  %v2185 = vpop.f32.mrf.mxu0
  %v2186 = vadd.f32 0.0, %v2185
  %2187 = vmatmul.f32.gmra.mxu0 %v317
  %v2188 = vpop.f32.mrf.mxu0
  %v2189 = vadd.f32 0.0, %v2188
  %2190 = vmatmul.f32.gmra.mxu0 %v320
  %v2191 = vpop.f32.mrf.mxu0
  %v2192 = vadd.f32 0.0, %v2191
  %2193 = vmatmul.f32.gmra.mxu0 %v323
  %v2194 = vpop.f32.mrf.mxu0
  %v2195 = vadd.f32 0.0, %v2194
  %2196 = vmatmul.f32.gmra.mxu0 %v326
  %v2197 = vpop.f32.mrf.mxu0
  %v2198 = vadd.f32 0.0, %v2197
  %2199 = vmatmul.f32.gmra.mxu0 %v329
  %v2200 = vpop.f32.mrf.mxu0
  %v2201 = vadd.f32 0.0, %v2200
  %2202 = vmatmul.f32.gmra.mxu0 %v332
  %v2203 = vpop.f32.mrf.mxu0
  %v2204 = vadd.f32 0.0, %v2203
  %2205 = vmatmul.f32.gmra.mxu0 %v335
  %v2206 = vpop.f32.mrf.mxu0
  %v2207 = vadd.f32 0.0, %v2206
  %2208 = vdwg.mxu0
  %v2209 = vmul.f32 %v2186, %v224
  %v2210 = vmul.f32 %v2189, %v225
  %v2211 = vmul.f32 %v2192, %v226
  %v2212 = vmul.f32 %v2195, %v227
  %v2213 = vmul.f32 %v2198, %v228
  %v2214 = vmul.f32 %v2201, %v229
  %v2215 = vmul.f32 %v2204, %v230
  %v2216 = vmul.f32 %v2207, %v231
  %v2218 = vsel %vm386, %v2209, 0
  %v2221 = vsel %vm386, %v2210, 0
  %v2224 = vsel %vm386, %v2211, 0
  %v2227 = vsel %vm386, %v2212, 0
  %v2230 = vsel %vm386, %v2213, 0
  %v2233 = vsel %vm386, %v2214, 0
  %v2236 = vsel %vm386, %v2215, 0
  %v2239 = vsel %vm386, %v2216, 0
  %2241 = vmatpush.msra.mxu0 0.0
  %2242 = vmatpush.msra.mxu0 0.0
  %2243 = vmatpush.msra.mxu0 0.0
  %2244 = vmatpush.msra.mxu0 0.0
  %2245 = vmatpush.msra.mxu0 %v243
  %2246 = vmatpush.msra.mxu0 %v242
  %2247 = vmatpush.msra.mxu0 %v241
  %2248 = vmatpush.msra.mxu0 %v240
  %2249 = vmatpush.msra.mxu0 %v239
  %2250 = vmatpush.msra.mxu0 %v238
  %2251 = vmatpush.msra.mxu0 %v237
  %2252 = vmatpush.msra.mxu0 %v236
  %2253 = vmatpush.msra.mxu0 %v235
  %2254 = vmatpush.msra.mxu0 %v234
  %2255 = vmatpush.msra.mxu0 %v233
  %2256 = vmatpush.msra.mxu0 %v232
  %2257 = vmatmul.f32.gmra.mxu0 %v2218
  %v2258 = vpop.f32.mrf.mxu0
  %v2259 = vadd.f32 0.0, %v2258
  %2260 = vmatmul.f32.gmra.mxu0 %v2221
  %v2261 = vpop.f32.mrf.mxu0
  %v2262 = vadd.f32 0.0, %v2261
  %2263 = vmatmul.f32.gmra.mxu0 %v2224
  %v2264 = vpop.f32.mrf.mxu0
  %v2265 = vadd.f32 0.0, %v2264
  %2266 = vmatmul.f32.gmra.mxu0 %v2227
  %v2267 = vpop.f32.mrf.mxu0
  %v2268 = vadd.f32 0.0, %v2267
  %2269 = vmatmul.f32.gmra.mxu0 %v2230
  %v2270 = vpop.f32.mrf.mxu0
  %v2271 = vadd.f32 0.0, %v2270
  %2272 = vmatmul.f32.gmra.mxu0 %v2233
  %v2273 = vpop.f32.mrf.mxu0
  %v2274 = vadd.f32 0.0, %v2273
  %2275 = vmatmul.f32.gmra.mxu0 %v2236
  %v2276 = vpop.f32.mrf.mxu0
  %v2277 = vadd.f32 0.0, %v2276
  %2278 = vmatmul.f32.gmra.mxu0 %v2239
  %v2279 = vpop.f32.mrf.mxu0
  %v2280 = vadd.f32 0.0, %v2279
  %2281 = vdwg.mxu0
  %s2282 = scalar_lea.vmem %s35, 32
  %v2283 = vld [vmem:[%s2282] sm:$0xff]
  %v2284 = vld [vmem:[%s2282 + $0x8] sm:$0xff]
  %v2285 = vld [vmem:[%s2282 + $0x10] sm:$0xff]
  %v2286 = vld [vmem:[%s2282 + $0x18] sm:$0xff]
  %s2287 = scalar_lea.vmem %s37, 1
  %v2288 = vld [vmem:[%s2287] sm:$0x1]
  %2297 = vrot.lane.b32.xlu0 %v2259, 120
  %v2298 = vpop.permute.xlu0 %2297
  %2299 = vrot.lane.b32.xlu0 %v2262, 120
  %v2300 = vpop.permute.xlu0 %2299
  %2301 = vrot.lane.b32.xlu0 %v2265, 120
  %v2302 = vpop.permute.xlu0 %2301
  %2303 = vrot.lane.b32.xlu0 %v2268, 120
  %v2304 = vpop.permute.xlu0 %2303
  %2305 = vrot.lane.b32.xlu0 %v2271, 120
  %v2306 = vpop.permute.xlu0 %2305
  %2307 = vrot.lane.b32.xlu0 %v2274, 120
  %v2308 = vpop.permute.xlu0 %2307
  %2309 = vrot.lane.b32.xlu0 %v2277, 120
  %v2310 = vpop.permute.xlu0 %2309
  %2311 = vrot.lane.b32.xlu0 %v2280, 120
  %v2312 = vpop.permute.xlu0 %2311
  %v2313 = vsel %vm481, %v2259, 0
  %v2315 = vsel %vm481, %v2262, 0
  %v2317 = vsel %vm481, %v2265, 0
  %v2319 = vsel %vm481, %v2268, 0
  %v2321 = vsel %vm481, %v2271, 0
  %v2323 = vsel %vm481, %v2274, 0
  %v2325 = vsel %vm481, %v2277, 0
  %v2327 = vsel %vm481, %v2280, 0
  %v2329 = vsel %vm481, %v2298, 0
  %v2331 = vsel %vm481, %v2300, 0
  %v2333 = vsel %vm481, %v2302, 0
  %v2335 = vsel %vm481, %v2304, 0
  %v2337 = vsel %vm481, %v2306, 0
  %v2339 = vsel %vm481, %v2308, 0
  %v2341 = vsel %vm481, %v2310, 0
  %v2343 = vsel %vm481, %v2312, 0
  %2345 = vmatpush.xpose.msra.mxu0 0.0
  %2346 = vmatpush.xpose.msra.mxu0 0.0
  %2347 = vmatpush.xpose.msra.mxu0 0.0
  %2348 = vmatpush.xpose.msra.mxu0 0.0
  %2349 = vmatpush.xpose.msra.mxu0 0.0
  %2350 = vmatpush.xpose.msra.mxu0 0.0
  %2351 = vmatpush.xpose.msra.mxu0 0.0
  %2352 = vmatpush.xpose.msra.mxu0 0.0
  %2353 = vmatpush.xpose.msra.mxu0 %v2343
  %2354 = vmatpush.xpose.msra.mxu0 %v2341
  %2355 = vmatpush.xpose.msra.mxu0 %v2339
  %2356 = vmatpush.xpose.msra.mxu0 %v2337
  %2357 = vmatpush.xpose.msra.mxu0 %v2335
  %2358 = vmatpush.xpose.msra.mxu0 %v2333
  %2359 = vmatpush.xpose.msra.mxu0 %v2331
  %2360 = vmatpush.xpose.msra.mxu0 %v2329
  %2361 = vmatmul.f32.gmra.mxu0 %v2313
  %v2362 = vpop.f32.mrf.mxu0
  %v2363 = vadd.f32 0.0, %v2362
  %2364 = vmatmul.f32.gmra.mxu0 %v2315
  %v2365 = vpop.f32.mrf.mxu0
  %v2366 = vadd.f32 0.0, %v2365
  %2367 = vmatmul.f32.gmra.mxu0 %v2317
  %v2368 = vpop.f32.mrf.mxu0
  %v2369 = vadd.f32 0.0, %v2368
  %2370 = vmatmul.f32.gmra.mxu0 %v2319
  %v2371 = vpop.f32.mrf.mxu0
  %v2372 = vadd.f32 0.0, %v2371
  %2373 = vmatmul.f32.gmra.mxu0 %v2321
  %v2374 = vpop.f32.mrf.mxu0
  %v2375 = vadd.f32 0.0, %v2374
  %2376 = vmatmul.f32.gmra.mxu0 %v2323
  %v2377 = vpop.f32.mrf.mxu0
  %v2378 = vadd.f32 0.0, %v2377
  %2379 = vmatmul.f32.gmra.mxu0 %v2325
  %v2380 = vpop.f32.mrf.mxu0
  %v2381 = vadd.f32 0.0, %v2380
  %2382 = vmatmul.f32.gmra.mxu0 %v2327
  %v2383 = vpop.f32.mrf.mxu0
  %v2384 = vadd.f32 0.0, %v2383
  %2385 = vdwg.mxu0
  %v2386 = vmul.f32 %v2363, 0.35355338
  %v2387 = vmul.f32 %v2366, 0.35355338
  %v2388 = vmul.f32 %v2369, 0.35355338
  %v2389 = vmul.f32 %v2372, 0.35355338
  %v2390 = vmul.f32 %v2375, 0.35355338
  %v2391 = vmul.f32 %v2378, 0.35355338
  %v2392 = vmul.f32 %v2381, 0.35355338
  %v2393 = vmul.f32 %v2384, 0.35355338
  %v2394 = vadd.f32 %v2386, %v205
  %v2395 = vadd.f32 %v2387, %v206
  %v2396 = vadd.f32 %v2388, %v207
  %v2397 = vadd.f32 %v2389, %v208
  %v2398 = vadd.f32 %v2390, %v209
  %v2399 = vadd.f32 %v2391, %v210
  %v2400 = vadd.f32 %v2392, %v211
  %v2401 = vadd.f32 %v2393, %v212
  %v2402 = vsel %vm571, %v2394, -inf
  %2403 = vmax.xlane.f32.xlu0 %v2402
  %v2404 = vpop.xlane.xlu0 %2403
  %v2405 = vsel %vm571, %v2395, -inf
  %2406 = vmax.xlane.f32.xlu0 %v2405
  %v2407 = vpop.xlane.xlu0 %2406
  %v2408 = vsel %vm571, %v2396, -inf
  %2409 = vmax.xlane.f32.xlu0 %v2408
  %v2410 = vpop.xlane.xlu0 %2409
  %v2411 = vsel %vm571, %v2397, -inf
  %2412 = vmax.xlane.f32.xlu0 %v2411
  %v2413 = vpop.xlane.xlu0 %2412
  %v2414 = vsel %vm571, %v2398, -inf
  %2415 = vmax.xlane.f32.xlu0 %v2414
  %v2416 = vpop.xlane.xlu0 %2415
  %v2417 = vsel %vm571, %v2399, -inf
  %2418 = vmax.xlane.f32.xlu0 %v2417
  %v2419 = vpop.xlane.xlu0 %2418
  %v2420 = vsel %vm571, %v2400, -inf
  %2421 = vmax.xlane.f32.xlu0 %v2420
  %v2422 = vpop.xlane.xlu0 %2421
  %v2423 = vsel %vm571, %v2401, -inf
  %2424 = vmax.xlane.f32.xlu0 %v2423
  %v2425 = vpop.xlane.xlu0 %2424
  %v2426 = vsub.f32 %v2394, %v2404
  %v2427 = vsub.f32 %v2395, %v2407
  %v2428 = vsub.f32 %v2396, %v2410
  %v2429 = vsub.f32 %v2397, %v2413
  %v2430 = vsub.f32 %v2398, %v2416
  %v2431 = vsub.f32 %v2399, %v2419
  %v2432 = vsub.f32 %v2400, %v2422
  %v2433 = vsub.f32 %v2401, %v2425
  %v2434 = vmul.f32 %v2426, 1.442695
  %v2435 = vpow.pop %v2434
  %v2436 = vmul.f32 %v2427, 1.442695
  %v2437 = vpow.pop %v2436
  %v2438 = vmul.f32 %v2428, 1.442695
  %v2439 = vpow.pop %v2438
  %v2440 = vmul.f32 %v2429, 1.442695
  %v2441 = vpow.pop %v2440
  %v2442 = vmul.f32 %v2430, 1.442695
  %v2443 = vpow.pop %v2442
  %v2444 = vmul.f32 %v2431, 1.442695
  %v2445 = vpow.pop %v2444
  %v2446 = vmul.f32 %v2432, 1.442695
  %v2447 = vpow.pop %v2446
  %v2448 = vmul.f32 %v2433, 1.442695
  %v2449 = vpow.pop %v2448
  %v2450 = vsel %vm571, %v2435, 0.0
  %2451 = vadd.xlane.f32.xlu0 %v2450
  %v2452 = vpop.xlane.xlu0 %2451
  %v2453 = vsel %vm571, %v2437, 0.0
  %2454 = vadd.xlane.f32.xlu0 %v2453
  %v2455 = vpop.xlane.xlu0 %2454
  %v2456 = vsel %vm571, %v2439, 0.0
  %2457 = vadd.xlane.f32.xlu0 %v2456
  %v2458 = vpop.xlane.xlu0 %2457
  %v2459 = vsel %vm571, %v2441, 0.0
  %2460 = vadd.xlane.f32.xlu0 %v2459
  %v2461 = vpop.xlane.xlu0 %2460
  %v2462 = vsel %vm571, %v2443, 0.0
  %2463 = vadd.xlane.f32.xlu0 %v2462
  %v2464 = vpop.xlane.xlu0 %2463
  %v2465 = vsel %vm571, %v2445, 0.0
  %2466 = vadd.xlane.f32.xlu0 %v2465
  %v2467 = vpop.xlane.xlu0 %2466
  %v2468 = vsel %vm571, %v2447, 0.0
  %2469 = vadd.xlane.f32.xlu0 %v2468
  %v2470 = vpop.xlane.xlu0 %2469
  %v2471 = vsel %vm571, %v2449, 0.0
  %2472 = vadd.xlane.f32.xlu0 %v2471
  %v2473 = vpop.xlane.xlu0 %2472
  %v2474 = vrcp.pop %v2452
  %v2475 = vmul.f32 %v2452, %v2474
  %v2476 = vsub.f32 1.0, %v2475
  %v2477 = vmul.f32 %v2474, %v2476
  %v2478 = vadd.f32 %v2474, %v2477
  %vm2479 = vweird.f32 %v2452
  %vm2480 = vweird.f32 %v2474
  %vm2481 = vmor %vm2479, %vm2480
  %v2482 = vsel %vm2481, %v2474, %v2478
  %v2483 = vand.u32 2147483647, %v2452
  %vm2484 = vcmp.eq.f32.partialorder %v2483, 8.507059e+37
  %v2485 = vand.u32 %v2452, 2147483648
  %v2486 = vor.u32 1.1754944e-38, %v2485
  %v2487 = vsel %vm2484, %v2486, %v2482
  %v2488 = vrcp.pop %v2455
  %v2489 = vmul.f32 %v2455, %v2488
  %v2490 = vsub.f32 1.0, %v2489
  %v2491 = vmul.f32 %v2488, %v2490
  %v2492 = vadd.f32 %v2488, %v2491
  %vm2493 = vweird.f32 %v2455
  %vm2494 = vweird.f32 %v2488
  %vm2495 = vmor %vm2493, %vm2494
  %v2496 = vsel %vm2495, %v2488, %v2492
  %v2497 = vand.u32 2147483647, %v2455
  %vm2498 = vcmp.eq.f32.partialorder %v2497, 8.507059e+37
  %v2499 = vand.u32 %v2455, 2147483648
  %v2500 = vor.u32 1.1754944e-38, %v2499
  %v2501 = vsel %vm2498, %v2500, %v2496
  %v2502 = vrcp.pop %v2458
  %v2503 = vmul.f32 %v2458, %v2502
  %v2504 = vsub.f32 1.0, %v2503
  %v2505 = vmul.f32 %v2502, %v2504
  %v2506 = vadd.f32 %v2502, %v2505
  %vm2507 = vweird.f32 %v2458
  %vm2508 = vweird.f32 %v2502
  %vm2509 = vmor %vm2507, %vm2508
  %v2510 = vsel %vm2509, %v2502, %v2506
  %v2511 = vand.u32 2147483647, %v2458
  %vm2512 = vcmp.eq.f32.partialorder %v2511, 8.507059e+37
  %v2513 = vand.u32 %v2458, 2147483648
  %v2514 = vor.u32 1.1754944e-38, %v2513
  %v2515 = vsel %vm2512, %v2514, %v2510
  %v2516 = vrcp.pop %v2461
  %v2517 = vmul.f32 %v2461, %v2516
  %v2518 = vsub.f32 1.0, %v2517
  %v2519 = vmul.f32 %v2516, %v2518
  %v2520 = vadd.f32 %v2516, %v2519
  %vm2521 = vweird.f32 %v2461
  %vm2522 = vweird.f32 %v2516
  %vm2523 = vmor %vm2521, %vm2522
  %v2524 = vsel %vm2523, %v2516, %v2520
  %v2525 = vand.u32 2147483647, %v2461
  %vm2526 = vcmp.eq.f32.partialorder %v2525, 8.507059e+37
  %v2527 = vand.u32 %v2461, 2147483648
  %v2528 = vor.u32 1.1754944e-38, %v2527
  %v2529 = vsel %vm2526, %v2528, %v2524
  %v2530 = vrcp.pop %v2464
  %v2531 = vmul.f32 %v2464, %v2530
  %v2532 = vsub.f32 1.0, %v2531
  %v2533 = vmul.f32 %v2530, %v2532
  %v2534 = vadd.f32 %v2530, %v2533
  %vm2535 = vweird.f32 %v2464
  %vm2536 = vweird.f32 %v2530
  %vm2537 = vmor %vm2535, %vm2536
  %v2538 = vsel %vm2537, %v2530, %v2534
  %v2539 = vand.u32 2147483647, %v2464
  %vm2540 = vcmp.eq.f32.partialorder %v2539, 8.507059e+37
  %v2541 = vand.u32 %v2464, 2147483648
  %v2542 = vor.u32 1.1754944e-38, %v2541
  %v2543 = vsel %vm2540, %v2542, %v2538
  %v2544 = vrcp.pop %v2467
  %v2545 = vmul.f32 %v2467, %v2544
  %v2546 = vsub.f32 1.0, %v2545
  %v2547 = vmul.f32 %v2544, %v2546
  %v2548 = vadd.f32 %v2544, %v2547
  %vm2549 = vweird.f32 %v2467
  %vm2550 = vweird.f32 %v2544
  %vm2551 = vmor %vm2549, %vm2550
  %v2552 = vsel %vm2551, %v2544, %v2548
  %v2553 = vand.u32 2147483647, %v2467
  %vm2554 = vcmp.eq.f32.partialorder %v2553, 8.507059e+37
  %v2555 = vand.u32 %v2467, 2147483648
  %v2556 = vor.u32 1.1754944e-38, %v2555
  %v2557 = vsel %vm2554, %v2556, %v2552
  %v2558 = vrcp.pop %v2470
  %v2559 = vmul.f32 %v2470, %v2558
  %v2560 = vsub.f32 1.0, %v2559
  %v2561 = vmul.f32 %v2558, %v2560
  %v2562 = vadd.f32 %v2558, %v2561
  %vm2563 = vweird.f32 %v2470
  %vm2564 = vweird.f32 %v2558
  %vm2565 = vmor %vm2563, %vm2564
  %v2566 = vsel %vm2565, %v2558, %v2562
  %v2567 = vand.u32 2147483647, %v2470
  %vm2568 = vcmp.eq.f32.partialorder %v2567, 8.507059e+37
  %v2569 = vand.u32 %v2470, 2147483648
  %v2570 = vor.u32 1.1754944e-38, %v2569
  %v2571 = vsel %vm2568, %v2570, %v2566
  %v2572 = vrcp.pop %v2473
  %v2573 = vmul.f32 %v2473, %v2572
  %v2574 = vsub.f32 1.0, %v2573
  %v2575 = vmul.f32 %v2572, %v2574
  %v2576 = vadd.f32 %v2572, %v2575
  %vm2577 = vweird.f32 %v2473
  %vm2578 = vweird.f32 %v2572
  %vm2579 = vmor %vm2577, %vm2578
  %v2580 = vsel %vm2579, %v2572, %v2576
  %v2581 = vand.u32 2147483647, %v2473
  %vm2582 = vcmp.eq.f32.partialorder %v2581, 8.507059e+37
  %v2583 = vand.u32 %v2473, 2147483648
  %v2584 = vor.u32 1.1754944e-38, %v2583
  %v2585 = vsel %vm2582, %v2584, %v2580
  %v2586 = vmul.f32 %v2435, %v2487
  %v2587 = vmul.f32 %v2437, %v2501
  %v2588 = vmul.f32 %v2439, %v2515
  %v2589 = vmul.f32 %v2441, %v2529
  %v2590 = vmul.f32 %v2443, %v2543
  %v2591 = vmul.f32 %v2445, %v2557
  %v2592 = vmul.f32 %v2447, %v2571
  %v2593 = vmul.f32 %v2449, %v2585
  %2594 = vrot.lane.b32.xlu0 %v2259, 112
  %v2595 = vpop.permute.xlu0 %2594
  %2596 = vrot.lane.b32.xlu0 %v2262, 112
  %v2597 = vpop.permute.xlu0 %2596
  %2598 = vrot.lane.b32.xlu0 %v2265, 112
  %v2599 = vpop.permute.xlu0 %2598
  %2600 = vrot.lane.b32.xlu0 %v2268, 112
  %v2601 = vpop.permute.xlu0 %2600
  %2602 = vrot.lane.b32.xlu0 %v2271, 112
  %v2603 = vpop.permute.xlu0 %2602
  %2604 = vrot.lane.b32.xlu0 %v2274, 112
  %v2605 = vpop.permute.xlu0 %2604
  %2606 = vrot.lane.b32.xlu0 %v2277, 112
  %v2607 = vpop.permute.xlu0 %2606
  %2608 = vrot.lane.b32.xlu0 %v2280, 112
  %v2609 = vpop.permute.xlu0 %2608
  %v2619 = vsel %vm571, %v2586, 0
  %v2622 = vsel %vm571, %v2587, 0
  %v2625 = vsel %vm571, %v2588, 0
  %v2628 = vsel %vm571, %v2589, 0
  %v2631 = vsel %vm571, %v2590, 0
  %v2634 = vsel %vm571, %v2591, 0
  %v2637 = vsel %vm571, %v2592, 0
  %v2640 = vsel %vm571, %v2593, 0
  %2642 = vmatpush.msra.mxu0 0.0
  %2643 = vmatpush.msra.mxu0 0.0
  %2644 = vmatpush.msra.mxu0 0.0
  %2645 = vmatpush.msra.mxu0 0.0
  %2646 = vmatpush.msra.mxu0 0.0
  %2647 = vmatpush.msra.mxu0 0.0
  %2648 = vmatpush.msra.mxu0 0.0
  %2649 = vmatpush.msra.mxu0 0.0
  %2650 = vmatpush.msra.mxu0 %v2609
  %2651 = vmatpush.msra.mxu0 %v2607
  %2652 = vmatpush.msra.mxu0 %v2605
  %2653 = vmatpush.msra.mxu0 %v2603
  %2654 = vmatpush.msra.mxu0 %v2601
  %2655 = vmatpush.msra.mxu0 %v2599
  %2656 = vmatpush.msra.mxu0 %v2597
  %2657 = vmatpush.msra.mxu0 %v2595
  %2658 = vmatmul.f32.gmra.mxu0 %v2619
  %v2659 = vpop.f32.mrf.mxu0
  %v2660 = vadd.f32 0.0, %v2659
  %2661 = vmatmul.f32.gmra.mxu0 %v2622
  %v2662 = vpop.f32.mrf.mxu0
  %v2663 = vadd.f32 0.0, %v2662
  %2664 = vmatmul.f32.gmra.mxu0 %v2625
  %v2665 = vpop.f32.mrf.mxu0
  %v2666 = vadd.f32 0.0, %v2665
  %2667 = vmatmul.f32.gmra.mxu0 %v2628
  %v2668 = vpop.f32.mrf.mxu0
  %v2669 = vadd.f32 0.0, %v2668
  %2670 = vmatmul.f32.gmra.mxu0 %v2631
  %v2671 = vpop.f32.mrf.mxu0
  %v2672 = vadd.f32 0.0, %v2671
  %2673 = vmatmul.f32.gmra.mxu0 %v2634
  %v2674 = vpop.f32.mrf.mxu0
  %v2675 = vadd.f32 0.0, %v2674
  %2676 = vmatmul.f32.gmra.mxu0 %v2637
  %v2677 = vpop.f32.mrf.mxu0
  %v2678 = vadd.f32 0.0, %v2677
  %2679 = vmatmul.f32.gmra.mxu0 %v2640
  %v2680 = vpop.f32.mrf.mxu0
  %v2681 = vadd.f32 0.0, %v2680
  %2682 = vdwg.mxu0
  %v2684 = vsel %vm481, %v2660, 0
  %v2687 = vsel %vm481, %v2663, 0
  %v2690 = vsel %vm481, %v2666, 0
  %v2693 = vsel %vm481, %v2669, 0
  %v2696 = vsel %vm481, %v2672, 0
  %v2699 = vsel %vm481, %v2675, 0
  %v2702 = vsel %vm481, %v2678, 0
  %v2705 = vsel %vm481, %v2681, 0
  %2707 = vmatpush.msra.mxu0 0.0
  %2708 = vmatpush.msra.mxu0 0.0
  %2709 = vmatpush.msra.mxu0 0.0
  %2710 = vmatpush.msra.mxu0 0.0
  %2711 = vmatpush.msra.mxu0 0.0
  %2712 = vmatpush.msra.mxu0 0.0
  %2713 = vmatpush.msra.mxu0 0.0
  %2714 = vmatpush.msra.mxu0 0.0
  %2715 = vmatpush.msra.mxu0 0.0
  %2716 = vmatpush.msra.mxu0 0.0
  %2717 = vmatpush.msra.mxu0 0.0
  %2718 = vmatpush.msra.mxu0 0.0
  %2719 = vmatpush.msra.mxu0 0.0
  %2720 = vmatpush.msra.mxu0 0.0
  %2721 = vmatpush.msra.mxu0 0.0
  %2722 = vmatpush.msra.mxu0 %v213
  %2723 = vmatmul.f32.gmra.mxu0 %v2684
  %v2724 = vpop.f32.mrf.mxu0
  %v2725 = vadd.f32 0.0, %v2724
  %2726 = vmatmul.f32.gmra.mxu0 %v2687
  %v2727 = vpop.f32.mrf.mxu0
  %v2728 = vadd.f32 0.0, %v2727
  %2729 = vmatmul.f32.gmra.mxu0 %v2690
  %v2730 = vpop.f32.mrf.mxu0
  %v2731 = vadd.f32 0.0, %v2730
  %2732 = vmatmul.f32.gmra.mxu0 %v2693
  %v2733 = vpop.f32.mrf.mxu0
  %v2734 = vadd.f32 0.0, %v2733
  %2735 = vmatmul.f32.gmra.mxu0 %v2696
  %v2736 = vpop.f32.mrf.mxu0
  %v2737 = vadd.f32 0.0, %v2736
  %2738 = vmatmul.f32.gmra.mxu0 %v2699
  %v2739 = vpop.f32.mrf.mxu0
  %v2740 = vadd.f32 0.0, %v2739
  %2741 = vmatmul.f32.gmra.mxu0 %v2702
  %v2742 = vpop.f32.mrf.mxu0
  %v2743 = vadd.f32 0.0, %v2742
  %2744 = vmatmul.f32.gmra.mxu0 %v2705
  %v2745 = vpop.f32.mrf.mxu0
  %v2746 = vadd.f32 0.0, %v2745
  %2747 = vdwg.mxu0
  %v2748 = vmul.f32 %v2725, %v214
  %v2749 = vmul.f32 %v2728, %v215
  %v2750 = vmul.f32 %v2731, %v216
  %v2751 = vmul.f32 %v2734, %v217
  %v2752 = vmul.f32 %v2737, %v218
  %v2753 = vmul.f32 %v2740, %v219
  %v2754 = vmul.f32 %v2743, %v220
  %v2755 = vmul.f32 %v2746, %v221
  %v2757 = vsel %vm282, %v2748, 0
  %v2760 = vsel %vm282, %v2749, 0
  %v2763 = vsel %vm282, %v2750, 0
  %v2766 = vsel %vm282, %v2751, 0
  %v2769 = vsel %vm282, %v2752, 0
  %v2772 = vsel %vm282, %v2753, 0
  %v2775 = vsel %vm282, %v2754, 0
  %v2778 = vsel %vm282, %v2755, 0
  %2780 = vmatpush.msra.mxu0 0.0
  %2781 = vmatpush.msra.mxu0 0.0
  %2782 = vmatpush.msra.mxu0 0.0
  %2783 = vmatpush.msra.mxu0 0.0
  %2784 = vmatpush.msra.mxu0 0.0
  %2785 = vmatpush.msra.mxu0 0.0
  %2786 = vmatpush.msra.mxu0 0.0
  %2787 = vmatpush.msra.mxu0 0.0
  %2788 = vmatpush.msra.mxu0 0.0
  %2789 = vmatpush.msra.mxu0 0.0
  %2790 = vmatpush.msra.mxu0 0.0
  %2791 = vmatpush.msra.mxu0 0.0
  %2792 = vmatpush.msra.mxu0 %v2286
  %2793 = vmatpush.msra.mxu0 %v2285
  %2794 = vmatpush.msra.mxu0 %v2284
  %2795 = vmatpush.msra.mxu0 %v2283
  %2796 = vmatmul.f32.gmra.mxu0 %v2757
  %v2797 = vpop.f32.mrf.mxu0
  %v2798 = vadd.f32 0.0, %v2797
  %2799 = vmatmul.f32.gmra.mxu0 %v2760
  %v2800 = vpop.f32.mrf.mxu0
  %v2801 = vadd.f32 0.0, %v2800
  %2802 = vmatmul.f32.gmra.mxu0 %v2763
  %v2803 = vpop.f32.mrf.mxu0
  %v2804 = vadd.f32 0.0, %v2803
  %2805 = vmatmul.f32.gmra.mxu0 %v2766
  %v2806 = vpop.f32.mrf.mxu0
  %v2807 = vadd.f32 0.0, %v2806
  %2808 = vmatmul.f32.gmra.mxu0 %v2769
  %v2809 = vpop.f32.mrf.mxu0
  %v2810 = vadd.f32 0.0, %v2809
  %2811 = vmatmul.f32.gmra.mxu0 %v2772
  %v2812 = vpop.f32.mrf.mxu0
  %v2813 = vadd.f32 0.0, %v2812
  %2814 = vmatmul.f32.gmra.mxu0 %v2775
  %v2815 = vpop.f32.mrf.mxu0
  %v2816 = vadd.f32 0.0, %v2815
  %2817 = vmatmul.f32.gmra.mxu0 %v2778
  %v2818 = vpop.f32.mrf.mxu0
  %v2819 = vadd.f32 0.0, %v2818
  %2820 = vdwg.mxu0
  %v2822 = vperm.slane %v2288, 0
  %2824 = vmatpush.msra.mxu0 0.0
  %2825 = vmatpush.msra.mxu0 0.0
  %2826 = vmatpush.msra.mxu0 0.0
  %2827 = vmatpush.msra.mxu0 0.0
  %2828 = vmatpush.msra.mxu0 0.0
  %2829 = vmatpush.msra.mxu0 0.0
  %2830 = vmatpush.msra.mxu0 0.0
  %2831 = vmatpush.msra.mxu0 0.0
  %2832 = vmatpush.msra.mxu0 %v2819
  %2833 = vmatpush.msra.mxu0 %v2816
  %2834 = vmatpush.msra.mxu0 %v2813
  %2835 = vmatpush.msra.mxu0 %v2810
  %2836 = vmatpush.msra.mxu0 %v2807
  %2837 = vmatpush.msra.mxu0 %v2804
  %2838 = vmatpush.msra.mxu0 %v2801
  %2839 = vmatpush.msra.mxu0 %v2798
  %2840 = vmatmul.f32.gmra.mxu0 %v995
  %v2841 = vpop.f32.mrf.mxu0
  %v2842 = vadd.f32 %v2822, %v2841
  %2843 = vmatmul.f32.gmra.mxu0 %v998
  %v2844 = vpop.f32.mrf.mxu0
  %v2845 = vadd.f32 %v2822, %v2844
  %2846 = vdwg.mxu0
  %v2847 = vadd.f32 %v2123, %v2842
  %v2848 = vadd.f32 %v2124, %v2845
  %v2849 = vsel %vm282, %v2847, 0.0
  %2850 = vadd.xlane.f32.xlu0 %v2849
  %v2851 = vpop.xlane.xlu0 %2850
  %v2852 = vsel %vm282, %v2848, 0.0
  %2853 = vadd.xlane.f32.xlu0 %v2852
  %v2854 = vpop.xlane.xlu0 %2853
  %v2855 = vmul.f32 %v2851, %v1037
  %v2856 = vmul.f32 %v2854, %v1037
  %v2857 = vsub.f32 %v2847, %v2855
  %v2858 = vsub.f32 %v2848, %v2856
  %v2859 = vmul.f32 %v2857, %v2857
  %v2860 = vmul.f32 %v2858, %v2858
  %v2861 = vsel %vm282, %v2859, 0.0
  %2862 = vadd.xlane.f32.xlu0 %v2861
  %v2863 = vpop.xlane.xlu0 %2862
  %v2864 = vsel %vm282, %v2860, 0.0
  %2865 = vadd.xlane.f32.xlu0 %v2864
  %v2866 = vpop.xlane.xlu0 %2865
  %v2867 = vmul.f32 %v2863, %v1037
  %v2868 = vmul.f32 %v2866, %v1037
  %v2869 = vadd.f32 %v2867, 1e-05
  %v2870 = vadd.f32 %v2868, 1e-05
  %v2871 = vrsqrt.pop %v2869
  %v2872 = vmul.f32 %v2871, %v2869
  %v2873 = vmul.f32 %v2872, %v2871
  %v2874 = vmul.f32 0.5, %v2873
  %v2875 = vsub.f32 1.5, %v2874
  %v2876 = vmul.f32 %v2871, %v2875
  %vm2877 = vweird.f32 %v2869
  %vm2878 = vweird.f32 %v2871
  %vm2879 = vmor %vm2877, %vm2878
  %v2880 = vsel %vm2879, %v2871, %v2876
  %v2881 = vrsqrt.pop %v2870
  %v2882 = vmul.f32 %v2881, %v2870
  %v2883 = vmul.f32 %v2882, %v2881
  %v2884 = vmul.f32 0.5, %v2883
  %v2885 = vsub.f32 1.5, %v2884
  %v2886 = vmul.f32 %v2881, %v2885
  %vm2887 = vweird.f32 %v2870
  %vm2888 = vweird.f32 %v2881
  %vm2889 = vmor %vm2887, %vm2888
  %v2890 = vsel %vm2889, %v2881, %v2886
  %v2891 = vmul.f32 %v2857, %v2880
  %v2892 = vmul.f32 %v2858, %v2890
  %v2894 = vperm.slane %v2126, 0
  %v2896 = vmul.f32 %v2891, %v2894
  %v2897 = vmul.f32 %v2892, %v2894
  %v2899 = vperm.slane %v2128, 0
  %v2901 = vadd.f32 %v2896, %v2899
  %v2902 = vadd.f32 %v2897, %v2899
  %s2903 = scalar_lea.vmem %s39, 32
  %v2904 = vld [vmem:[%s2903] sm:$0xff]
  %v2905 = vld [vmem:[%s2903 + $0x8] sm:$0xff]
  %v2906 = vld [vmem:[%s2903 + $0x10] sm:$0xff]
  %v2907 = vld [vmem:[%s2903 + $0x18] sm:$0xff]
  %s2908 = scalar_lea.vmem %s41, 1
  %v2909 = vld [vmem:[%s2908] sm:$0x1]
  %v2911 = vperm.slane %v2909, 0
  %v2914 = vsel %vm282, %v2901, 0
  %v2917 = vsel %vm282, %v2902, 0
  %2919 = vmatpush.msra.mxu0 0.0
  %2920 = vmatpush.msra.mxu0 0.0
  %2921 = vmatpush.msra.mxu0 0.0
  %2922 = vmatpush.msra.mxu0 0.0
  %2923 = vmatpush.msra.mxu0 0.0
  %2924 = vmatpush.msra.mxu0 0.0
  %2925 = vmatpush.msra.mxu0 0.0
  %2926 = vmatpush.msra.mxu0 0.0
  %2927 = vmatpush.msra.mxu0 0.0
  %2928 = vmatpush.msra.mxu0 0.0
  %2929 = vmatpush.msra.mxu0 0.0
  %2930 = vmatpush.msra.mxu0 0.0
  %2931 = vmatpush.msra.mxu0 %v2907
  %2932 = vmatpush.msra.mxu0 %v2906
  %2933 = vmatpush.msra.mxu0 %v2905
  %2934 = vmatpush.msra.mxu0 %v2904
  %2935 = vmatmul.f32.gmra.mxu0 %v2914
  %v2936 = vpop.f32.mrf.mxu0
  %v2937 = vadd.f32 %v2911, %v2936
  %2938 = vmatmul.f32.gmra.mxu0 %v2917
  %v2939 = vpop.f32.mrf.mxu0
  %v2940 = vadd.f32 %v2911, %v2939
  %2941 = vdwg.mxu0
  %s2942 = scalar_lea.vmem %s43, 32
  %v2943 = vld [vmem:[%s2942] sm:$0xff]
  %v2944 = vld [vmem:[%s2942 + $0x8] sm:$0xff]
  %v2945 = vld [vmem:[%s2942 + $0x10] sm:$0xff]
  %v2946 = vld [vmem:[%s2942 + $0x18] sm:$0xff]
  %s2947 = scalar_lea.vmem %s45, 1
  %v2948 = vld [vmem:[%s2947] sm:$0x1]
  %v2950 = vperm.slane %v2948, 0
  %2952 = vmatpush.msra.mxu0 0.0
  %2953 = vmatpush.msra.mxu0 0.0
  %2954 = vmatpush.msra.mxu0 0.0
  %2955 = vmatpush.msra.mxu0 0.0
  %2956 = vmatpush.msra.mxu0 0.0
  %2957 = vmatpush.msra.mxu0 0.0
  %2958 = vmatpush.msra.mxu0 0.0
  %2959 = vmatpush.msra.mxu0 0.0
  %2960 = vmatpush.msra.mxu0 0.0
  %2961 = vmatpush.msra.mxu0 0.0
  %2962 = vmatpush.msra.mxu0 0.0
  %2963 = vmatpush.msra.mxu0 0.0
  %2964 = vmatpush.msra.mxu0 %v2946
  %2965 = vmatpush.msra.mxu0 %v2945
  %2966 = vmatpush.msra.mxu0 %v2944
  %2967 = vmatpush.msra.mxu0 %v2943
  %2968 = vmatmul.f32.gmra.mxu0 %v1132
  %v2969 = vpop.f32.mrf.mxu0
  %v2970 = vadd.f32 %v2950, %v2969
  %2971 = vmatmul.f32.gmra.mxu0 %v1135
  %v2972 = vpop.f32.mrf.mxu0
  %v2973 = vadd.f32 %v2950, %v2972
  %2974 = vdwg.mxu0
  %2975 = vmatpush.msra.mxu0 0.0
  %2976 = vmatpush.msra.mxu0 0.0
  %2977 = vmatpush.msra.mxu0 0.0
  %2978 = vmatpush.msra.mxu0 0.0
  %2979 = vmatpush.msra.mxu0 0.0
  %2980 = vmatpush.msra.mxu0 0.0
  %2981 = vmatpush.msra.mxu0 0.0
  %2982 = vmatpush.msra.mxu0 0.0
  %2983 = vmatpush.msra.mxu0 0.0
  %2984 = vmatpush.msra.mxu0 0.0
  %2985 = vmatpush.msra.mxu0 0.0
  %2986 = vmatpush.msra.mxu0 0.0
  %2987 = vmatpush.msra.mxu0 0.0
  %2988 = vmatpush.msra.mxu0 0.0
  %2989 = vmatpush.msra.mxu0 %v2940
  %2990 = vmatpush.msra.mxu0 %v2937
  %2991 = vmatmul.f32.gmra.mxu0 %v314
  %v2992 = vpop.f32.mrf.mxu0
  %v2993 = vadd.f32 0.0, %v2992
  %2994 = vmatmul.f32.gmra.mxu0 %v317
  %v2995 = vpop.f32.mrf.mxu0
  %v2996 = vadd.f32 0.0, %v2995
  %2997 = vmatmul.f32.gmra.mxu0 %v320
  %v2998 = vpop.f32.mrf.mxu0
  %v2999 = vadd.f32 0.0, %v2998
  %3000 = vmatmul.f32.gmra.mxu0 %v323
  %v3001 = vpop.f32.mrf.mxu0
  %v3002 = vadd.f32 0.0, %v3001
  %3003 = vmatmul.f32.gmra.mxu0 %v326
  %v3004 = vpop.f32.mrf.mxu0
  %v3005 = vadd.f32 0.0, %v3004
  %3006 = vmatmul.f32.gmra.mxu0 %v329
  %v3007 = vpop.f32.mrf.mxu0
  %v3008 = vadd.f32 0.0, %v3007
  %3009 = vmatmul.f32.gmra.mxu0 %v332
  %v3010 = vpop.f32.mrf.mxu0
  %v3011 = vadd.f32 0.0, %v3010
  %3012 = vmatmul.f32.gmra.mxu0 %v335
  %v3013 = vpop.f32.mrf.mxu0
  %v3014 = vadd.f32 0.0, %v3013
  %3015 = vdwg.mxu0
  %v3016 = vmul.f32 %v2993, %v244
  %v3017 = vmul.f32 %v2996, %v245
  %v3018 = vmul.f32 %v2999, %v246
  %v3019 = vmul.f32 %v3002, %v247
  %v3020 = vmul.f32 %v3005, %v248
  %v3021 = vmul.f32 %v3008, %v249
  %v3022 = vmul.f32 %v3011, %v250
  %v3023 = vmul.f32 %v3014, %v251
  %v3025 = vsel %vm282, %v3016, 0
  %v3028 = vsel %vm282, %v3017, 0
  %v3031 = vsel %vm282, %v3018, 0
  %v3034 = vsel %vm282, %v3019, 0
  %v3037 = vsel %vm282, %v3020, 0
  %v3040 = vsel %vm282, %v3021, 0
  %v3043 = vsel %vm282, %v3022, 0
  %v3046 = vsel %vm282, %v3023, 0
  %3048 = vmatpush.msra.mxu0 0.0
  %3049 = vmatpush.msra.mxu0 0.0
  %3050 = vmatpush.msra.mxu0 0.0
  %3051 = vmatpush.msra.mxu0 0.0
  %3052 = vmatpush.msra.mxu0 0.0
  %3053 = vmatpush.msra.mxu0 0.0
  %3054 = vmatpush.msra.mxu0 0.0
  %3055 = vmatpush.msra.mxu0 0.0
  %3056 = vmatpush.msra.mxu0 0.0
  %3057 = vmatpush.msra.mxu0 0.0
  %3058 = vmatpush.msra.mxu0 0.0
  %3059 = vmatpush.msra.mxu0 0.0
  %3060 = vmatpush.msra.mxu0 %v255
  %3061 = vmatpush.msra.mxu0 %v254
  %3062 = vmatpush.msra.mxu0 %v253
  %3063 = vmatpush.msra.mxu0 %v252
  %3064 = vmatmul.f32.gmra.mxu0 %v3025
  %v3065 = vpop.f32.mrf.mxu0
  %v3066 = vadd.f32 0.0, %v3065
  %3067 = vmatmul.f32.gmra.mxu0 %v3028
  %v3068 = vpop.f32.mrf.mxu0
  %v3069 = vadd.f32 0.0, %v3068
  %3070 = vmatmul.f32.gmra.mxu0 %v3031
  %v3071 = vpop.f32.mrf.mxu0
  %v3072 = vadd.f32 0.0, %v3071
  %3073 = vmatmul.f32.gmra.mxu0 %v3034
  %v3074 = vpop.f32.mrf.mxu0
  %v3075 = vadd.f32 0.0, %v3074
  %3076 = vmatmul.f32.gmra.mxu0 %v3037
  %v3077 = vpop.f32.mrf.mxu0
  %v3078 = vadd.f32 0.0, %v3077
  %3079 = vmatmul.f32.gmra.mxu0 %v3040
  %v3080 = vpop.f32.mrf.mxu0
  %v3081 = vadd.f32 0.0, %v3080
  %3082 = vmatmul.f32.gmra.mxu0 %v3043
  %v3083 = vpop.f32.mrf.mxu0
  %v3084 = vadd.f32 0.0, %v3083
  %3085 = vmatmul.f32.gmra.mxu0 %v3046
  %v3086 = vpop.f32.mrf.mxu0
  %v3087 = vadd.f32 0.0, %v3086
  %3088 = vdwg.mxu0
  %3089 = vmatpush.msra.mxu0 0.0
  %3090 = vmatpush.msra.mxu0 0.0
  %3091 = vmatpush.msra.mxu0 0.0
  %3092 = vmatpush.msra.mxu0 0.0
  %3093 = vmatpush.msra.mxu0 0.0
  %3094 = vmatpush.msra.mxu0 0.0
  %3095 = vmatpush.msra.mxu0 0.0
  %3096 = vmatpush.msra.mxu0 0.0
  %3097 = vmatpush.msra.mxu0 0.0
  %3098 = vmatpush.msra.mxu0 0.0
  %3099 = vmatpush.msra.mxu0 0.0
  %3100 = vmatpush.msra.mxu0 0.0
  %3101 = vmatpush.msra.mxu0 0.0
  %3102 = vmatpush.msra.mxu0 0.0
  %3103 = vmatpush.msra.mxu0 %v2973
  %3104 = vmatpush.msra.mxu0 %v2970
  %3105 = vmatmul.f32.gmra.mxu0 %v314
  %v3106 = vpop.f32.mrf.mxu0
  %v3107 = vadd.f32 0.0, %v3106
  %3108 = vmatmul.f32.gmra.mxu0 %v317
  %v3109 = vpop.f32.mrf.mxu0
  %v3110 = vadd.f32 0.0, %v3109
  %3111 = vmatmul.f32.gmra.mxu0 %v320
  %v3112 = vpop.f32.mrf.mxu0
  %v3113 = vadd.f32 0.0, %v3112
  %3114 = vmatmul.f32.gmra.mxu0 %v323
  %v3115 = vpop.f32.mrf.mxu0
  %v3116 = vadd.f32 0.0, %v3115
  %3117 = vmatmul.f32.gmra.mxu0 %v326
  %v3118 = vpop.f32.mrf.mxu0
  %v3119 = vadd.f32 0.0, %v3118
  %3120 = vmatmul.f32.gmra.mxu0 %v329
  %v3121 = vpop.f32.mrf.mxu0
  %v3122 = vadd.f32 0.0, %v3121
  %3123 = vmatmul.f32.gmra.mxu0 %v332
  %v3124 = vpop.f32.mrf.mxu0
  %v3125 = vadd.f32 0.0, %v3124
  %3126 = vmatmul.f32.gmra.mxu0 %v335
  %v3127 = vpop.f32.mrf.mxu0
  %v3128 = vadd.f32 0.0, %v3127
  %3129 = vdwg.mxu0
  %v3130 = vmul.f32 %v3107, %v256
  %v3131 = vmul.f32 %v3110, %v257
  %v3132 = vmul.f32 %v3113, %v258
  %v3133 = vmul.f32 %v3116, %v259
  %v3134 = vmul.f32 %v3119, %v260
  %v3135 = vmul.f32 %v3122, %v261
  %v3136 = vmul.f32 %v3125, %v262
  %v3137 = vmul.f32 %v3128, %v263
  %v3139 = vsel %vm571, %v3130, 0
  %v3142 = vsel %vm571, %v3131, 0
  %v3145 = vsel %vm571, %v3132, 0
  %v3148 = vsel %vm571, %v3133, 0
  %v3151 = vsel %vm571, %v3134, 0
  %v3154 = vsel %vm571, %v3135, 0
  %v3157 = vsel %vm571, %v3136, 0
  %v3160 = vsel %vm571, %v3137, 0
  %3162 = vmatpush.msra.mxu0 0.0
  %3163 = vmatpush.msra.mxu0 0.0
  %3164 = vmatpush.msra.mxu0 0.0
  %3165 = vmatpush.msra.mxu0 0.0
  %3166 = vmatpush.msra.mxu0 0.0
  %3167 = vmatpush.msra.mxu0 0.0
  %3168 = vmatpush.msra.mxu0 0.0
  %3169 = vmatpush.msra.mxu0 0.0
  %3170 = vmatpush.msra.mxu0 %v271
  %3171 = vmatpush.msra.mxu0 %v270
  %3172 = vmatpush.msra.mxu0 %v269
  %3173 = vmatpush.msra.mxu0 %v268
  %3174 = vmatpush.msra.mxu0 %v267
  %3175 = vmatpush.msra.mxu0 %v266
  %3176 = vmatpush.msra.mxu0 %v265
  %3177 = vmatpush.msra.mxu0 %v264
  %3178 = vmatmul.f32.gmra.mxu0 %v3139
  %v3179 = vpop.f32.mrf.mxu0
  %v3180 = vadd.f32 0.0, %v3179
  %3181 = vmatmul.f32.gmra.mxu0 %v3142
  %v3182 = vpop.f32.mrf.mxu0
  %v3183 = vadd.f32 0.0, %v3182
  %3184 = vmatmul.f32.gmra.mxu0 %v3145
  %v3185 = vpop.f32.mrf.mxu0
  %v3186 = vadd.f32 0.0, %v3185
  %3187 = vmatmul.f32.gmra.mxu0 %v3148
  %v3188 = vpop.f32.mrf.mxu0
  %v3189 = vadd.f32 0.0, %v3188
  %3190 = vmatmul.f32.gmra.mxu0 %v3151
  %v3191 = vpop.f32.mrf.mxu0
  %v3192 = vadd.f32 0.0, %v3191
  %3193 = vmatmul.f32.gmra.mxu0 %v3154
  %v3194 = vpop.f32.mrf.mxu0
  %v3195 = vadd.f32 0.0, %v3194
  %3196 = vmatmul.f32.gmra.mxu0 %v3157
  %v3197 = vpop.f32.mrf.mxu0
  %v3198 = vadd.f32 0.0, %v3197
  %3199 = vmatmul.f32.gmra.mxu0 %v3160
  %v3200 = vpop.f32.mrf.mxu0
  %v3201 = vadd.f32 0.0, %v3200
  %3202 = vdwg.mxu0
  %s3203 = scalar_lea.vmem %s47, 32
  %v3204 = vld [vmem:[%s3203] sm:$0xff]
  %v3205 = vld [vmem:[%s3203 + $0x8] sm:$0xff]
  %v3206 = vld [vmem:[%s3203 + $0x10] sm:$0xff]
  %v3207 = vld [vmem:[%s3203 + $0x18] sm:$0xff]
  %s3208 = scalar_lea.vmem %s49, 1
  %v3209 = vld [vmem:[%s3208] sm:$0x1]
  %v3211 = vsel %vm481, %v3066, 0
  %v3214 = vsel %vm481, %v3069, 0
  %v3217 = vsel %vm481, %v3072, 0
  %v3220 = vsel %vm481, %v3075, 0
  %v3223 = vsel %vm481, %v3078, 0
  %v3226 = vsel %vm481, %v3081, 0
  %v3229 = vsel %vm481, %v3084, 0
  %v3232 = vsel %vm481, %v3087, 0
  %v3235 = vsel %vm481, %v3180, 0
  %v3238 = vsel %vm481, %v3183, 0
  %v3241 = vsel %vm481, %v3186, 0
  %v3244 = vsel %vm481, %v3189, 0
  %v3247 = vsel %vm481, %v3192, 0
  %v3250 = vsel %vm481, %v3195, 0
  %v3253 = vsel %vm481, %v3198, 0
  %v3256 = vsel %vm481, %v3201, 0
  %3258 = vmatpush.xpose.msra.mxu0 0.0
  %3259 = vmatpush.xpose.msra.mxu0 0.0
  %3260 = vmatpush.xpose.msra.mxu0 0.0
  %3261 = vmatpush.xpose.msra.mxu0 0.0
  %3262 = vmatpush.xpose.msra.mxu0 0.0
  %3263 = vmatpush.xpose.msra.mxu0 0.0
  %3264 = vmatpush.xpose.msra.mxu0 0.0
  %3265 = vmatpush.xpose.msra.mxu0 0.0
  %3266 = vmatpush.xpose.msra.mxu0 %v3256
  %3267 = vmatpush.xpose.msra.mxu0 %v3253
  %3268 = vmatpush.xpose.msra.mxu0 %v3250
  %3269 = vmatpush.xpose.msra.mxu0 %v3247
  %3270 = vmatpush.xpose.msra.mxu0 %v3244
  %3271 = vmatpush.xpose.msra.mxu0 %v3241
  %3272 = vmatpush.xpose.msra.mxu0 %v3238
  %3273 = vmatpush.xpose.msra.mxu0 %v3235
  %3274 = vmatmul.f32.gmra.mxu0 %v3211
  %v3275 = vpop.f32.mrf.mxu0
  %v3276 = vadd.f32 0.0, %v3275
  %3277 = vmatmul.f32.gmra.mxu0 %v3214
  %v3278 = vpop.f32.mrf.mxu0
  %v3279 = vadd.f32 0.0, %v3278
  %3280 = vmatmul.f32.gmra.mxu0 %v3217
  %v3281 = vpop.f32.mrf.mxu0
  %v3282 = vadd.f32 0.0, %v3281
  %3283 = vmatmul.f32.gmra.mxu0 %v3220
  %v3284 = vpop.f32.mrf.mxu0
  %v3285 = vadd.f32 0.0, %v3284
  %3286 = vmatmul.f32.gmra.mxu0 %v3223
  %v3287 = vpop.f32.mrf.mxu0
  %v3288 = vadd.f32 0.0, %v3287
  %3289 = vmatmul.f32.gmra.mxu0 %v3226
  %v3290 = vpop.f32.mrf.mxu0
  %v3291 = vadd.f32 0.0, %v3290
  %3292 = vmatmul.f32.gmra.mxu0 %v3229
  %v3293 = vpop.f32.mrf.mxu0
  %v3294 = vadd.f32 0.0, %v3293
  %3295 = vmatmul.f32.gmra.mxu0 %v3232
  %v3296 = vpop.f32.mrf.mxu0
  %v3297 = vadd.f32 0.0, %v3296
  %3298 = vdwg.mxu0
  %v3299 = vmul.f32 %v3276, 0.35355338
  %v3300 = vmul.f32 %v3279, 0.35355338
  %v3301 = vmul.f32 %v3282, 0.35355338
  %v3302 = vmul.f32 %v3285, 0.35355338
  %v3303 = vmul.f32 %v3288, 0.35355338
  %v3304 = vmul.f32 %v3291, 0.35355338
  %v3305 = vmul.f32 %v3294, 0.35355338
  %v3306 = vmul.f32 %v3297, 0.35355338
  %v3307 = vadd.f32 %v3299, %v205
  %v3308 = vadd.f32 %v3300, %v206
  %v3309 = vadd.f32 %v3301, %v207
  %v3310 = vadd.f32 %v3302, %v208
  %v3311 = vadd.f32 %v3303, %v209
  %v3312 = vadd.f32 %v3304, %v210
  %v3313 = vadd.f32 %v3305, %v211
  %v3314 = vadd.f32 %v3306, %v212
  %v3315 = vsel %vm571, %v3307, -inf
  %3316 = vmax.xlane.f32.xlu0 %v3315
  %v3317 = vpop.xlane.xlu0 %3316
  %v3318 = vsel %vm571, %v3308, -inf
  %3319 = vmax.xlane.f32.xlu0 %v3318
  %v3320 = vpop.xlane.xlu0 %3319
  %v3321 = vsel %vm571, %v3309, -inf
  %3322 = vmax.xlane.f32.xlu0 %v3321
  %v3323 = vpop.xlane.xlu0 %3322
  %v3324 = vsel %vm571, %v3310, -inf
  %3325 = vmax.xlane.f32.xlu0 %v3324
  %v3326 = vpop.xlane.xlu0 %3325
  %v3327 = vsel %vm571, %v3311, -inf
  %3328 = vmax.xlane.f32.xlu0 %v3327
  %v3329 = vpop.xlane.xlu0 %3328
  %v3330 = vsel %vm571, %v3312, -inf
  %3331 = vmax.xlane.f32.xlu0 %v3330
  %v3332 = vpop.xlane.xlu0 %3331
  %v3333 = vsel %vm571, %v3313, -inf
  %3334 = vmax.xlane.f32.xlu0 %v3333
  %v3335 = vpop.xlane.xlu0 %3334
  %v3336 = vsel %vm571, %v3314, -inf
  %3337 = vmax.xlane.f32.xlu0 %v3336
  %v3338 = vpop.xlane.xlu0 %3337
  %v3339 = vsub.f32 %v3307, %v3317
  %v3340 = vsub.f32 %v3308, %v3320
  %v3341 = vsub.f32 %v3309, %v3323
  %v3342 = vsub.f32 %v3310, %v3326
  %v3343 = vsub.f32 %v3311, %v3329
  %v3344 = vsub.f32 %v3312, %v3332
  %v3345 = vsub.f32 %v3313, %v3335
  %v3346 = vsub.f32 %v3314, %v3338
  %v3347 = vmul.f32 %v3339, 1.442695
  %v3348 = vpow.pop %v3347
  %v3349 = vmul.f32 %v3340, 1.442695
  %v3350 = vpow.pop %v3349
  %v3351 = vmul.f32 %v3341, 1.442695
  %v3352 = vpow.pop %v3351
  %v3353 = vmul.f32 %v3342, 1.442695
  %v3354 = vpow.pop %v3353
  %v3355 = vmul.f32 %v3343, 1.442695
  %v3356 = vpow.pop %v3355
  %v3357 = vmul.f32 %v3344, 1.442695
  %v3358 = vpow.pop %v3357
  %v3359 = vmul.f32 %v3345, 1.442695
  %v3360 = vpow.pop %v3359
  %v3361 = vmul.f32 %v3346, 1.442695
  %v3362 = vpow.pop %v3361
  %v3363 = vsel %vm571, %v3348, 0.0
  %3364 = vadd.xlane.f32.xlu0 %v3363
  %v3365 = vpop.xlane.xlu0 %3364
  %v3366 = vsel %vm571, %v3350, 0.0
  %3367 = vadd.xlane.f32.xlu0 %v3366
  %v3368 = vpop.xlane.xlu0 %3367
  %v3369 = vsel %vm571, %v3352, 0.0
  %3370 = vadd.xlane.f32.xlu0 %v3369
  %v3371 = vpop.xlane.xlu0 %3370
  %v3372 = vsel %vm571, %v3354, 0.0
  %3373 = vadd.xlane.f32.xlu0 %v3372
  %v3374 = vpop.xlane.xlu0 %3373
  %v3375 = vsel %vm571, %v3356, 0.0
  %3376 = vadd.xlane.f32.xlu0 %v3375
  %v3377 = vpop.xlane.xlu0 %3376
  %v3378 = vsel %vm571, %v3358, 0.0
  %3379 = vadd.xlane.f32.xlu0 %v3378
  %v3380 = vpop.xlane.xlu0 %3379
  %v3381 = vsel %vm571, %v3360, 0.0
  %3382 = vadd.xlane.f32.xlu0 %v3381
  %v3383 = vpop.xlane.xlu0 %3382
  %v3384 = vsel %vm571, %v3362, 0.0
  %3385 = vadd.xlane.f32.xlu0 %v3384
  %v3386 = vpop.xlane.xlu0 %3385
  %v3387 = vrcp.pop %v3365
  %v3388 = vmul.f32 %v3365, %v3387
  %v3389 = vsub.f32 1.0, %v3388
  %v3390 = vmul.f32 %v3387, %v3389
  %v3391 = vadd.f32 %v3387, %v3390
  %vm3392 = vweird.f32 %v3365
  %vm3393 = vweird.f32 %v3387
  %vm3394 = vmor %vm3392, %vm3393
  %v3395 = vsel %vm3394, %v3387, %v3391
  %v3396 = vand.u32 2147483647, %v3365
  %vm3397 = vcmp.eq.f32.partialorder %v3396, 8.507059e+37
  %v3398 = vand.u32 %v3365, 2147483648
  %v3399 = vor.u32 1.1754944e-38, %v3398
  %v3400 = vsel %vm3397, %v3399, %v3395
  %v3401 = vrcp.pop %v3368
  %v3402 = vmul.f32 %v3368, %v3401
  %v3403 = vsub.f32 1.0, %v3402
  %v3404 = vmul.f32 %v3401, %v3403
  %v3405 = vadd.f32 %v3401, %v3404
  %vm3406 = vweird.f32 %v3368
  %vm3407 = vweird.f32 %v3401
  %vm3408 = vmor %vm3406, %vm3407
  %v3409 = vsel %vm3408, %v3401, %v3405
  %v3410 = vand.u32 2147483647, %v3368
  %vm3411 = vcmp.eq.f32.partialorder %v3410, 8.507059e+37
  %v3412 = vand.u32 %v3368, 2147483648
  %v3413 = vor.u32 1.1754944e-38, %v3412
  %v3414 = vsel %vm3411, %v3413, %v3409
  %v3415 = vrcp.pop %v3371
  %v3416 = vmul.f32 %v3371, %v3415
  %v3417 = vsub.f32 1.0, %v3416
  %v3418 = vmul.f32 %v3415, %v3417
  %v3419 = vadd.f32 %v3415, %v3418
  %vm3420 = vweird.f32 %v3371
  %vm3421 = vweird.f32 %v3415
  %vm3422 = vmor %vm3420, %vm3421
  %v3423 = vsel %vm3422, %v3415, %v3419
  %v3424 = vand.u32 2147483647, %v3371
  %vm3425 = vcmp.eq.f32.partialorder %v3424, 8.507059e+37
  %v3426 = vand.u32 %v3371, 2147483648
  %v3427 = vor.u32 1.1754944e-38, %v3426
  %v3428 = vsel %vm3425, %v3427, %v3423
  %v3429 = vrcp.pop %v3374
  %v3430 = vmul.f32 %v3374, %v3429
  %v3431 = vsub.f32 1.0, %v3430
  %v3432 = vmul.f32 %v3429, %v3431
  %v3433 = vadd.f32 %v3429, %v3432
  %vm3434 = vweird.f32 %v3374
  %vm3435 = vweird.f32 %v3429
  %vm3436 = vmor %vm3434, %vm3435
  %v3437 = vsel %vm3436, %v3429, %v3433
  %v3438 = vand.u32 2147483647, %v3374
  %vm3439 = vcmp.eq.f32.partialorder %v3438, 8.507059e+37
  %v3440 = vand.u32 %v3374, 2147483648
  %v3441 = vor.u32 1.1754944e-38, %v3440
  %v3442 = vsel %vm3439, %v3441, %v3437
  %v3443 = vrcp.pop %v3377
  %v3444 = vmul.f32 %v3377, %v3443
  %v3445 = vsub.f32 1.0, %v3444
  %v3446 = vmul.f32 %v3443, %v3445
  %v3447 = vadd.f32 %v3443, %v3446
  %vm3448 = vweird.f32 %v3377
  %vm3449 = vweird.f32 %v3443
  %vm3450 = vmor %vm3448, %vm3449
  %v3451 = vsel %vm3450, %v3443, %v3447
  %v3452 = vand.u32 2147483647, %v3377
  %vm3453 = vcmp.eq.f32.partialorder %v3452, 8.507059e+37
  %v3454 = vand.u32 %v3377, 2147483648
  %v3455 = vor.u32 1.1754944e-38, %v3454
  %v3456 = vsel %vm3453, %v3455, %v3451
  %v3457 = vrcp.pop %v3380
  %v3458 = vmul.f32 %v3380, %v3457
  %v3459 = vsub.f32 1.0, %v3458
  %v3460 = vmul.f32 %v3457, %v3459
  %v3461 = vadd.f32 %v3457, %v3460
  %vm3462 = vweird.f32 %v3380
  %vm3463 = vweird.f32 %v3457
  %vm3464 = vmor %vm3462, %vm3463
  %v3465 = vsel %vm3464, %v3457, %v3461
  %v3466 = vand.u32 2147483647, %v3380
  %vm3467 = vcmp.eq.f32.partialorder %v3466, 8.507059e+37
  %v3468 = vand.u32 %v3380, 2147483648
  %v3469 = vor.u32 1.1754944e-38, %v3468
  %v3470 = vsel %vm3467, %v3469, %v3465
  %v3471 = vrcp.pop %v3383
  %v3472 = vmul.f32 %v3383, %v3471
  %v3473 = vsub.f32 1.0, %v3472
  %v3474 = vmul.f32 %v3471, %v3473
  %v3475 = vadd.f32 %v3471, %v3474
  %vm3476 = vweird.f32 %v3383
  %vm3477 = vweird.f32 %v3471
  %vm3478 = vmor %vm3476, %vm3477
  %v3479 = vsel %vm3478, %v3471, %v3475
  %v3480 = vand.u32 2147483647, %v3383
  %vm3481 = vcmp.eq.f32.partialorder %v3480, 8.507059e+37
  %v3482 = vand.u32 %v3383, 2147483648
  %v3483 = vor.u32 1.1754944e-38, %v3482
  %v3484 = vsel %vm3481, %v3483, %v3479
  %v3485 = vrcp.pop %v3386
  %v3486 = vmul.f32 %v3386, %v3485
  %v3487 = vsub.f32 1.0, %v3486
  %v3488 = vmul.f32 %v3485, %v3487
  %v3489 = vadd.f32 %v3485, %v3488
  %vm3490 = vweird.f32 %v3386
  %vm3491 = vweird.f32 %v3485
  %vm3492 = vmor %vm3490, %vm3491
  %v3493 = vsel %vm3492, %v3485, %v3489
  %v3494 = vand.u32 2147483647, %v3386
  %vm3495 = vcmp.eq.f32.partialorder %v3494, 8.507059e+37
  %v3496 = vand.u32 %v3386, 2147483648
  %v3497 = vor.u32 1.1754944e-38, %v3496
  %v3498 = vsel %vm3495, %v3497, %v3493
  %v3499 = vmul.f32 %v3348, %v3400
  %v3500 = vmul.f32 %v3350, %v3414
  %v3501 = vmul.f32 %v3352, %v3428
  %v3502 = vmul.f32 %v3354, %v3442
  %v3503 = vmul.f32 %v3356, %v3456
  %v3504 = vmul.f32 %v3358, %v3470
  %v3505 = vmul.f32 %v3360, %v3484
  %v3506 = vmul.f32 %v3362, %v3498
  %3507 = vrot.lane.b32.xlu0 %v3180, 120
  %v3508 = vpop.permute.xlu0 %3507
  %3509 = vrot.lane.b32.xlu0 %v3183, 120
  %v3510 = vpop.permute.xlu0 %3509
  %3511 = vrot.lane.b32.xlu0 %v3186, 120
  %v3512 = vpop.permute.xlu0 %3511
  %3513 = vrot.lane.b32.xlu0 %v3189, 120
  %v3514 = vpop.permute.xlu0 %3513
  %3515 = vrot.lane.b32.xlu0 %v3192, 120
  %v3516 = vpop.permute.xlu0 %3515
  %3517 = vrot.lane.b32.xlu0 %v3195, 120
  %v3518 = vpop.permute.xlu0 %3517
  %3519 = vrot.lane.b32.xlu0 %v3198, 120
  %v3520 = vpop.permute.xlu0 %3519
  %3521 = vrot.lane.b32.xlu0 %v3201, 120
  %v3522 = vpop.permute.xlu0 %3521
  %v3532 = vsel %vm571, %v3499, 0
  %v3535 = vsel %vm571, %v3500, 0
  %v3538 = vsel %vm571, %v3501, 0
  %v3541 = vsel %vm571, %v3502, 0
  %v3544 = vsel %vm571, %v3503, 0
  %v3547 = vsel %vm571, %v3504, 0
  %v3550 = vsel %vm571, %v3505, 0
  %v3553 = vsel %vm571, %v3506, 0
  %3555 = vmatpush.msra.mxu0 0.0
  %3556 = vmatpush.msra.mxu0 0.0
  %3557 = vmatpush.msra.mxu0 0.0
  %3558 = vmatpush.msra.mxu0 0.0
  %3559 = vmatpush.msra.mxu0 0.0
  %3560 = vmatpush.msra.mxu0 0.0
  %3561 = vmatpush.msra.mxu0 0.0
  %3562 = vmatpush.msra.mxu0 0.0
  %3563 = vmatpush.msra.mxu0 %v3522
  %3564 = vmatpush.msra.mxu0 %v3520
  %3565 = vmatpush.msra.mxu0 %v3518
  %3566 = vmatpush.msra.mxu0 %v3516
  %3567 = vmatpush.msra.mxu0 %v3514
  %3568 = vmatpush.msra.mxu0 %v3512
  %3569 = vmatpush.msra.mxu0 %v3510
  %3570 = vmatpush.msra.mxu0 %v3508
  %3571 = vmatmul.f32.gmra.mxu0 %v3532
  %v3572 = vpop.f32.mrf.mxu0
  %v3573 = vadd.f32 0.0, %v3572
  %3574 = vmatmul.f32.gmra.mxu0 %v3535
  %v3575 = vpop.f32.mrf.mxu0
  %v3576 = vadd.f32 0.0, %v3575
  %3577 = vmatmul.f32.gmra.mxu0 %v3538
  %v3578 = vpop.f32.mrf.mxu0
  %v3579 = vadd.f32 0.0, %v3578
  %3580 = vmatmul.f32.gmra.mxu0 %v3541
  %v3581 = vpop.f32.mrf.mxu0
  %v3582 = vadd.f32 0.0, %v3581
  %3583 = vmatmul.f32.gmra.mxu0 %v3544
  %v3584 = vpop.f32.mrf.mxu0
  %v3585 = vadd.f32 0.0, %v3584
  %3586 = vmatmul.f32.gmra.mxu0 %v3547
  %v3587 = vpop.f32.mrf.mxu0
  %v3588 = vadd.f32 0.0, %v3587
  %3589 = vmatmul.f32.gmra.mxu0 %v3550
  %v3590 = vpop.f32.mrf.mxu0
  %v3591 = vadd.f32 0.0, %v3590
  %3592 = vmatmul.f32.gmra.mxu0 %v3553
  %v3593 = vpop.f32.mrf.mxu0
  %v3594 = vadd.f32 0.0, %v3593
  %3595 = vdwg.mxu0
  %v3597 = vsel %vm481, %v3573, 0
  %v3600 = vsel %vm481, %v3576, 0
  %v3603 = vsel %vm481, %v3579, 0
  %v3606 = vsel %vm481, %v3582, 0
  %v3609 = vsel %vm481, %v3585, 0
  %v3612 = vsel %vm481, %v3588, 0
  %v3615 = vsel %vm481, %v3591, 0
  %v3618 = vsel %vm481, %v3594, 0
  %3620 = vmatpush.msra.mxu0 0.0
  %3621 = vmatpush.msra.mxu0 0.0
  %3622 = vmatpush.msra.mxu0 0.0
  %3623 = vmatpush.msra.mxu0 0.0
  %3624 = vmatpush.msra.mxu0 0.0
  %3625 = vmatpush.msra.mxu0 0.0
  %3626 = vmatpush.msra.mxu0 0.0
  %3627 = vmatpush.msra.mxu0 0.0
  %3628 = vmatpush.msra.mxu0 0.0
  %3629 = vmatpush.msra.mxu0 0.0
  %3630 = vmatpush.msra.mxu0 0.0
  %3631 = vmatpush.msra.mxu0 0.0
  %3632 = vmatpush.msra.mxu0 0.0
  %3633 = vmatpush.msra.mxu0 0.0
  %3634 = vmatpush.msra.mxu0 0.0
  %3635 = vmatpush.msra.mxu0 %v213
  %3636 = vmatmul.f32.gmra.mxu0 %v3597
  %v3637 = vpop.f32.mrf.mxu0
  %v3638 = vadd.f32 0.0, %v3637
  %3639 = vmatmul.f32.gmra.mxu0 %v3600
  %v3640 = vpop.f32.mrf.mxu0
  %v3641 = vadd.f32 0.0, %v3640
  %3642 = vmatmul.f32.gmra.mxu0 %v3603
  %v3643 = vpop.f32.mrf.mxu0
  %v3644 = vadd.f32 0.0, %v3643
  %3645 = vmatmul.f32.gmra.mxu0 %v3606
  %v3646 = vpop.f32.mrf.mxu0
  %v3647 = vadd.f32 0.0, %v3646
  %3648 = vmatmul.f32.gmra.mxu0 %v3609
  %v3649 = vpop.f32.mrf.mxu0
  %v3650 = vadd.f32 0.0, %v3649
  %3651 = vmatmul.f32.gmra.mxu0 %v3612
  %v3652 = vpop.f32.mrf.mxu0
  %v3653 = vadd.f32 0.0, %v3652
  %3654 = vmatmul.f32.gmra.mxu0 %v3615
  %v3655 = vpop.f32.mrf.mxu0
  %v3656 = vadd.f32 0.0, %v3655
  %3657 = vmatmul.f32.gmra.mxu0 %v3618
  %v3658 = vpop.f32.mrf.mxu0
  %v3659 = vadd.f32 0.0, %v3658
  %3660 = vdwg.mxu0
  %v3661 = vmul.f32 %v3638, %v214
  %v3662 = vmul.f32 %v3641, %v215
  %v3663 = vmul.f32 %v3644, %v216
  %v3664 = vmul.f32 %v3647, %v217
  %v3665 = vmul.f32 %v3650, %v218
  %v3666 = vmul.f32 %v3653, %v219
  %v3667 = vmul.f32 %v3656, %v220
  %v3668 = vmul.f32 %v3659, %v221
  %v3670 = vsel %vm282, %v3661, 0
  %v3673 = vsel %vm282, %v3662, 0
  %v3676 = vsel %vm282, %v3663, 0
  %v3679 = vsel %vm282, %v3664, 0
  %v3682 = vsel %vm282, %v3665, 0
  %v3685 = vsel %vm282, %v3666, 0
  %v3688 = vsel %vm282, %v3667, 0
  %v3691 = vsel %vm282, %v3668, 0
  %3693 = vmatpush.msra.mxu0 0.0
  %3694 = vmatpush.msra.mxu0 0.0
  %3695 = vmatpush.msra.mxu0 0.0
  %3696 = vmatpush.msra.mxu0 0.0
  %3697 = vmatpush.msra.mxu0 0.0
  %3698 = vmatpush.msra.mxu0 0.0
  %3699 = vmatpush.msra.mxu0 0.0
  %3700 = vmatpush.msra.mxu0 0.0
  %3701 = vmatpush.msra.mxu0 0.0
  %3702 = vmatpush.msra.mxu0 0.0
  %3703 = vmatpush.msra.mxu0 0.0
  %3704 = vmatpush.msra.mxu0 0.0
  %3705 = vmatpush.msra.mxu0 %v3207
  %3706 = vmatpush.msra.mxu0 %v3206
  %3707 = vmatpush.msra.mxu0 %v3205
  %3708 = vmatpush.msra.mxu0 %v3204
  %3709 = vmatmul.f32.gmra.mxu0 %v3670
  %v3710 = vpop.f32.mrf.mxu0
  %v3711 = vadd.f32 0.0, %v3710
  %3712 = vmatmul.f32.gmra.mxu0 %v3673
  %v3713 = vpop.f32.mrf.mxu0
  %v3714 = vadd.f32 0.0, %v3713
  %3715 = vmatmul.f32.gmra.mxu0 %v3676
  %v3716 = vpop.f32.mrf.mxu0
  %v3717 = vadd.f32 0.0, %v3716
  %3718 = vmatmul.f32.gmra.mxu0 %v3679
  %v3719 = vpop.f32.mrf.mxu0
  %v3720 = vadd.f32 0.0, %v3719
  %3721 = vmatmul.f32.gmra.mxu0 %v3682
  %v3722 = vpop.f32.mrf.mxu0
  %v3723 = vadd.f32 0.0, %v3722
  %3724 = vmatmul.f32.gmra.mxu0 %v3685
  %v3725 = vpop.f32.mrf.mxu0
  %v3726 = vadd.f32 0.0, %v3725
  %3727 = vmatmul.f32.gmra.mxu0 %v3688
  %v3728 = vpop.f32.mrf.mxu0
  %v3729 = vadd.f32 0.0, %v3728
  %3730 = vmatmul.f32.gmra.mxu0 %v3691
  %v3731 = vpop.f32.mrf.mxu0
  %v3732 = vadd.f32 0.0, %v3731
  %3733 = vdwg.mxu0
  %v3735 = vperm.slane %v3209, 0
  %3737 = vmatpush.msra.mxu0 0.0
  %3738 = vmatpush.msra.mxu0 0.0
  %3739 = vmatpush.msra.mxu0 0.0
  %3740 = vmatpush.msra.mxu0 0.0
  %3741 = vmatpush.msra.mxu0 0.0
  %3742 = vmatpush.msra.mxu0 0.0
  %3743 = vmatpush.msra.mxu0 0.0
  %3744 = vmatpush.msra.mxu0 0.0
  %3745 = vmatpush.msra.mxu0 %v3732
  %3746 = vmatpush.msra.mxu0 %v3729
  %3747 = vmatpush.msra.mxu0 %v3726
  %3748 = vmatpush.msra.mxu0 %v3723
  %3749 = vmatpush.msra.mxu0 %v3720
  %3750 = vmatpush.msra.mxu0 %v3717
  %3751 = vmatpush.msra.mxu0 %v3714
  %3752 = vmatpush.msra.mxu0 %v3711
  %3753 = vmatmul.f32.gmra.mxu0 %v995
  %v3754 = vpop.f32.mrf.mxu0
  %v3755 = vadd.f32 %v3735, %v3754
  %3756 = vmatmul.f32.gmra.mxu0 %v998
  %v3757 = vpop.f32.mrf.mxu0
  %v3758 = vadd.f32 %v3735, %v3757
  %3759 = vdwg.mxu0
  %v3760 = vadd.f32 %v2901, %v3755
  %v3761 = vadd.f32 %v2902, %v3758
  %v3762 = vsel %vm282, %v3760, 0.0
  %3763 = vadd.xlane.f32.xlu0 %v3762
  %v3764 = vpop.xlane.xlu0 %3763
  %v3765 = vsel %vm282, %v3761, 0.0
  %3766 = vadd.xlane.f32.xlu0 %v3765
  %v3767 = vpop.xlane.xlu0 %3766
  %v3768 = vmul.f32 %v3764, %v1037
  %v3769 = vmul.f32 %v3767, %v1037
  %v3770 = vsub.f32 %v3760, %v3768
  %v3771 = vsub.f32 %v3761, %v3769
  %v3772 = vmul.f32 %v3770, %v3770
  %v3773 = vmul.f32 %v3771, %v3771
  %v3774 = vsel %vm282, %v3772, 0.0
  %3775 = vadd.xlane.f32.xlu0 %v3774
  %v3776 = vpop.xlane.xlu0 %3775
  %v3777 = vsel %vm282, %v3773, 0.0
  %3778 = vadd.xlane.f32.xlu0 %v3777
  %v3779 = vpop.xlane.xlu0 %3778
  %v3780 = vmul.f32 %v3776, %v1037
  %v3781 = vmul.f32 %v3779, %v1037
  %v3782 = vadd.f32 %v3780, 1e-05
  %v3783 = vadd.f32 %v3781, 1e-05
  %v3784 = vrsqrt.pop %v3782
  %v3785 = vmul.f32 %v3784, %v3782
  %v3786 = vmul.f32 %v3785, %v3784
  %v3787 = vmul.f32 0.5, %v3786
  %v3788 = vsub.f32 1.5, %v3787
  %v3789 = vmul.f32 %v3784, %v3788
  %vm3790 = vweird.f32 %v3782
  %vm3791 = vweird.f32 %v3784
  %vm3792 = vmor %vm3790, %vm3791
  %v3793 = vsel %vm3792, %v3784, %v3789
  %v3794 = vrsqrt.pop %v3783
  %v3795 = vmul.f32 %v3794, %v3783
  %v3796 = vmul.f32 %v3795, %v3794
  %v3797 = vmul.f32 0.5, %v3796
  %v3798 = vsub.f32 1.5, %v3797
  %v3799 = vmul.f32 %v3794, %v3798
  %vm3800 = vweird.f32 %v3783
  %vm3801 = vweird.f32 %v3794
  %vm3802 = vmor %vm3800, %vm3801
  %v3803 = vsel %vm3802, %v3794, %v3799
  %v3804 = vmul.f32 %v3770, %v3793
  %v3805 = vmul.f32 %v3771, %v3803
  %v3806 = vmul.f32 %v3804, %v2894
  %v3807 = vmul.f32 %v3805, %v2894
  %v3808 = vadd.f32 %v3806, %v2899
  %v3809 = vadd.f32 %v3807, %v2899
  %s3810 = scalar_lea.vmem %s55, 32
  %v3811 = vld [vmem:[%s3810] sm:$0xff]
  %v3812 = vld [vmem:[%s3810 + $0x8] sm:$0xff]
  %v3813 = vld [vmem:[%s3810 + $0x10] sm:$0xff]
  %v3814 = vld [vmem:[%s3810 + $0x18] sm:$0xff]
  %s3815 = scalar_lea.vmem %s57, 1
  %v3816 = vld [vmem:[%s3815] sm:$0x1]
  %v3818 = vperm.slane %v3816, 0
  %v3821 = vsel %vm282, %v3808, 0
  %v3824 = vsel %vm282, %v3809, 0
  %3826 = vmatpush.msra.mxu0 0.0
  %3827 = vmatpush.msra.mxu0 0.0
  %3828 = vmatpush.msra.mxu0 0.0
  %3829 = vmatpush.msra.mxu0 0.0
  %3830 = vmatpush.msra.mxu0 0.0
  %3831 = vmatpush.msra.mxu0 0.0
  %3832 = vmatpush.msra.mxu0 0.0
  %3833 = vmatpush.msra.mxu0 0.0
  %3834 = vmatpush.msra.mxu0 0.0
  %3835 = vmatpush.msra.mxu0 0.0
  %3836 = vmatpush.msra.mxu0 0.0
  %3837 = vmatpush.msra.mxu0 0.0
  %3838 = vmatpush.msra.mxu0 %v3814
  %3839 = vmatpush.msra.mxu0 %v3813
  %3840 = vmatpush.msra.mxu0 %v3812
  %3841 = vmatpush.msra.mxu0 %v3811
  %3842 = vmatmul.f32.gmra.mxu0 %v3821
  %v3843 = vpop.f32.mrf.mxu0
  %v3844 = vadd.f32 %v3818, %v3843
  %3845 = vmatmul.f32.gmra.mxu0 %v3824
  %v3846 = vpop.f32.mrf.mxu0
  %v3847 = vadd.f32 %v3818, %v3846
  %3848 = vdwg.mxu0
  %v3849 = vmax.f32 %v3844, 0.0
  %v3850 = vmax.f32 %v3847, 0.0
  %s3851 = scalar_lea.vmem %s59, 128
  %v3852 = vld [vmem:[%s3851] sm:$0xff]
  %v3853 = vld [vmem:[%s3851 + $0x8] sm:$0xff]
  %v3854 = vld [vmem:[%s3851 + $0x10] sm:$0xff]
  %v3855 = vld [vmem:[%s3851 + $0x18] sm:$0xff]
  %v3856 = vld [vmem:[%s3851 + $0x20] sm:$0xff]
  %v3857 = vld [vmem:[%s3851 + $0x28] sm:$0xff]
  %v3858 = vld [vmem:[%s3851 + $0x30] sm:$0xff]
  %v3859 = vld [vmem:[%s3851 + $0x38] sm:$0xff]
  %v3860 = vld [vmem:[%s3851 + $0x40] sm:$0xff]
  %v3861 = vld [vmem:[%s3851 + $0x48] sm:$0xff]
  %v3862 = vld [vmem:[%s3851 + $0x50] sm:$0xff]
  %v3863 = vld [vmem:[%s3851 + $0x58] sm:$0xff]
  %v3864 = vld [vmem:[%s3851 + $0x60] sm:$0xff]
  %v3865 = vld [vmem:[%s3851 + $0x68] sm:$0xff]
  %v3866 = vld [vmem:[%s3851 + $0x70] sm:$0xff]
  %v3867 = vld [vmem:[%s3851 + $0x78] sm:$0xff]
  %s3868 = scalar_lea.vmem %s61, 1
  %v3869 = vld [vmem:[%s3868] sm:$0x1]
  %v3871 = vperm.slane %v3869, 0
  %3873 = vmatpush.msra.mxu0 %v3867
  %3874 = vmatpush.msra.mxu0 %v3866
  %3875 = vmatpush.msra.mxu0 %v3865
  %3876 = vmatpush.msra.mxu0 %v3864
  %3877 = vmatpush.msra.mxu0 %v3863
  %3878 = vmatpush.msra.mxu0 %v3862
  %3879 = vmatpush.msra.mxu0 %v3861
  %3880 = vmatpush.msra.mxu0 %v3860
  %3881 = vmatpush.msra.mxu0 %v3859
  %3882 = vmatpush.msra.mxu0 %v3858
  %3883 = vmatpush.msra.mxu0 %v3857
  %3884 = vmatpush.msra.mxu0 %v3856
  %3885 = vmatpush.msra.mxu0 %v3855
  %3886 = vmatpush.msra.mxu0 %v3854
  %3887 = vmatpush.msra.mxu0 %v3853
  %3888 = vmatpush.msra.mxu0 %v3852
  %3889 = vmatmul.f32.gmra.mxu0 %v3849
  %v3890 = vpop.f32.mrf.mxu0
  %v3891 = vadd.f32 %v3871, %v3890
  %3892 = vmatmul.f32.gmra.mxu0 %v3850
  %v3893 = vpop.f32.mrf.mxu0
  %v3894 = vadd.f32 %v3871, %v3893
  %3895 = vdwg.mxu0
  %v3896 = vadd.f32 %v3808, %v3891
  %v3897 = vadd.f32 %v3809, %v3894
  %v3898 = vsel %vm282, %v3896, 0.0
  %3899 = vadd.xlane.f32.xlu0 %v3898
  %v3900 = vpop.xlane.xlu0 %3899
  %v3901 = vsel %vm282, %v3897, 0.0
  %3902 = vadd.xlane.f32.xlu0 %v3901
  %v3903 = vpop.xlane.xlu0 %3902
  %v3904 = vmul.f32 %v3900, %v1037
  %v3905 = vmul.f32 %v3903, %v1037
  %v3906 = vsub.f32 %v3896, %v3904
  %v3907 = vsub.f32 %v3897, %v3905
  %v3908 = vmul.f32 %v3906, %v3906
  %v3909 = vmul.f32 %v3907, %v3907
  %v3910 = vsel %vm282, %v3908, 0.0
  %3911 = vadd.xlane.f32.xlu0 %v3910
  %v3912 = vpop.xlane.xlu0 %3911
  %v3913 = vsel %vm282, %v3909, 0.0
  %3914 = vadd.xlane.f32.xlu0 %v3913
  %v3915 = vpop.xlane.xlu0 %3914
  %v3916 = vmul.f32 %v3912, %v1037
  %v3917 = vmul.f32 %v3915, %v1037
  %v3918 = vadd.f32 %v3916, 1e-05
  %v3919 = vadd.f32 %v3917, 1e-05
  %v3920 = vrsqrt.pop %v3918
  %v3921 = vmul.f32 %v3920, %v3918
  %v3922 = vmul.f32 %v3921, %v3920
  %v3923 = vmul.f32 0.5, %v3922
  %v3924 = vsub.f32 1.5, %v3923
  %v3925 = vmul.f32 %v3920, %v3924
  %vm3926 = vweird.f32 %v3918
  %vm3927 = vweird.f32 %v3920
  %vm3928 = vmor %vm3926, %vm3927
  %v3929 = vsel %vm3928, %v3920, %v3925
  %v3930 = vrsqrt.pop %v3919
  %v3931 = vmul.f32 %v3930, %v3919
  %v3932 = vmul.f32 %v3931, %v3930
  %v3933 = vmul.f32 0.5, %v3932
  %v3934 = vsub.f32 1.5, %v3933
  %v3935 = vmul.f32 %v3930, %v3934
  %vm3936 = vweird.f32 %v3919
  %vm3937 = vweird.f32 %v3930
  %vm3938 = vmor %vm3936, %vm3937
  %v3939 = vsel %vm3938, %v3930, %v3935
  %v3940 = vmul.f32 %v3906, %v3929
  %v3941 = vmul.f32 %v3907, %v3939
  %v3942 = vmul.f32 %v3940, %v2894
  %v3943 = vmul.f32 %v3941, %v2894
  %v3944 = vadd.f32 %v3942, %v2899
  %v3945 = vadd.f32 %v3943, %v2899
  %v3946 = vld [vmem:[%s63] sm:$0xff]
  %v3947 = vld [vmem:[%s63 + $0x8] sm:$0xff]
  %v3948 = vld [vmem:[%s63 + $0x10] sm:$0xff]
  %v3949 = vld [vmem:[%s63 + $0x18] sm:$0xff]
  %v3950 = vld [vmem:[%s65] sm:$0x1]
  %v3952 = vperm.slane %v3950, 0
  %v3955 = vsel %vm282, %v3944, 0
  %v3958 = vsel %vm282, %v3945, 0
  %3960 = vmatpush.msra.mxu0 0.0
  %3961 = vmatpush.msra.mxu0 0.0
  %3962 = vmatpush.msra.mxu0 0.0
  %3963 = vmatpush.msra.mxu0 0.0
  %3964 = vmatpush.msra.mxu0 0.0
  %3965 = vmatpush.msra.mxu0 0.0
  %3966 = vmatpush.msra.mxu0 0.0
  %3967 = vmatpush.msra.mxu0 0.0
  %3968 = vmatpush.msra.mxu0 0.0
  %3969 = vmatpush.msra.mxu0 0.0
  %3970 = vmatpush.msra.mxu0 0.0
  %3971 = vmatpush.msra.mxu0 0.0
  %3972 = vmatpush.msra.mxu0 %v3949
  %3973 = vmatpush.msra.mxu0 %v3948
  %3974 = vmatpush.msra.mxu0 %v3947
  %3975 = vmatpush.msra.mxu0 %v3946
  %3976 = vmatmul.f32.gmra.mxu0 %v3955
  %v3977 = vpop.f32.mrf.mxu0
  %v3978 = vadd.f32 %v3952, %v3977
  %3979 = vmatmul.f32.gmra.mxu0 %v3958
  %v3980 = vpop.f32.mrf.mxu0
  %v3981 = vadd.f32 %v3952, %v3980
  %3982 = vdwg.mxu0
  %3983 = vmax.xlane.f32.xlu0 %v3978
  %v3984 = vpop.xlane.xlu0 %3983
  %3985 = vmax.xlane.f32.xlu0 %v3981
  %v3986 = vpop.xlane.xlu0 %3985
  %v3987 = vsub.f32 %v3978, %v3984
  %v3988 = vsub.f32 %v3981, %v3986
  %v3989 = vmul.f32 %v3987, 1.442695
  %v3990 = vpow.pop %v3989
  %v3991 = vmul.f32 %v3988, 1.442695
  %v3992 = vpow.pop %v3991
  %3993 = vadd.xlane.f32.xlu0 %v3990
  %v3994 = vpop.xlane.xlu0 %3993
  %3995 = vadd.xlane.f32.xlu0 %v3992
  %v3996 = vpop.xlane.xlu0 %3995
  %v3997 = vrcp.pop %v3994
  %v3998 = vmul.f32 %v3994, %v3997
  %v3999 = vsub.f32 1.0, %v3998
  %v4000 = vmul.f32 %v3997, %v3999
  %v4001 = vadd.f32 %v3997, %v4000
  %vm4002 = vweird.f32 %v3994
  %vm4003 = vweird.f32 %v3997
  %vm4004 = vmor %vm4002, %vm4003
  %v4005 = vsel %vm4004, %v3997, %v4001
  %v4006 = vand.u32 2147483647, %v3994
  %vm4007 = vcmp.eq.f32.partialorder %v4006, 8.507059e+37
  %v4008 = vand.u32 %v3994, 2147483648
  %v4009 = vor.u32 1.1754944e-38, %v4008
  %v4010 = vsel %vm4007, %v4009, %v4005
  %v4011 = vrcp.pop %v3996
  %v4012 = vmul.f32 %v3996, %v4011
  %v4013 = vsub.f32 1.0, %v4012
  %v4014 = vmul.f32 %v4011, %v4013
  %v4015 = vadd.f32 %v4011, %v4014
  %vm4016 = vweird.f32 %v3996
  %vm4017 = vweird.f32 %v4011
  %vm4018 = vmor %vm4016, %vm4017
  %v4019 = vsel %vm4018, %v4011, %v4015
  %v4020 = vand.u32 2147483647, %v3996
  %vm4021 = vcmp.eq.f32.partialorder %v4020, 8.507059e+37
  %v4022 = vand.u32 %v3996, 2147483648
  %v4023 = vor.u32 1.1754944e-38, %v4022
  %v4024 = vsel %vm4021, %v4023, %v4019
  %v4025 = vmul.f32 %v3990, %v4010
  %v4026 = vmul.f32 %v3992, %v4024
  %4027 = vst [vmem:[%s67] sm:$0xff] %v4025
  %4028 = vst [vmem:[%s67 + $0x8] sm:$0xff] %v4026
  // Predicated region
  $region134: #{_forward_impl.1} parent=0 // pred_check
    _
  $region135: #{_forward_impl.1} parent=0 // pred_check_branch
    %4030 = sbr.rel (0) target = $region137
  $region136: #{_forward_impl.1} parent=0 // pred_region
    _
  $region137: #{_forward_impl.1} parent=0 // pred_fallthru
    _
  // Predicated region
  $region138: #{_forward_impl.1} parent=0 // pred_check
    _
  $region139: #{_forward_impl.1} parent=0 // pred_check_branch
    %4032 = sbr.rel (0) target = $region141
  $region140: #{_forward_impl.1} parent=0 // pred_region
    _
  $region141: #{_forward_impl.1} parent=0 // pred_fallthru
    _

</llo_original>
